<compile_context>
chip_gen: v7x
topology: tpu7x:2x2x1
jax: 0.10.0
libtpu: 0.0.40
codegen_flags: <defaults>
</compile_context>

<pallas_src>
import functools

import jax
import jax.numpy as jnp
from jax.experimental import pallas as pl
from jax.experimental.pallas import tpu as pltpu

D_IN = 28 * 28   # 784
H1, H2, OUT = 400, 100, 10
H1P, H2P, OUTP = 512, 128, 128   # lane-padded (multiples of 128)


def mlp_kernel(x_ref, w1_ref, b1_ref, w2_ref, b2_ref, w3_ref, b3_ref,
               out_ref, feat_ref):
    # r1: ReLU on the f32 input tile (native VPU on all gens), single bf16
    # cast feeding the MXU.
    x = jnp.maximum(x_ref[...], 0.0).astype(jnp.bfloat16)

    # l1: (TB, 784) @ (784, 512) -> f32 accumulate, add f32 bias.
    h1 = jnp.dot(x, w1_ref[...], preferred_element_type=jnp.float32) + b1_ref[...]

    # l2: (TB, 512) @ (512, 128) -> f32 accumulate, add f32 bias.
    h2 = jnp.dot(h1.astype(jnp.bfloat16), w2_ref[...],
                 preferred_element_type=jnp.float32) + b2_ref[...]

    # feature = x.clone()  (pre-ReLU l2 activations), lane-dense f32 store.
    feat_ref[...] = h2

    # r2 + l3: ReLU, (TB, 128) @ (128, 128) -> padded f32 logits.
    h2r = jnp.maximum(h2, 0.0).astype(jnp.bfloat16)
    out_ref[...] = (
        jnp.dot(h2r, w3_ref[...], preferred_element_type=jnp.float32) + b3_ref[...]
    )


def _pad2(a, rows, cols):
    return jnp.pad(a, ((0, rows - a.shape[0]), (0, cols - a.shape[1])))


def prepare_params(w1, b1, w2, b2, w3, b3):
    """One-time lane-padding + bf16 cast of weights (hoisted out of the
    per-call forward).  Zero-padded rows/cols contribute nothing."""
    w1p = _pad2(w1, D_IN, H1P).astype(jnp.bfloat16)
    w2p = _pad2(w2, H1P, H2P).astype(jnp.bfloat16)
    w3p = _pad2(w3, H2P, OUTP).astype(jnp.bfloat16)
    b1p = jnp.pad(b1, (0, H1P - H1)).reshape(1, H1P).astype(jnp.float32)
    b2p = jnp.pad(b2, (0, H2P - H2)).reshape(1, H2P).astype(jnp.float32)
    b3p = jnp.pad(b3, (0, OUTP - OUT)).reshape(1, OUTP).astype(jnp.float32)
    return w1p, b1p, w2p, b2p, w3p, b3p


def _pick_block_b(B, block_b):
    """Cap the batch tile for VMEM headroom (v5e 16 MiB scoped / v7x 64 MiB
    total) and halve it until there are >=2 batch tiles so the 'parallel'
    grid axis actually feeds both v7x TensorCores."""
    bb = max(8, min(int(block_b), 1024))
    while bb > 128 and pl.cdiv(B, bb) < 2:
        bb //= 2
    return bb


@functools.partial(jax.jit, static_argnames=("block_b", "trim"))
def mlp_forward(x, w1p, b1p, w2p, b2p, w3p, b3p, *, block_b=512, trim=True):
    """x: (B, 784) f32.  Padded bf16/f32 params from prepare_params().
    Returns (logits (B,10) f32, feature (B,100) f32); trim=False returns the
    padded lane-dense (Bp,128) layouts (rows >= B and extra lanes are junk/0)."""
    B = x.shape[0]
    bb = _pick_block_b(B, block_b)
    n_blocks = pl.cdiv(B, bb)
    Bp = n_blocks * bb

    # Row-pad only when needed; x stays f32 (no wrapper cast pass).
    xp = x if Bp == B else jnp.pad(x, ((0, Bp - B), (0, 0)))

    vmem = pltpu.MemorySpace.VMEM
    tiled = lambda i: (i, 0)      # x / outputs walk the batch
    resident = lambda i: (0, 0)   # weights/biases: constant block -> stay in VMEM

    def res_spec(shape):
        return pl.BlockSpec(shape, resident, memory_space=vmem,
                            pipeline_mode=pl.Buffered(1))

    logits_p, feat_p = pl.pallas_call(
        mlp_kernel,
        out_shape=(
            jax.ShapeDtypeStruct((Bp, OUTP), jnp.float32),   # padded logits
            jax.ShapeDtypeStruct((Bp, H2P), jnp.float32),    # padded feature
        ),
        grid=(n_blocks,),
        in_specs=[
            pl.BlockSpec((bb, D_IN), tiled, memory_space=vmem),
            res_spec((D_IN, H1P)),
            res_spec((1, H1P)),
            res_spec((H1P, H2P)),
            res_spec((1, H2P)),
            res_spec((H2P, OUTP)),
            res_spec((1, OUTP)),
        ],
        out_specs=(
            pl.BlockSpec((bb, OUTP), tiled, memory_space=vmem),
            pl.BlockSpec((bb, H2P), tiled, memory_space=vmem),
        ),
        compiler_params=pltpu.CompilerParams(
            dimension_semantics=("parallel",)),
    )(xp, w1p, b1p, w2p, b2p, w3p, b3p)

    if not trim:
        return logits_p, feat_p
    return logits_p[:B, :OUT], feat_p[:B, :H2]


def init_params(key):
    """Deterministic init matching nn.Linear's U(-1/sqrt(fan_in), 1/sqrt(fan_in))."""
    def linear(key, fan_in, fan_out):
        kw, kb = jax.random.split(key)
        bound = 1.0 / jnp.sqrt(jnp.float32(fan_in))
        # Stored as (in, out) so the kernel computes x @ W.
        w = jax.random.uniform(kw, (fan_in, fan_out), jnp.float32, -bound, bound)
        b = jax.random.uniform(kb, (fan_out,), jnp.float32, -bound, bound)
        return w, b

    k1, k2, k3 = jax.random.split(key, 3)
    w1, b1 = linear(k1, D_IN, H1)
    w2, b2 = linear(k2, H1, H2)
    w3, b3 = linear(k3, H2, OUT)
    return w1, b1, w2, b2, w3, b3


def mlp_reference(x, w1, b1, w2, b2, w3, b3):
    """Pure-JAX reference with the same bf16-compute / f32-accumulate recipe."""
    xb = jnp.maximum(x, 0.0).astype(jnp.bfloat16)
    h1 = jnp.dot(xb, w1.astype(jnp.bfloat16),
                 preferred_element_type=jnp.float32) + b1
    h2 = jnp.dot(h1.astype(jnp.bfloat16), w2.astype(jnp.bfloat16),
                 preferred_element_type=jnp.float32) + b2
    feature = h2
    logits = jnp.dot(jnp.maximum(h2, 0.0).astype(jnp.bfloat16),
                     w3.astype(jnp.bfloat16),
                     preferred_element_type=jnp.float32) + b3
    return logits, feature


if __name__ == "__main__":
    key = jax.random.PRNGKey(0)
    k_params, k_x = jax.random.split(key)

    params = init_params(k_params)
    padded_params = prepare_params(*params)   # one-time pad + bf16 cast

    # B=200 exercises the batch grid (auto block_b 512 -> 128 -> 2 tiles) and
    # the ragged-tail pad-then-slice path.
    B = 200
    x = jax.random.normal(k_x, (B, D_IN), dtype=jnp.float32)

    logits, feature = mlp_forward(x, *padded_params)
    jax.block_until_ready((logits, feature))

    # Cross-check against the pure-JAX bf16/f32-accum reference.
    ref_logits, ref_feature = mlp_reference(x, *params)
    assert logits.shape == (B, OUT) and feature.shape == (B, H2)
    assert jnp.allclose(logits, ref_logits, atol=2e-3, rtol=2e-3), (
        float(jnp.max(jnp.abs(logits - ref_logits))))
    assert jnp.allclose(feature, ref_feature, atol=2e-3, rtol=2e-3), (
        float(jnp.max(jnp.abs(feature - ref_feature))))

    print("KERNEL_OK")
</pallas_src>

<mosaic_0001>
module attributes {stable_mosaic.version = 11 : i64} {
  func.func @mlp_kernel(%arg0: i32, %arg1: memref<128x784xf32, #tpu.memory_space<vmem>>, %arg2: memref<784x512xbf16, #tpu.memory_space<vmem>>, %arg3: memref<1x512xf32, #tpu.memory_space<vmem>>, %arg4: memref<512x128xbf16, #tpu.memory_space<vmem>>, %arg5: memref<1x128xf32, #tpu.memory_space<vmem>>, %arg6: memref<128x128xbf16, #tpu.memory_space<vmem>>, %arg7: memref<1x128xf32, #tpu.memory_space<vmem>>, %arg8: memref<128x128xf32, #tpu.memory_space<vmem>>, %arg9: memref<128x128xf32, #tpu.memory_space<vmem>>) attributes {dimension_semantics = [#tpu.dimension_semantics<parallel>], iteration_bounds = array<i64: 2>, scalar_prefetch = 0 : i64, scratch_operands = 0 : i64, tpu.core_type = #tpu.core_type<tc>, window_params = [{transform_indices = @transform_0, window_bounds = array<i64: 128, 784>}, {pipeline_mode = #tpu.pipeline_mode<synchronous>, transform_indices = @transform_1, window_bounds = array<i64: 784, 512>}, {pipeline_mode = #tpu.pipeline_mode<synchronous>, transform_indices = @transform_2, window_bounds = array<i64: 1, 512>}, {pipeline_mode = #tpu.pipeline_mode<synchronous>, transform_indices = @transform_3, window_bounds = array<i64: 512, 128>}, {pipeline_mode = #tpu.pipeline_mode<synchronous>, transform_indices = @transform_4, window_bounds = array<i64: 1, 128>}, {pipeline_mode = #tpu.pipeline_mode<synchronous>, transform_indices = @transform_5, window_bounds = array<i64: 128, 128>}, {pipeline_mode = #tpu.pipeline_mode<synchronous>, transform_indices = @transform_6, window_bounds = array<i64: 1, 128>}, {transform_indices = @transform_7, window_bounds = array<i64: 128, 128>}, {transform_indices = @transform_8, window_bounds = array<i64: 128, 128>}]} {
    %c0 = arith.constant 0 : index
    %c0_0 = arith.constant 0 : index
    %0 = vector.load %arg1[%c0, %c0_0] : memref<128x784xf32, #tpu.memory_space<vmem>>, vector<128x784xf32>
    %cst = arith.constant 0.000000e+00 : f32
    %1 = vector.broadcast %cst : f32 to vector<128x784xf32>
    %2 = arith.maximumf %0, %1 : vector<128x784xf32>
    %3 = arith.truncf %2 : vector<128x784xf32> to vector<128x784xbf16>
    %c0_1 = arith.constant 0 : index
    %c0_2 = arith.constant 0 : index
    %4 = vector.load %arg2[%c0_1, %c0_2] : memref<784x512xbf16, #tpu.memory_space<vmem>>, vector<784x512xbf16>
    %cst_3 = arith.constant dense<0.000000e+00> : vector<128x512xf32>
    %5 = tpu.matmul %3, %4, %cst_3 {dimension_numbers = #tpu.dot_dimension_numbers<[1], [0], [0], [1], [0, 0, 1, 1], [], []>} : vector<128x784xbf16>, vector<784x512xbf16>, vector<128x512xf32> -> vector<128x512xf32>
    %c0_4 = arith.constant 0 : index
    %c0_5 = arith.constant 0 : index
    %6 = vector.load %arg3[%c0_4, %c0_5] : memref<1x512xf32, #tpu.memory_space<vmem>>, vector<1x512xf32>
    %7 = vector.broadcast %6 : vector<1x512xf32> to vector<128x512xf32>
    %8 = arith.addf %5, %7 : vector<128x512xf32>
    %9 = arith.truncf %8 : vector<128x512xf32> to vector<128x512xbf16>
    %c0_6 = arith.constant 0 : index
    %c0_7 = arith.constant 0 : index
    %10 = vector.load %arg4[%c0_6, %c0_7] : memref<512x128xbf16, #tpu.memory_space<vmem>>, vector<512x128xbf16>
    %cst_8 = arith.constant dense<0.000000e+00> : vector<128x128xf32>
    %11 = tpu.matmul %9, %10, %cst_8 {dimension_numbers = #tpu.dot_dimension_numbers<[1], [0], [0], [1], [0, 0, 1, 1], [], []>} : vector<128x512xbf16>, vector<512x128xbf16>, vector<128x128xf32> -> vector<128x128xf32>
    %c0_9 = arith.constant 0 : index
    %c0_10 = arith.constant 0 : index
    %12 = vector.load %arg5[%c0_9, %c0_10] : memref<1x128xf32, #tpu.memory_space<vmem>>, vector<1x128xf32>
    %13 = vector.broadcast %12 : vector<1x128xf32> to vector<128x128xf32>
    %14 = arith.addf %11, %13 : vector<128x128xf32>
    %c0_11 = arith.constant 0 : index
    %c0_12 = arith.constant 0 : index
    %15 = vector.load %arg9[%c0_11, %c0_12] : memref<128x128xf32, #tpu.memory_space<vmem>>, vector<128x128xf32>
    tpu.vector_store %arg9[%c0_11, %c0_12], %14 {strides = array<i32>} : memref<128x128xf32, #tpu.memory_space<vmem>>, vector<128x128xf32>,
    %cst_13 = arith.constant 0.000000e+00 : f32
    %16 = vector.broadcast %cst_13 : f32 to vector<128x128xf32>
    %17 = arith.maximumf %14, %16 : vector<128x128xf32>
    %18 = arith.truncf %17 : vector<128x128xf32> to vector<128x128xbf16>
    %c0_14 = arith.constant 0 : index
    %c0_15 = arith.constant 0 : index
    %19 = vector.load %arg6[%c0_14, %c0_15] : memref<128x128xbf16, #tpu.memory_space<vmem>>, vector<128x128xbf16>
    %cst_16 = arith.constant dense<0.000000e+00> : vector<128x128xf32>
    %20 = tpu.matmul %18, %19, %cst_16 {dimension_numbers = #tpu.dot_dimension_numbers<[1], [0], [0], [1], [0, 0, 1, 1], [], []>} : vector<128x128xbf16>, vector<128x128xbf16>, vector<128x128xf32> -> vector<128x128xf32>
    %c0_17 = arith.constant 0 : index
    %c0_18 = arith.constant 0 : index
    %21 = vector.load %arg7[%c0_17, %c0_18] : memref<1x128xf32, #tpu.memory_space<vmem>>, vector<1x128xf32>
    %22 = vector.broadcast %21 : vector<1x128xf32> to vector<128x128xf32>
    %23 = arith.addf %20, %22 : vector<128x128xf32>
    %c0_19 = arith.constant 0 : index
    %c0_20 = arith.constant 0 : index
    %24 = vector.load %arg8[%c0_19, %c0_20] : memref<128x128xf32, #tpu.memory_space<vmem>>, vector<128x128xf32>
    tpu.vector_store %arg8[%c0_19, %c0_20], %23 {strides = array<i32>} : memref<128x128xf32, #tpu.memory_space<vmem>>, vector<128x128xf32>,
    return
  }
  func.func @transform_0(%arg0: i32) -> (i32, i32) {
    %c0_i32 = arith.constant 0 : i32
    %c0_i32_0 = arith.constant 0 : i32
    return %arg0, %c0_i32 : i32, i32
  }
  func.func @transform_1(%arg0: i32) -> (i32, i32) {
    %c0_i32 = arith.constant 0 : i32
    %c0_i32_0 = arith.constant 0 : i32
    %c0_i32_1 = arith.constant 0 : i32
    return %c0_i32, %c0_i32_0 : i32, i32
  }
  func.func @transform_2(%arg0: i32) -> (i32, i32) {
    %c0_i32 = arith.constant 0 : i32
    %c0_i32_0 = arith.constant 0 : i32
    %c0_i32_1 = arith.constant 0 : i32
    return %c0_i32, %c0_i32_0 : i32, i32
  }
  func.func @transform_3(%arg0: i32) -> (i32, i32) {
    %c0_i32 = arith.constant 0 : i32
    %c0_i32_0 = arith.constant 0 : i32
    %c0_i32_1 = arith.constant 0 : i32
    return %c0_i32, %c0_i32_0 : i32, i32
  }
  func.func @transform_4(%arg0: i32) -> (i32, i32) {
    %c0_i32 = arith.constant 0 : i32
    %c0_i32_0 = arith.constant 0 : i32
    %c0_i32_1 = arith.constant 0 : i32
    return %c0_i32, %c0_i32_0 : i32, i32
  }
  func.func @transform_5(%arg0: i32) -> (i32, i32) {
    %c0_i32 = arith.constant 0 : i32
    %c0_i32_0 = arith.constant 0 : i32
    %c0_i32_1 = arith.constant 0 : i32
    return %c0_i32, %c0_i32_0 : i32, i32
  }
  func.func @transform_6(%arg0: i32) -> (i32, i32) {
    %c0_i32 = arith.constant 0 : i32
    %c0_i32_0 = arith.constant 0 : i32
    %c0_i32_1 = arith.constant 0 : i32
    return %c0_i32, %c0_i32_0 : i32, i32
  }
  func.func @transform_7(%arg0: i32) -> (i32, i32) {
    %c0_i32 = arith.constant 0 : i32
    %c0_i32_0 = arith.constant 0 : i32
    return %arg0, %c0_i32 : i32, i32
  }
  func.func @transform_8(%arg0: i32) -> (i32, i32) {
    %c0_i32 = arith.constant 0 : i32
    %c0_i32_0 = arith.constant 0 : i32
    return %arg0, %c0_i32 : i32, i32
  }
}

</mosaic_0001>

<llo_original>
// kernel: mlp_forward.1
$region0: #{mlp_forward.1}
  #allocation0 [shape = 'u32[]', space=smem, size = 0x4, offset = 0x4, fixed_abs, tag = 'smem constant byte address 0x4 - core index']
  #allocation1 [shape = 'u32[144,128]{1,0:T(1,128)}', space=vmem, size = 0x12000, scoped, tag = 'internal scratch']
  %s0 = inlined_call_operand.vmem [shape: f32[256,784], index: 0, kind: input, shape index: {}]
  %s1 = inlined_call_operand.vmem [shape: bf16[784,512], index: 1, kind: input, shape index: {}]
  %s2 = inlined_call_operand.vmem [shape: f32[1,512], index: 2, kind: input, shape index: {}]
  %s3 = inlined_call_operand.vmem [shape: bf16[512,128], index: 3, kind: input, shape index: {}]
  %s4 = inlined_call_operand.vmem [shape: f32[1,128], index: 4, kind: input, shape index: {}]
  %s5 = inlined_call_operand.vmem [shape: bf16[128,128], index: 5, kind: input, shape index: {}]
  %s6 = inlined_call_operand.vmem [shape: f32[1,128], index: 6, kind: input, shape index: {}]
  %s7 = inlined_call_operand.vmem [shape: f32[256,128], index: 7, kind: output, shape index: {0}]
  %s8 = inlined_call_operand.vmem [shape: f32[256,128], index: 8, kind: output, shape index: {1}]
  %9 = xla_tuple %s7, %s8
  %s10 = sld [smem:[#allocation0]]
  $region69: #{mlp_forward.1} parent=0
    _
  %s12 = ssub.s32 1, %s10
  %s13 = scalar_select 0, %s12, %s10
  loop: start=0, step=1, limit=4
  $region2: #{mlp_forward.1} parent=0 // loop_pre_header
    _
  $region3: #{mlp_forward.1} parent=0 // loop_header
    %s15 = sphi 0, %s19
    %p16 = scmp.ge.s32.totalorder %s15, 4
    %s25 = sphi 0, %s27
    %s28 = sphi 0, %s25
    %s29 = sphi 0, %s28
    %s45 = sphi 0, %s29
    %s49 = sphi 0, %s49
    %s51 = sphi 0, %s49
    %s52 = sphi 0, %s51
    %s66 = sphi 0, %s52
    %s70 = sphi 0, %s70
    %s72 = sphi 0, %s70
    %s73 = sphi 0, %s72
    %s87 = sphi 0, %s73
    %s91 = sphi 0, %s91
    %s93 = sphi 0, %s91
    %s94 = sphi 0, %s93
    %s108 = sphi 0, %s94
    %s112 = sphi 0, %s112
    %s114 = sphi 0, %s112
    %s115 = sphi 0, %s114
    %s129 = sphi 0, %s115
    %s133 = sphi 0, %s133
    %s135 = sphi 0, %s133
    %s136 = sphi 0, %s135
    %s150 = sphi 0, %s136
    %s154 = sphi 0, %s154
    %s156 = sphi 0, %s154
    %s157 = sphi 0, %s156
    %s171 = sphi 0, %s157
    %s177 = sphi 0, %s179
    %s180 = sphi 0, %s177
    %s181 = sphi 0, %s180
    %s197 = sphi 0, %s181
    %s203 = sphi 0, %s205
    %s206 = sphi 0, %s203
    %s207 = sphi 0, %s206
    %s223 = sphi 0, %s207
  $region4: #{mlp_forward.1} parent=0 // loop_header_branch
    %18 = sbr.rel (%p16) target = $region8
  $region5: #{mlp_forward.1} parent=0 // loop_body
    %s20 = ssub.s32 %s15, 1
    %s21 = ssub.s32 %s15, 2
    %s22 = sadd.s32 %s15, 1
    %s23 = ssub.s32 %s15, %s22
    %p24 = scmp.eq.s32.totalorder %s23, 0
    %s26 = sadd.s32 %s25, 1
    %s27 = scalar_select %p24, %s25, %s26
    %p30 = pneg %p24
    %p31 = scmp.eq.s32.totalorder %s15, 1
    %p32 = por %p30, %p31
    %p33 = scmp.ne.s32.totalorder %s25, %s28
    %p34 = scmp.eq.s32.totalorder %s15, 0
    %p35 = por %p33, %p34
    %p36 = scmp.ne.s32.totalorder %s25, %s28
    %p37 = scmp.eq.s32.totalorder %s20, 1
    %p38 = por %p36, %p37
    %p39 = scmp.ne.s32.totalorder %s28, %s29
    %p40 = scmp.eq.s32.totalorder %s20, 0
    %p41 = por %p39, %p40
    %p42 = scmp.ne.s32.totalorder %s28, %s29
    %p43 = scmp.eq.s32.totalorder %s21, 1
    %p44 = por %p42, %p43
    %p46 = scmp.ne.s32.totalorder %s29, %s45
    %p47 = scmp.eq.s32.totalorder %s21, 0
    %p48 = por %p46, %p47
    %s50 = sadd.s32 %s49, 1
    %p53 = scmp.eq.s32.totalorder %s15, 1
    %p54 = scmp.ne.s32.totalorder %s49, %s51
    %p55 = scmp.eq.s32.totalorder %s15, 0
    %p56 = por %p54, %p55
    %p57 = scmp.ne.s32.totalorder %s49, %s51
    %p58 = scmp.eq.s32.totalorder %s20, 1
    %p59 = por %p57, %p58
    %p60 = scmp.ne.s32.totalorder %s51, %s52
    %p61 = scmp.eq.s32.totalorder %s20, 0
    %p62 = por %p60, %p61
    %p63 = scmp.ne.s32.totalorder %s51, %s52
    %p64 = scmp.eq.s32.totalorder %s21, 1
    %p65 = por %p63, %p64
    %p67 = scmp.ne.s32.totalorder %s52, %s66
    %p68 = scmp.eq.s32.totalorder %s21, 0
    %p69 = por %p67, %p68
    %s71 = sadd.s32 %s70, 1
    %p74 = scmp.eq.s32.totalorder %s15, 1
    %p75 = scmp.ne.s32.totalorder %s70, %s72
    %p76 = scmp.eq.s32.totalorder %s15, 0
    %p77 = por %p75, %p76
    %p78 = scmp.ne.s32.totalorder %s70, %s72
    %p79 = scmp.eq.s32.totalorder %s20, 1
    %p80 = por %p78, %p79
    %p81 = scmp.ne.s32.totalorder %s72, %s73
    %p82 = scmp.eq.s32.totalorder %s20, 0
    %p83 = por %p81, %p82
    %p84 = scmp.ne.s32.totalorder %s72, %s73
    %p85 = scmp.eq.s32.totalorder %s21, 1
    %p86 = por %p84, %p85
    %p88 = scmp.ne.s32.totalorder %s73, %s87
    %p89 = scmp.eq.s32.totalorder %s21, 0
    %p90 = por %p88, %p89
    %s92 = sadd.s32 %s91, 1
    %p95 = scmp.eq.s32.totalorder %s15, 1
    %p96 = scmp.ne.s32.totalorder %s91, %s93
    %p97 = scmp.eq.s32.totalorder %s15, 0
    %p98 = por %p96, %p97
    %p99 = scmp.ne.s32.totalorder %s91, %s93
    %p100 = scmp.eq.s32.totalorder %s20, 1
    %p101 = por %p99, %p100
    %p102 = scmp.ne.s32.totalorder %s93, %s94
    %p103 = scmp.eq.s32.totalorder %s20, 0
    %p104 = por %p102, %p103
    %p105 = scmp.ne.s32.totalorder %s93, %s94
    %p106 = scmp.eq.s32.totalorder %s21, 1
    %p107 = por %p105, %p106
    %p109 = scmp.ne.s32.totalorder %s94, %s108
    %p110 = scmp.eq.s32.totalorder %s21, 0
    %p111 = por %p109, %p110
    %s113 = sadd.s32 %s112, 1
    %p116 = scmp.eq.s32.totalorder %s15, 1
    %p117 = scmp.ne.s32.totalorder %s112, %s114
    %p118 = scmp.eq.s32.totalorder %s15, 0
    %p119 = por %p117, %p118
    %p120 = scmp.ne.s32.totalorder %s112, %s114
    %p121 = scmp.eq.s32.totalorder %s20, 1
    %p122 = por %p120, %p121
    %p123 = scmp.ne.s32.totalorder %s114, %s115
    %p124 = scmp.eq.s32.totalorder %s20, 0
    %p125 = por %p123, %p124
    %p126 = scmp.ne.s32.totalorder %s114, %s115
    %p127 = scmp.eq.s32.totalorder %s21, 1
    %p128 = por %p126, %p127
    %p130 = scmp.ne.s32.totalorder %s115, %s129
    %p131 = scmp.eq.s32.totalorder %s21, 0
    %p132 = por %p130, %p131
    %s134 = sadd.s32 %s133, 1
    %p137 = scmp.eq.s32.totalorder %s15, 1
    %p138 = scmp.ne.s32.totalorder %s133, %s135
    %p139 = scmp.eq.s32.totalorder %s15, 0
    %p140 = por %p138, %p139
    %p141 = scmp.ne.s32.totalorder %s133, %s135
    %p142 = scmp.eq.s32.totalorder %s20, 1
    %p143 = por %p141, %p142
    %p144 = scmp.ne.s32.totalorder %s135, %s136
    %p145 = scmp.eq.s32.totalorder %s20, 0
    %p146 = por %p144, %p145
    %p147 = scmp.ne.s32.totalorder %s135, %s136
    %p148 = scmp.eq.s32.totalorder %s21, 1
    %p149 = por %p147, %p148
    %p151 = scmp.ne.s32.totalorder %s136, %s150
    %p152 = scmp.eq.s32.totalorder %s21, 0
    %p153 = por %p151, %p152
    %s155 = sadd.s32 %s154, 1
    %p158 = scmp.eq.s32.totalorder %s15, 1
    %p159 = scmp.ne.s32.totalorder %s154, %s156
    %p160 = scmp.eq.s32.totalorder %s15, 0
    %p161 = por %p159, %p160
    %p162 = scmp.ne.s32.totalorder %s154, %s156
    %p163 = scmp.eq.s32.totalorder %s20, 1
    %p164 = por %p162, %p163
    %p165 = scmp.ne.s32.totalorder %s156, %s157
    %p166 = scmp.eq.s32.totalorder %s20, 0
    %p167 = por %p165, %p166
    %p168 = scmp.ne.s32.totalorder %s156, %s157
    %p169 = scmp.eq.s32.totalorder %s21, 1
    %p170 = por %p168, %p169
    %p172 = scmp.ne.s32.totalorder %s157, %s171
    %p173 = scmp.eq.s32.totalorder %s21, 0
    %p174 = por %p172, %p173
    %s175 = ssub.s32 %s15, %s22
    %p176 = scmp.eq.s32.totalorder %s175, 0
    %s178 = sadd.s32 %s177, 1
    %s179 = scalar_select %p176, %s177, %s178
    %p182 = pneg %p176
    %p183 = scmp.eq.s32.totalorder %s15, 1
    %p184 = por %p182, %p183
    %p185 = scmp.ne.s32.totalorder %s177, %s180
    %p186 = scmp.eq.s32.totalorder %s15, 0
    %p187 = por %p185, %p186
    %p188 = scmp.ne.s32.totalorder %s177, %s180
    %p189 = scmp.eq.s32.totalorder %s20, 1
    %p190 = por %p188, %p189
    %p191 = scmp.ne.s32.totalorder %s180, %s181
    %p192 = scmp.eq.s32.totalorder %s20, 0
    %p193 = por %p191, %p192
    %p194 = scmp.ne.s32.totalorder %s180, %s181
    %p195 = scmp.eq.s32.totalorder %s21, 1
    %p196 = por %p194, %p195
    %p198 = scmp.ne.s32.totalorder %s181, %s197
    %p199 = scmp.eq.s32.totalorder %s21, 0
    %p200 = por %p198, %p199
    %s201 = ssub.s32 %s15, %s22
    %p202 = scmp.eq.s32.totalorder %s201, 0
    %s204 = sadd.s32 %s203, 1
    %s205 = scalar_select %p202, %s203, %s204
    %p208 = pneg %p202
    %p209 = scmp.eq.s32.totalorder %s15, 1
    %p210 = por %p208, %p209
    %p211 = scmp.ne.s32.totalorder %s203, %s206
    %p212 = scmp.eq.s32.totalorder %s15, 0
    %p213 = por %p211, %p212
    %p214 = scmp.ne.s32.totalorder %s203, %s206
    %p215 = scmp.eq.s32.totalorder %s20, 1
    %p216 = por %p214, %p215
    %p217 = scmp.ne.s32.totalorder %s206, %s207
    %p218 = scmp.eq.s32.totalorder %s20, 0
    %p219 = por %p217, %p218
    %p220 = scmp.ne.s32.totalorder %s206, %s207
    %p221 = scmp.eq.s32.totalorder %s21, 1
    %p222 = por %p220, %p221
    %p224 = scmp.ne.s32.totalorder %s207, %s223
    %p225 = scmp.eq.s32.totalorder %s21, 0
    %p226 = por %p224, %p225
    %p227 = scmp.le.s32.totalorder 1, %s15
    %p228 = scmp.lt.s32.totalorder %s15, 3
    %p229 = pnand %p227, %p228
    %p230 = pneg %p229
    // Predicated region
    $region9: #{mlp_forward.1} parent=5 // pred_check
      _
    $region10: #{mlp_forward.1} parent=5 // pred_check_branch
      %232 = sbr.rel (%p229) target = $region12
    $region11: #{mlp_forward.1} parent=5 // pred_region
      %s233 = ssub.s32 %s15, 1
      // Predicated region
      $region13: #{mlp_forward.1} parent=11 // pred_check
        %p234 = pneg %p62
      $region14: #{mlp_forward.1} parent=11 // pred_check_branch
        %236 = sbr.rel (%p234) target = $region16
      $region15: #{mlp_forward.1} parent=11 // pred_region
        _
      $region16: #{mlp_forward.1} parent=11 // pred_fallthru
        _
      // Predicated region
      $region17: #{mlp_forward.1} parent=11 // pred_check
        %p237 = pneg %p83
      $region18: #{mlp_forward.1} parent=11 // pred_check_branch
        %239 = sbr.rel (%p237) target = $region20
      $region19: #{mlp_forward.1} parent=11 // pred_region
        _
      $region20: #{mlp_forward.1} parent=11 // pred_fallthru
        _
      // Predicated region
      $region21: #{mlp_forward.1} parent=11 // pred_check
        %p240 = pneg %p104
      $region22: #{mlp_forward.1} parent=11 // pred_check_branch
        %242 = sbr.rel (%p240) target = $region24
      $region23: #{mlp_forward.1} parent=11 // pred_region
        _
      $region24: #{mlp_forward.1} parent=11 // pred_fallthru
        _
      // Predicated region
      $region25: #{mlp_forward.1} parent=11 // pred_check
        %p243 = pneg %p125
      $region26: #{mlp_forward.1} parent=11 // pred_check_branch
        %245 = sbr.rel (%p243) target = $region28
      $region27: #{mlp_forward.1} parent=11 // pred_region
        _
      $region28: #{mlp_forward.1} parent=11 // pred_fallthru
        _
      // Predicated region
      $region29: #{mlp_forward.1} parent=11 // pred_check
        %p246 = pneg %p146
      $region30: #{mlp_forward.1} parent=11 // pred_check_branch
        %248 = sbr.rel (%p246) target = $region32
      $region31: #{mlp_forward.1} parent=11 // pred_region
        _
      $region32: #{mlp_forward.1} parent=11 // pred_fallthru
        _
      // Predicated region
      $region33: #{mlp_forward.1} parent=11 // pred_check
        %p249 = pneg %p167
      $region34: #{mlp_forward.1} parent=11 // pred_check_branch
        %251 = sbr.rel (%p249) target = $region36
      $region35: #{mlp_forward.1} parent=11 // pred_region
        _
      $region36: #{mlp_forward.1} parent=11 // pred_fallthru
        _
    $region12: #{mlp_forward.1} parent=5 // pred_fallthru
      _
    %p252 = scmp.lt.s32.totalorder %s15, 2
    // Predicated region
    $region37: #{mlp_forward.1} parent=5 // pred_check
      %p253 = pneg %p252
    $region38: #{mlp_forward.1} parent=5 // pred_check_branch
      %255 = sbr.rel (%p253) target = $region40
    $region39: #{mlp_forward.1} parent=5 // pred_region
      // Predicated region
      $region41: #{mlp_forward.1} parent=39 // pred_check
        %p256 = pneg %p35
      $region42: #{mlp_forward.1} parent=39 // pred_check_branch
        %258 = sbr.rel (%p256) target = $region44
      $region43: #{mlp_forward.1} parent=39 // pred_region
        %s259 = smul.u32 16, %s15
        %p260 = scmp.lt.s32.totalorder %s259, 31
        %s261 = scalar_select %p260, %s259, 31
        %s262 = smul.addr %s261, 7
        %s263 = smul.addr %s262, 8
        %s264 = scalar_lea.vmem %s0, %s263
        %s265 = smul.u32 16, %s15
      $region44: #{mlp_forward.1} parent=39 // pred_fallthru
        _
    $region40: #{mlp_forward.1} parent=5 // pred_fallthru
      _
    %p266 = scmp.le.s32.totalorder 1, %s15
    %p267 = scmp.lt.s32.totalorder %s15, 3
    %p268 = pnand %p266, %p267
    %p269 = pneg %p268
    // Predicated region
    $region45: #{mlp_forward.1} parent=5 // pred_check
      _
    $region46: #{mlp_forward.1} parent=5 // pred_check_branch
      %271 = sbr.rel (%p268) target = $region48
    $region47: #{mlp_forward.1} parent=5 // pred_region
      %s272 = ssub.s32 %s15, 1
      %s273 = smul.u32 16, %s20
      %p274 = scmp.lt.s32.totalorder %s273, 31
      %s275 = scalar_select %p274, %s273, 31
      %s276 = smul.addr %s275, 7
      %s277 = smul.addr %s276, 8
      %s278 = scalar_lea.vmem %s0, %s277
      %p279 = pneg %p41
      %p280 = pneg %p38
      %p281 = pneg %p62
      %p282 = pneg %p59
      %p283 = pneg %p83
      %p284 = pneg %p80
      %p285 = pneg %p104
      %p286 = pneg %p101
      %p287 = pneg %p125
      %p288 = pneg %p122
      %p289 = pneg %p146
      %p290 = pneg %p143
      %p291 = pneg %p167
      %p292 = pneg %p164
      %p293 = pneg %p193
      %p294 = pneg %p190
      %s295 = smul.u32 16, %s20
      %p296 = scmp.lt.s32.totalorder %s295, 31
      %s297 = scalar_select %p296, %s295, 31
      %s298 = smul.addr %s297, 8
      %s299 = scalar_lea.vmem %s7, %s298
      %p300 = pneg %p219
      %p301 = pneg %p216
      %s302 = smul.u32 16, %s20
      %p303 = scmp.lt.s32.totalorder %s302, 31
      %s304 = scalar_select %p303, %s302, 31
      %s305 = smul.addr %s304, 8
      %s306 = scalar_lea.vmem %s8, %s305
      %s307 = smul.u32 16, %s20
      %p308 = scmp.lt.s32.totalorder %s307, 31
      %s309 = scalar_select %p308, %s307, 31
      %s310 = smul.addr %s309, 7
      %s311 = smul.addr %s310, 8
      %s312 = scalar_lea.vmem %s0, %s311
      %s313 = smul.u32 16, %s20
      %s314 = smul.u32 16, %s20
      %p315 = scmp.lt.s32.totalorder %s314, 31
      %s316 = scalar_select %p315, %s314, 31
      %s317 = smul.addr %s316, 8
      %s318 = scalar_lea.vmem %s7, %s317
      %s319 = smul.u32 16, %s20
      %s320 = smul.u32 16, %s20
      %p321 = scmp.lt.s32.totalorder %s320, 31
      %s322 = scalar_select %p321, %s320, 31
      %s323 = smul.addr %s322, 8
      %s324 = scalar_lea.vmem %s8, %s323
      %s325 = smul.u32 16, %s20
      %v327 = vld [vmem:[%s312] sm:$0xff]
      %v328 = vld [vmem:[%s312 + $0x8] sm:$0xff]
      %v329 = vld [vmem:[%s312 + $0x10] sm:$0xff]
      %v330 = vld [vmem:[%s312 + $0x18] sm:$0xff]
      %v331 = vld [vmem:[%s312 + $0x20] sm:$0xff]
      %v332 = vld [vmem:[%s312 + $0x28] sm:$0xff]
      %v333 = vld [vmem:[%s312 + $0x30] sm:$0xff]
      %v334 = vld [vmem:[%s312 + $0x38] sm:$0xff]
      %v335 = vld [vmem:[%s312 + $0x40] sm:$0xff]
      %v336 = vld [vmem:[%s312 + $0x48] sm:$0xff]
      %v337 = vld [vmem:[%s312 + $0x50] sm:$0xff]
      %v338 = vld [vmem:[%s312 + $0x58] sm:$0xff]
      %v339 = vld [vmem:[%s312 + $0x60] sm:$0xff]
      %v340 = vld [vmem:[%s312 + $0x68] sm:$0xff]
      %v341 = vld [vmem:[%s312 + $0x70] sm:$0xff]
      %v342 = vld [vmem:[%s312 + $0x78] sm:$0xff]
      %v343 = vld [vmem:[%s312 + $0x80] sm:$0xff]
      %v344 = vld [vmem:[%s312 + $0x88] sm:$0xff]
      %v345 = vld [vmem:[%s312 + $0x90] sm:$0xff]
      %v346 = vld [vmem:[%s312 + $0x98] sm:$0xff]
      %v347 = vld [vmem:[%s312 + $0xa0] sm:$0xff]
      %v348 = vld [vmem:[%s312 + $0xa8] sm:$0xff]
      %v349 = vld [vmem:[%s312 + $0xb0] sm:$0xff]
      %v350 = vld [vmem:[%s312 + $0xb8] sm:$0xff]
      %v351 = vld [vmem:[%s312 + $0xc0] sm:$0xff]
      %v352 = vld [vmem:[%s312 + $0xc8] sm:$0xff]
      %v353 = vld [vmem:[%s312 + $0xd0] sm:$0xff]
      %v354 = vld [vmem:[%s312 + $0xd8] sm:$0xff]
      %v355 = vld [vmem:[%s312 + $0xe0] sm:$0xff]
      %v356 = vld [vmem:[%s312 + $0xe8] sm:$0xff]
      %v357 = vld [vmem:[%s312 + $0xf0] sm:$0xff]
      %v358 = vld [vmem:[%s312 + $0xf8] sm:$0xff]
      %v359 = vld [vmem:[%s312 + $0x100] sm:$0xff]
      %v360 = vld [vmem:[%s312 + $0x108] sm:$0xff]
      %v361 = vld [vmem:[%s312 + $0x110] sm:$0xff]
      %v362 = vld [vmem:[%s312 + $0x118] sm:$0xff]
      %v363 = vld [vmem:[%s312 + $0x120] sm:$0xff]
      %v364 = vld [vmem:[%s312 + $0x128] sm:$0xff]
      %v365 = vld [vmem:[%s312 + $0x130] sm:$0xff]
      %v366 = vld [vmem:[%s312 + $0x138] sm:$0xff]
      %v367 = vld [vmem:[%s312 + $0x140] sm:$0xff]
      %v368 = vld [vmem:[%s312 + $0x148] sm:$0xff]
      %v369 = vld [vmem:[%s312 + $0x150] sm:$0xff]
      %v370 = vld [vmem:[%s312 + $0x158] sm:$0xff]
      %v371 = vld [vmem:[%s312 + $0x160] sm:$0xff]
      %v372 = vld [vmem:[%s312 + $0x168] sm:$0xff]
      %v373 = vld [vmem:[%s312 + $0x170] sm:$0xff]
      %v374 = vld [vmem:[%s312 + $0x178] sm:$0xff]
      %v375 = vld [vmem:[%s312 + $0x180] sm:$0xff]
      %v376 = vld [vmem:[%s312 + $0x188] sm:$0xff]
      %v377 = vld [vmem:[%s312 + $0x190] sm:$0xff]
      %v378 = vld [vmem:[%s312 + $0x198] sm:$0xff]
      %v379 = vld [vmem:[%s312 + $0x1a0] sm:$0xff]
      %v380 = vld [vmem:[%s312 + $0x1a8] sm:$0xff]
      %v381 = vld [vmem:[%s312 + $0x1b0] sm:$0xff]
      %v382 = vld [vmem:[%s312 + $0x1b8] sm:$0xff]
      %v383 = vld [vmem:[%s312 + $0x1c0] sm:$0xff]
      %v384 = vld [vmem:[%s312 + $0x1c8] sm:$0xff]
      %v385 = vld [vmem:[%s312 + $0x1d0] sm:$0xff]
      %v386 = vld [vmem:[%s312 + $0x1d8] sm:$0xff]
      %v387 = vld [vmem:[%s312 + $0x1e0] sm:$0xff]
      %v388 = vld [vmem:[%s312 + $0x1e8] sm:$0xff]
      %v389 = vld [vmem:[%s312 + $0x1f0] sm:$0xff]
      %v390 = vld [vmem:[%s312 + $0x1f8] sm:$0xff]
      %v391 = vld [vmem:[%s312 + $0x200] sm:$0xff]
      %v392 = vld [vmem:[%s312 + $0x208] sm:$0xff]
      %v393 = vld [vmem:[%s312 + $0x210] sm:$0xff]
      %v394 = vld [vmem:[%s312 + $0x218] sm:$0xff]
      %v395 = vld [vmem:[%s312 + $0x220] sm:$0xff]
      %v396 = vld [vmem:[%s312 + $0x228] sm:$0xff]
      %v397 = vld [vmem:[%s312 + $0x230] sm:$0xff]
      %v398 = vld [vmem:[%s312 + $0x238] sm:$0xff]
      %v399 = vld [vmem:[%s312 + $0x240] sm:$0xff]
      %v400 = vld [vmem:[%s312 + $0x248] sm:$0xff]
      %v401 = vld [vmem:[%s312 + $0x250] sm:$0xff]
      %v402 = vld [vmem:[%s312 + $0x258] sm:$0xff]
      %v403 = vld [vmem:[%s312 + $0x260] sm:$0xff]
      %v404 = vld [vmem:[%s312 + $0x268] sm:$0xff]
      %v405 = vld [vmem:[%s312 + $0x270] sm:$0xff]
      %v406 = vld [vmem:[%s312 + $0x278] sm:$0xff]
      %v407 = vld [vmem:[%s312 + $0x280] sm:$0xff]
      %v408 = vld [vmem:[%s312 + $0x288] sm:$0xff]
      %v409 = vld [vmem:[%s312 + $0x290] sm:$0xff]
      %v410 = vld [vmem:[%s312 + $0x298] sm:$0xff]
      %v411 = vld [vmem:[%s312 + $0x2a0] sm:$0xff]
      %v412 = vld [vmem:[%s312 + $0x2a8] sm:$0xff]
      %v413 = vld [vmem:[%s312 + $0x2b0] sm:$0xff]
      %v414 = vld [vmem:[%s312 + $0x2b8] sm:$0xff]
      %v415 = vld [vmem:[%s312 + $0x2c0] sm:$0xff]
      %v416 = vld [vmem:[%s312 + $0x2c8] sm:$0xff]
      %v417 = vld [vmem:[%s312 + $0x2d0] sm:$0xff]
      %v418 = vld [vmem:[%s312 + $0x2d8] sm:$0xff]
      %v419 = vld [vmem:[%s312 + $0x2e0] sm:$0xff]
      %v420 = vld [vmem:[%s312 + $0x2e8] sm:$0xff]
      %v421 = vld [vmem:[%s312 + $0x2f0] sm:$0xff]
      %v422 = vld [vmem:[%s312 + $0x2f8] sm:$0xff]
      %v423 = vld [vmem:[%s312 + $0x300] sm:$0xff]
      %v424 = vld [vmem:[%s312 + $0x308] sm:$0xff]
      %v425 = vld [vmem:[%s312 + $0x310] sm:$0xff]
      %v426 = vld [vmem:[%s312 + $0x318] sm:$0xff]
      %v427 = vld [vmem:[%s312 + $0x320] sm:$0xff]
      %v428 = vld [vmem:[%s312 + $0x328] sm:$0xff]
      %v429 = vld [vmem:[%s312 + $0x330] sm:$0xff]
      %v430 = vld [vmem:[%s312 + $0x338] sm:$0xff]
      %v431 = vld [vmem:[%s312 + $0x340] sm:$0xff]
      %v432 = vld [vmem:[%s312 + $0x348] sm:$0xff]
      %v433 = vld [vmem:[%s312 + $0x350] sm:$0xff]
      %v434 = vld [vmem:[%s312 + $0x358] sm:$0xff]
      %v435 = vld [vmem:[%s312 + $0x360] sm:$0xff]
      %v436 = vld [vmem:[%s312 + $0x368] sm:$0xff]
      %v437 = vld [vmem:[%s312 + $0x370] sm:$0xff]
      %v438 = vld [vmem:[%s312 + $0x378] sm:$0xff]
      %v439 = vmax.f32 %v327, 0.0
      %v440 = vmax.f32 %v328, 0.0
      %v441 = vmax.f32 %v329, 0.0
      %v442 = vmax.f32 %v330, 0.0
      %v443 = vmax.f32 %v331, 0.0
      %v444 = vmax.f32 %v332, 0.0
      %v445 = vmax.f32 %v333, 0.0
      %v446 = vmax.f32 %v334, 0.0
      %v447 = vmax.f32 %v335, 0.0
      %v448 = vmax.f32 %v336, 0.0
      %v449 = vmax.f32 %v337, 0.0
      %v450 = vmax.f32 %v338, 0.0
      %v451 = vmax.f32 %v339, 0.0
      %v452 = vmax.f32 %v340, 0.0
      %v453 = vmax.f32 %v341, 0.0
      %v454 = vmax.f32 %v342, 0.0
      %v455 = vmax.f32 %v343, 0.0
      %v456 = vmax.f32 %v344, 0.0
      %v457 = vmax.f32 %v345, 0.0
      %v458 = vmax.f32 %v346, 0.0
      %v459 = vmax.f32 %v347, 0.0
      %v460 = vmax.f32 %v348, 0.0
      %v461 = vmax.f32 %v349, 0.0
      %v462 = vmax.f32 %v350, 0.0
      %v463 = vmax.f32 %v351, 0.0
      %v464 = vmax.f32 %v352, 0.0
      %v465 = vmax.f32 %v353, 0.0
      %v466 = vmax.f32 %v354, 0.0
      %v467 = vmax.f32 %v355, 0.0
      %v468 = vmax.f32 %v356, 0.0
      %v469 = vmax.f32 %v357, 0.0
      %v470 = vmax.f32 %v358, 0.0
      %v471 = vmax.f32 %v359, 0.0
      %v472 = vmax.f32 %v360, 0.0
      %v473 = vmax.f32 %v361, 0.0
      %v474 = vmax.f32 %v362, 0.0
      %v475 = vmax.f32 %v363, 0.0
      %v476 = vmax.f32 %v364, 0.0
      %v477 = vmax.f32 %v365, 0.0
      %v478 = vmax.f32 %v366, 0.0
      %v479 = vmax.f32 %v367, 0.0
      %v480 = vmax.f32 %v368, 0.0
      %v481 = vmax.f32 %v369, 0.0
      %v482 = vmax.f32 %v370, 0.0
      %v483 = vmax.f32 %v371, 0.0
      %v484 = vmax.f32 %v372, 0.0
      %v485 = vmax.f32 %v373, 0.0
      %v486 = vmax.f32 %v374, 0.0
      %v487 = vmax.f32 %v375, 0.0
      %v488 = vmax.f32 %v376, 0.0
      %v489 = vmax.f32 %v377, 0.0
      %v490 = vmax.f32 %v378, 0.0
      %v491 = vmax.f32 %v379, 0.0
      %v492 = vmax.f32 %v380, 0.0
      %v493 = vmax.f32 %v381, 0.0
      %v494 = vmax.f32 %v382, 0.0
      %v495 = vmax.f32 %v383, 0.0
      %v496 = vmax.f32 %v384, 0.0
      %v497 = vmax.f32 %v385, 0.0
      %v498 = vmax.f32 %v386, 0.0
      %v499 = vmax.f32 %v387, 0.0
      %v500 = vmax.f32 %v388, 0.0
      %v501 = vmax.f32 %v389, 0.0
      %v502 = vmax.f32 %v390, 0.0
      %v503 = vmax.f32 %v391, 0.0
      %v504 = vmax.f32 %v392, 0.0
      %v505 = vmax.f32 %v393, 0.0
      %v506 = vmax.f32 %v394, 0.0
      %v507 = vmax.f32 %v395, 0.0
      %v508 = vmax.f32 %v396, 0.0
      %v509 = vmax.f32 %v397, 0.0
      %v510 = vmax.f32 %v398, 0.0
      %v511 = vmax.f32 %v399, 0.0
      %v512 = vmax.f32 %v400, 0.0
      %v513 = vmax.f32 %v401, 0.0
      %v514 = vmax.f32 %v402, 0.0
      %v515 = vmax.f32 %v403, 0.0
      %v516 = vmax.f32 %v404, 0.0
      %v517 = vmax.f32 %v405, 0.0
      %v518 = vmax.f32 %v406, 0.0
      %v519 = vmax.f32 %v407, 0.0
      %v520 = vmax.f32 %v408, 0.0
      %v521 = vmax.f32 %v409, 0.0
      %v522 = vmax.f32 %v410, 0.0
      %v523 = vmax.f32 %v411, 0.0
      %v524 = vmax.f32 %v412, 0.0
      %v525 = vmax.f32 %v413, 0.0
      %v526 = vmax.f32 %v414, 0.0
      %v527 = vmax.f32 %v415, 0.0
      %v528 = vmax.f32 %v416, 0.0
      %v529 = vmax.f32 %v417, 0.0
      %v530 = vmax.f32 %v418, 0.0
      %v531 = vmax.f32 %v419, 0.0
      %v532 = vmax.f32 %v420, 0.0
      %v533 = vmax.f32 %v421, 0.0
      %v534 = vmax.f32 %v422, 0.0
      %v535 = vmax.f32 %v423, 0.0
      %v536 = vmax.f32 %v424, 0.0
      %v537 = vmax.f32 %v425, 0.0
      %v538 = vmax.f32 %v426, 0.0
      %v539 = vmax.f32 %v427, 0.0
      %v540 = vmax.f32 %v428, 0.0
      %v541 = vmax.f32 %v429, 0.0
      %v542 = vmax.f32 %v430, 0.0
      %v543 = vmax.f32 %v431, 0.0
      %v544 = vmax.f32 %v432, 0.0
      %v545 = vmax.f32 %v433, 0.0
      %v546 = vmax.f32 %v434, 0.0
      %v547 = vmax.f32 %v435, 0.0
      %v548 = vmax.f32 %v436, 0.0
      %v549 = vmax.f32 %v437, 0.0
      %v550 = vmax.f32 %v438, 0.0
      %v551 = vpack.c.bf16 %v446, %v439
      %v552 = vpack.c.bf16 %v447, %v440
      %v553 = vpack.c.bf16 %v448, %v441
      %v554 = vpack.c.bf16 %v449, %v442
      %v555 = vpack.c.bf16 %v450, %v443
      %v556 = vpack.c.bf16 %v451, %v444
      %v557 = vpack.c.bf16 %v452, %v445
      %v558 = vpack.c.bf16 %v460, %v453
      %v559 = vpack.c.bf16 %v461, %v454
      %v560 = vpack.c.bf16 %v462, %v455
      %v561 = vpack.c.bf16 %v463, %v456
      %v562 = vpack.c.bf16 %v464, %v457
      %v563 = vpack.c.bf16 %v465, %v458
      %v564 = vpack.c.bf16 %v466, %v459
      %v565 = vpack.c.bf16 %v474, %v467
      %v566 = vpack.c.bf16 %v475, %v468
      %v567 = vpack.c.bf16 %v476, %v469
      %v568 = vpack.c.bf16 %v477, %v470
      %v569 = vpack.c.bf16 %v478, %v471
      %v570 = vpack.c.bf16 %v479, %v472
      %v571 = vpack.c.bf16 %v480, %v473
      %v572 = vpack.c.bf16 %v488, %v481
      %v573 = vpack.c.bf16 %v489, %v482
      %v574 = vpack.c.bf16 %v490, %v483
      %v575 = vpack.c.bf16 %v491, %v484
      %v576 = vpack.c.bf16 %v492, %v485
      %v577 = vpack.c.bf16 %v493, %v486
      %v578 = vpack.c.bf16 %v494, %v487
      %v579 = vpack.c.bf16 %v502, %v495
      %v580 = vpack.c.bf16 %v503, %v496
      %v581 = vpack.c.bf16 %v504, %v497
      %v582 = vpack.c.bf16 %v505, %v498
      %v583 = vpack.c.bf16 %v506, %v499
      %v584 = vpack.c.bf16 %v507, %v500
      %v585 = vpack.c.bf16 %v508, %v501
      %v586 = vpack.c.bf16 %v516, %v509
      %v587 = vpack.c.bf16 %v517, %v510
      %v588 = vpack.c.bf16 %v518, %v511
      %v589 = vpack.c.bf16 %v519, %v512
      %v590 = vpack.c.bf16 %v520, %v513
      %v591 = vpack.c.bf16 %v521, %v514
      %v592 = vpack.c.bf16 %v522, %v515
      %v593 = vpack.c.bf16 %v530, %v523
      %v594 = vpack.c.bf16 %v531, %v524
      %v595 = vpack.c.bf16 %v532, %v525
      %v596 = vpack.c.bf16 %v533, %v526
      %v597 = vpack.c.bf16 %v534, %v527
      %v598 = vpack.c.bf16 %v535, %v528
      %v599 = vpack.c.bf16 %v536, %v529
      %v600 = vpack.c.bf16 %v544, %v537
      %v601 = vpack.c.bf16 %v545, %v538
      %v602 = vpack.c.bf16 %v546, %v539
      %v603 = vpack.c.bf16 %v547, %v540
      %v604 = vpack.c.bf16 %v548, %v541
      %v605 = vpack.c.bf16 %v549, %v542
      %v606 = vpack.c.bf16 %v550, %v543
      %v607 = vld [vmem:[%s1] sm:$0xff]
      %v608 = vld [vmem:[%s1 + $0x8] sm:$0xff]
      %v609 = vld [vmem:[%s1 + $0x10] sm:$0xff]
      %v610 = vld [vmem:[%s1 + $0x18] sm:$0xff]
      %v611 = vld [vmem:[%s1 + $0x20] sm:$0xff]
      %v612 = vld [vmem:[%s1 + $0x28] sm:$0xff]
      %v613 = vld [vmem:[%s1 + $0x30] sm:$0xff]
      %v614 = vld [vmem:[%s1 + $0x38] sm:$0xff]
      %v615 = vld [vmem:[%s1 + $0x40] sm:$0xff]
      %v616 = vld [vmem:[%s1 + $0x48] sm:$0xff]
      %v617 = vld [vmem:[%s1 + $0x50] sm:$0xff]
      %v618 = vld [vmem:[%s1 + $0x58] sm:$0xff]
      %v619 = vld [vmem:[%s1 + $0x60] sm:$0xff]
      %v620 = vld [vmem:[%s1 + $0x68] sm:$0xff]
      %v621 = vld [vmem:[%s1 + $0x70] sm:$0xff]
      %v622 = vld [vmem:[%s1 + $0x78] sm:$0xff]
      %v623 = vld [vmem:[%s1 + $0x80] sm:$0xff]
      %v624 = vld [vmem:[%s1 + $0x88] sm:$0xff]
      %v625 = vld [vmem:[%s1 + $0x90] sm:$0xff]
      %v626 = vld [vmem:[%s1 + $0x98] sm:$0xff]
      %v627 = vld [vmem:[%s1 + $0xa0] sm:$0xff]
      %v628 = vld [vmem:[%s1 + $0xa8] sm:$0xff]
      %v629 = vld [vmem:[%s1 + $0xb0] sm:$0xff]
      %v630 = vld [vmem:[%s1 + $0xb8] sm:$0xff]
      %v631 = vld [vmem:[%s1 + $0xc0] sm:$0xff]
      %v632 = vld [vmem:[%s1 + $0xc8] sm:$0xff]
      %v633 = vld [vmem:[%s1 + $0xd0] sm:$0xff]
      %v634 = vld [vmem:[%s1 + $0xd8] sm:$0xff]
      %v635 = vld [vmem:[%s1 + $0xe0] sm:$0xff]
      %v636 = vld [vmem:[%s1 + $0xe8] sm:$0xff]
      %v637 = vld [vmem:[%s1 + $0xf0] sm:$0xff]
      %v638 = vld [vmem:[%s1 + $0xf8] sm:$0xff]
      %v639 = vld [vmem:[%s1 + $0x100] sm:$0xff]
      %v640 = vld [vmem:[%s1 + $0x108] sm:$0xff]
      %v641 = vld [vmem:[%s1 + $0x110] sm:$0xff]
      %v642 = vld [vmem:[%s1 + $0x118] sm:$0xff]
      %v643 = vld [vmem:[%s1 + $0x120] sm:$0xff]
      %v644 = vld [vmem:[%s1 + $0x128] sm:$0xff]
      %v645 = vld [vmem:[%s1 + $0x130] sm:$0xff]
      %v646 = vld [vmem:[%s1 + $0x138] sm:$0xff]
      %v647 = vld [vmem:[%s1 + $0x140] sm:$0xff]
      %v648 = vld [vmem:[%s1 + $0x148] sm:$0xff]
      %v649 = vld [vmem:[%s1 + $0x150] sm:$0xff]
      %v650 = vld [vmem:[%s1 + $0x158] sm:$0xff]
      %v651 = vld [vmem:[%s1 + $0x160] sm:$0xff]
      %v652 = vld [vmem:[%s1 + $0x168] sm:$0xff]
      %v653 = vld [vmem:[%s1 + $0x170] sm:$0xff]
      %v654 = vld [vmem:[%s1 + $0x178] sm:$0xff]
      %v655 = vld [vmem:[%s1 + $0x180] sm:$0xff]
      %v656 = vld [vmem:[%s1 + $0x188] sm:$0xff]
      %v657 = vld [vmem:[%s1 + $0x190] sm:$0xff]
      %v658 = vld [vmem:[%s1 + $0x198] sm:$0xff]
      %v659 = vld [vmem:[%s1 + $0x1a0] sm:$0xff]
      %v660 = vld [vmem:[%s1 + $0x1a8] sm:$0xff]
      %v661 = vld [vmem:[%s1 + $0x1b0] sm:$0xff]
      %v662 = vld [vmem:[%s1 + $0x1b8] sm:$0xff]
      %v663 = vld [vmem:[%s1 + $0x1c0] sm:$0xff]
      %v664 = vld [vmem:[%s1 + $0x1c8] sm:$0xff]
      %v665 = vld [vmem:[%s1 + $0x1d0] sm:$0xff]
      %v666 = vld [vmem:[%s1 + $0x1d8] sm:$0xff]
      %v667 = vld [vmem:[%s1 + $0x1e0] sm:$0xff]
      %v668 = vld [vmem:[%s1 + $0x1e8] sm:$0xff]
      %v669 = vld [vmem:[%s1 + $0x1f0] sm:$0xff]
      %v670 = vld [vmem:[%s1 + $0x1f8] sm:$0xff]
      %v671 = vld [vmem:[%s1 + $0x200] sm:$0xff]
      %v672 = vld [vmem:[%s1 + $0x208] sm:$0xff]
      %v673 = vld [vmem:[%s1 + $0x210] sm:$0xff]
      %v674 = vld [vmem:[%s1 + $0x218] sm:$0xff]
      %v675 = vld [vmem:[%s1 + $0x220] sm:$0xff]
      %v676 = vld [vmem:[%s1 + $0x228] sm:$0xff]
      %v677 = vld [vmem:[%s1 + $0x230] sm:$0xff]
      %v678 = vld [vmem:[%s1 + $0x238] sm:$0xff]
      %v679 = vld [vmem:[%s1 + $0x240] sm:$0xff]
      %v680 = vld [vmem:[%s1 + $0x248] sm:$0xff]
      %v681 = vld [vmem:[%s1 + $0x250] sm:$0xff]
      %v682 = vld [vmem:[%s1 + $0x258] sm:$0xff]
      %v683 = vld [vmem:[%s1 + $0x260] sm:$0xff]
      %v684 = vld [vmem:[%s1 + $0x268] sm:$0xff]
      %v685 = vld [vmem:[%s1 + $0x270] sm:$0xff]
      %v686 = vld [vmem:[%s1 + $0x278] sm:$0xff]
      %v687 = vld [vmem:[%s1 + $0x280] sm:$0xff]
      %v688 = vld [vmem:[%s1 + $0x288] sm:$0xff]
      %v689 = vld [vmem:[%s1 + $0x290] sm:$0xff]
      %v690 = vld [vmem:[%s1 + $0x298] sm:$0xff]
      %v691 = vld [vmem:[%s1 + $0x2a0] sm:$0xff]
      %v692 = vld [vmem:[%s1 + $0x2a8] sm:$0xff]
      %v693 = vld [vmem:[%s1 + $0x2b0] sm:$0xff]
      %v694 = vld [vmem:[%s1 + $0x2b8] sm:$0xff]
      %v695 = vld [vmem:[%s1 + $0x2c0] sm:$0xff]
      %v696 = vld [vmem:[%s1 + $0x2c8] sm:$0xff]
      %v697 = vld [vmem:[%s1 + $0x2d0] sm:$0xff]
      %v698 = vld [vmem:[%s1 + $0x2d8] sm:$0xff]
      %v699 = vld [vmem:[%s1 + $0x2e0] sm:$0xff]
      %v700 = vld [vmem:[%s1 + $0x2e8] sm:$0xff]
      %v701 = vld [vmem:[%s1 + $0x2f0] sm:$0xff]
      %v702 = vld [vmem:[%s1 + $0x2f8] sm:$0xff]
      %v703 = vld [vmem:[%s1 + $0x300] sm:$0xff]
      %v704 = vld [vmem:[%s1 + $0x308] sm:$0xff]
      %v705 = vld [vmem:[%s1 + $0x310] sm:$0xff]
      %v706 = vld [vmem:[%s1 + $0x318] sm:$0xff]
      %v707 = vld [vmem:[%s1 + $0x320] sm:$0xff]
      %v708 = vld [vmem:[%s1 + $0x328] sm:$0xff]
      %v709 = vld [vmem:[%s1 + $0x330] sm:$0xff]
      %v710 = vld [vmem:[%s1 + $0x338] sm:$0xff]
      %v711 = vld [vmem:[%s1 + $0x340] sm:$0xff]
      %v712 = vld [vmem:[%s1 + $0x348] sm:$0xff]
      %v713 = vld [vmem:[%s1 + $0x350] sm:$0xff]
      %v714 = vld [vmem:[%s1 + $0x358] sm:$0xff]
      %v715 = vld [vmem:[%s1 + $0x360] sm:$0xff]
      %v716 = vld [vmem:[%s1 + $0x368] sm:$0xff]
      %v717 = vld [vmem:[%s1 + $0x370] sm:$0xff]
      %v718 = vld [vmem:[%s1 + $0x378] sm:$0xff]
      %v719 = vld [vmem:[%s1 + $0x380] sm:$0xff]
      %v720 = vld [vmem:[%s1 + $0x388] sm:$0xff]
      %v721 = vld [vmem:[%s1 + $0x390] sm:$0xff]
      %v722 = vld [vmem:[%s1 + $0x398] sm:$0xff]
      %v723 = vld [vmem:[%s1 + $0x3a0] sm:$0xff]
      %v724 = vld [vmem:[%s1 + $0x3a8] sm:$0xff]
      %v725 = vld [vmem:[%s1 + $0x3b0] sm:$0xff]
      %v726 = vld [vmem:[%s1 + $0x3b8] sm:$0xff]
      %v727 = vld [vmem:[%s1 + $0x3c0] sm:$0xff]
      %v728 = vld [vmem:[%s1 + $0x3c8] sm:$0xff]
      %v729 = vld [vmem:[%s1 + $0x3d0] sm:$0xff]
      %v730 = vld [vmem:[%s1 + $0x3d8] sm:$0xff]
      %v731 = vld [vmem:[%s1 + $0x3e0] sm:$0xff]
      %v732 = vld [vmem:[%s1 + $0x3e8] sm:$0xff]
      %v733 = vld [vmem:[%s1 + $0x3f0] sm:$0xff]
      %v734 = vld [vmem:[%s1 + $0x3f8] sm:$0xff]
      %v735 = vld [vmem:[%s1 + $0x400] sm:$0xff]
      %v736 = vld [vmem:[%s1 + $0x408] sm:$0xff]
      %v737 = vld [vmem:[%s1 + $0x410] sm:$0xff]
      %v738 = vld [vmem:[%s1 + $0x418] sm:$0xff]
      %v739 = vld [vmem:[%s1 + $0x420] sm:$0xff]
      %v740 = vld [vmem:[%s1 + $0x428] sm:$0xff]
      %v741 = vld [vmem:[%s1 + $0x430] sm:$0xff]
      %v742 = vld [vmem:[%s1 + $0x438] sm:$0xff]
      %v743 = vld [vmem:[%s1 + $0x440] sm:$0xff]
      %v744 = vld [vmem:[%s1 + $0x448] sm:$0xff]
      %v745 = vld [vmem:[%s1 + $0x450] sm:$0xff]
      %v746 = vld [vmem:[%s1 + $0x458] sm:$0xff]
      %v747 = vld [vmem:[%s1 + $0x460] sm:$0xff]
      %v748 = vld [vmem:[%s1 + $0x468] sm:$0xff]
      %v749 = vld [vmem:[%s1 + $0x470] sm:$0xff]
      %v750 = vld [vmem:[%s1 + $0x478] sm:$0xff]
      %v751 = vld [vmem:[%s1 + $0x480] sm:$0xff]
      %v752 = vld [vmem:[%s1 + $0x488] sm:$0xff]
      %v753 = vld [vmem:[%s1 + $0x490] sm:$0xff]
      %v754 = vld [vmem:[%s1 + $0x498] sm:$0xff]
      %v755 = vld [vmem:[%s1 + $0x4a0] sm:$0xff]
      %v756 = vld [vmem:[%s1 + $0x4a8] sm:$0xff]
      %v757 = vld [vmem:[%s1 + $0x4b0] sm:$0xff]
      %v758 = vld [vmem:[%s1 + $0x4b8] sm:$0xff]
      %v759 = vld [vmem:[%s1 + $0x4c0] sm:$0xff]
      %v760 = vld [vmem:[%s1 + $0x4c8] sm:$0xff]
      %v761 = vld [vmem:[%s1 + $0x4d0] sm:$0xff]
      %v762 = vld [vmem:[%s1 + $0x4d8] sm:$0xff]
      %v763 = vld [vmem:[%s1 + $0x4e0] sm:$0xff]
      %v764 = vld [vmem:[%s1 + $0x4e8] sm:$0xff]
      %v765 = vld [vmem:[%s1 + $0x4f0] sm:$0xff]
      %v766 = vld [vmem:[%s1 + $0x4f8] sm:$0xff]
      %v767 = vld [vmem:[%s1 + $0x500] sm:$0xff]
      %v768 = vld [vmem:[%s1 + $0x508] sm:$0xff]
      %v769 = vld [vmem:[%s1 + $0x510] sm:$0xff]
      %v770 = vld [vmem:[%s1 + $0x518] sm:$0xff]
      %v771 = vld [vmem:[%s1 + $0x520] sm:$0xff]
      %v772 = vld [vmem:[%s1 + $0x528] sm:$0xff]
      %v773 = vld [vmem:[%s1 + $0x530] sm:$0xff]
      %v774 = vld [vmem:[%s1 + $0x538] sm:$0xff]
      %v775 = vld [vmem:[%s1 + $0x540] sm:$0xff]
      %v776 = vld [vmem:[%s1 + $0x548] sm:$0xff]
      %v777 = vld [vmem:[%s1 + $0x550] sm:$0xff]
      %v778 = vld [vmem:[%s1 + $0x558] sm:$0xff]
      %v779 = vld [vmem:[%s1 + $0x560] sm:$0xff]
      %v780 = vld [vmem:[%s1 + $0x568] sm:$0xff]
      %v781 = vld [vmem:[%s1 + $0x570] sm:$0xff]
      %v782 = vld [vmem:[%s1 + $0x578] sm:$0xff]
      %v783 = vld [vmem:[%s1 + $0x580] sm:$0xff]
      %v784 = vld [vmem:[%s1 + $0x588] sm:$0xff]
      %v785 = vld [vmem:[%s1 + $0x590] sm:$0xff]
      %v786 = vld [vmem:[%s1 + $0x598] sm:$0xff]
      %v787 = vld [vmem:[%s1 + $0x5a0] sm:$0xff]
      %v788 = vld [vmem:[%s1 + $0x5a8] sm:$0xff]
      %v789 = vld [vmem:[%s1 + $0x5b0] sm:$0xff]
      %v790 = vld [vmem:[%s1 + $0x5b8] sm:$0xff]
      %v791 = vld [vmem:[%s1 + $0x5c0] sm:$0xff]
      %v792 = vld [vmem:[%s1 + $0x5c8] sm:$0xff]
      %v793 = vld [vmem:[%s1 + $0x5d0] sm:$0xff]
      %v794 = vld [vmem:[%s1 + $0x5d8] sm:$0xff]
      %v795 = vld [vmem:[%s1 + $0x5e0] sm:$0xff]
      %v796 = vld [vmem:[%s1 + $0x5e8] sm:$0xff]
      %v797 = vld [vmem:[%s1 + $0x5f0] sm:$0xff]
      %v798 = vld [vmem:[%s1 + $0x5f8] sm:$0xff]
      %v799 = vld [vmem:[%s1 + $0x600] sm:$0xff]
      %v800 = vld [vmem:[%s1 + $0x608] sm:$0xff]
      %v801 = vld [vmem:[%s1 + $0x610] sm:$0xff]
      %v802 = vld [vmem:[%s1 + $0x618] sm:$0xff]
      %v803 = vld [vmem:[%s2] sm:$0xf]
      %v805 = vlaneseq
      %v806 = vshrl.u32 %v805, 7
      %v807 = vsub.s32 0, %v806
      %v808 = vrot.slane %v803, %v807
      %v809 = vlaneseq
      %v810 = vshrl.u32 %v809, 7
      %v811 = vsub.s32 1, %v810
      %v812 = vrot.slane %v803, %v811
      %v813 = vlaneseq
      %v814 = vshrl.u32 %v813, 7
      %v815 = vsub.s32 2, %v814
      %v816 = vrot.slane %v803, %v815
      %v817 = vlaneseq
      %v818 = vshrl.u32 %v817, 7
      %v819 = vsub.s32 3, %v818
      %v820 = vrot.slane %v803, %v819
      %v1021 = vunpack.c.l.b16 %v607
      %v1022 = vunpack.c.h.b16 %v607
      %v1023 = vunpack.c.l.b16 %v608
      %v1024 = vunpack.c.h.b16 %v608
      %v1025 = vunpack.c.l.b16 %v609
      %v1026 = vunpack.c.h.b16 %v609
      %v1027 = vunpack.c.l.b16 %v610
      %v1028 = vunpack.c.h.b16 %v610
      %v1029 = vunpack.c.l.b16 %v611
      %v1030 = vunpack.c.h.b16 %v611
      %v1031 = vunpack.c.l.b16 %v612
      %v1032 = vunpack.c.h.b16 %v612
      %v1033 = vunpack.c.l.b16 %v613
      %v1034 = vunpack.c.h.b16 %v613
      %v1035 = vunpack.c.l.b16 %v614
      %v1036 = vunpack.c.h.b16 %v614
      %v1037 = vunpack.c.l.b16 %v615
      %v1038 = vunpack.c.h.b16 %v615
      %v1039 = vunpack.c.l.b16 %v616
      %v1040 = vunpack.c.h.b16 %v616
      %v1041 = vunpack.c.l.b16 %v617
      %v1042 = vunpack.c.h.b16 %v617
      %v1043 = vunpack.c.l.b16 %v618
      %v1044 = vunpack.c.h.b16 %v618
      %v1045 = vunpack.c.l.b16 %v619
      %v1046 = vunpack.c.h.b16 %v619
      %v1047 = vunpack.c.l.b16 %v620
      %v1048 = vunpack.c.h.b16 %v620
      %v1049 = vunpack.c.l.b16 %v621
      %v1050 = vunpack.c.h.b16 %v621
      %v1051 = vunpack.c.l.b16 %v622
      %v1052 = vunpack.c.h.b16 %v622
      %v1053 = vunpack.c.l.b16 %v623
      %v1054 = vunpack.c.h.b16 %v623
      %v1055 = vunpack.c.l.b16 %v624
      %v1056 = vunpack.c.h.b16 %v624
      %v1057 = vunpack.c.l.b16 %v625
      %v1058 = vunpack.c.h.b16 %v625
      %v1059 = vunpack.c.l.b16 %v626
      %v1060 = vunpack.c.h.b16 %v626
      %v1061 = vunpack.c.l.b16 %v627
      %v1062 = vunpack.c.h.b16 %v627
      %v1063 = vunpack.c.l.b16 %v628
      %v1064 = vunpack.c.h.b16 %v628
      %v1065 = vunpack.c.l.b16 %v629
      %v1066 = vunpack.c.h.b16 %v629
      %v1067 = vunpack.c.l.b16 %v630
      %v1068 = vunpack.c.h.b16 %v630
      %v1069 = vunpack.c.l.b16 %v631
      %v1070 = vunpack.c.h.b16 %v631
      %v1071 = vunpack.c.l.b16 %v632
      %v1072 = vunpack.c.h.b16 %v632
      %v1073 = vunpack.c.l.b16 %v633
      %v1074 = vunpack.c.h.b16 %v633
      %v1075 = vunpack.c.l.b16 %v634
      %v1076 = vunpack.c.h.b16 %v634
      %v1077 = vunpack.c.l.b16 %v635
      %v1078 = vunpack.c.h.b16 %v635
      %v1079 = vunpack.c.l.b16 %v636
      %v1080 = vunpack.c.h.b16 %v636
      %v1081 = vunpack.c.l.b16 %v637
      %v1082 = vunpack.c.h.b16 %v637
      %v1083 = vunpack.c.l.b16 %v638
      %v1084 = vunpack.c.h.b16 %v638
      %v1085 = vunpack.c.l.b16 %v639
      %v1086 = vunpack.c.h.b16 %v639
      %v1087 = vunpack.c.l.b16 %v640
      %v1088 = vunpack.c.h.b16 %v640
      %v1089 = vunpack.c.l.b16 %v641
      %v1090 = vunpack.c.h.b16 %v641
      %v1091 = vunpack.c.l.b16 %v642
      %v1092 = vunpack.c.h.b16 %v642
      %v1093 = vunpack.c.l.b16 %v643
      %v1094 = vunpack.c.h.b16 %v643
      %v1095 = vunpack.c.l.b16 %v644
      %v1096 = vunpack.c.h.b16 %v644
      %v1097 = vunpack.c.l.b16 %v645
      %v1098 = vunpack.c.h.b16 %v645
      %v1099 = vunpack.c.l.b16 %v646
      %v1100 = vunpack.c.h.b16 %v646
      %v1101 = vunpack.c.l.b16 %v647
      %v1102 = vunpack.c.h.b16 %v647
      %v1103 = vunpack.c.l.b16 %v648
      %v1104 = vunpack.c.h.b16 %v648
      %v1105 = vunpack.c.l.b16 %v649
      %v1106 = vunpack.c.h.b16 %v649
      %v1107 = vunpack.c.l.b16 %v650
      %v1108 = vunpack.c.h.b16 %v650
      %v1109 = vunpack.c.l.b16 %v651
      %v1110 = vunpack.c.h.b16 %v651
      %v1111 = vunpack.c.l.b16 %v652
      %v1112 = vunpack.c.h.b16 %v652
      %v1113 = vunpack.c.l.b16 %v653
      %v1114 = vunpack.c.h.b16 %v653
      %v1115 = vunpack.c.l.b16 %v654
      %v1116 = vunpack.c.h.b16 %v654
      %v1117 = vunpack.c.l.b16 %v655
      %v1118 = vunpack.c.h.b16 %v655
      %v1119 = vunpack.c.l.b16 %v656
      %v1120 = vunpack.c.h.b16 %v656
      %v1121 = vunpack.c.l.b16 %v657
      %v1122 = vunpack.c.h.b16 %v657
      %v1123 = vunpack.c.l.b16 %v658
      %v1124 = vunpack.c.h.b16 %v658
      %v1125 = vunpack.c.l.b16 %v659
      %v1126 = vunpack.c.h.b16 %v659
      %v1127 = vunpack.c.l.b16 %v660
      %v1128 = vunpack.c.h.b16 %v660
      %v1129 = vunpack.c.l.b16 %v661
      %v1130 = vunpack.c.h.b16 %v661
      %v1131 = vunpack.c.l.b16 %v662
      %v1132 = vunpack.c.h.b16 %v662
      %v1133 = vunpack.c.l.b16 %v663
      %v1134 = vunpack.c.h.b16 %v663
      %v1135 = vunpack.c.l.b16 %v664
      %v1136 = vunpack.c.h.b16 %v664
      %v1137 = vunpack.c.l.b16 %v665
      %v1138 = vunpack.c.h.b16 %v665
      %v1139 = vunpack.c.l.b16 %v666
      %v1140 = vunpack.c.h.b16 %v666
      %v1141 = vunpack.c.l.b16 %v667
      %v1142 = vunpack.c.h.b16 %v667
      %v1143 = vunpack.c.l.b16 %v668
      %v1144 = vunpack.c.h.b16 %v668
      %v1145 = vunpack.c.l.b16 %v669
      %v1146 = vunpack.c.h.b16 %v669
      %v1147 = vunpack.c.l.b16 %v670
      %v1148 = vunpack.c.h.b16 %v670
      %v1149 = vunpack.c.l.b16 %v671
      %v1150 = vunpack.c.h.b16 %v671
      %v1151 = vunpack.c.l.b16 %v672
      %v1152 = vunpack.c.h.b16 %v672
      %v1153 = vunpack.c.l.b16 %v673
      %v1154 = vunpack.c.h.b16 %v673
      %v1155 = vunpack.c.l.b16 %v674
      %v1156 = vunpack.c.h.b16 %v674
      %v1157 = vunpack.c.l.b16 %v675
      %v1158 = vunpack.c.h.b16 %v675
      %v1159 = vunpack.c.l.b16 %v676
      %v1160 = vunpack.c.h.b16 %v676
      %v1161 = vunpack.c.l.b16 %v677
      %v1162 = vunpack.c.h.b16 %v677
      %v1163 = vunpack.c.l.b16 %v678
      %v1164 = vunpack.c.h.b16 %v678
      %v1165 = vunpack.c.l.b16 %v679
      %v1166 = vunpack.c.h.b16 %v679
      %v1167 = vunpack.c.l.b16 %v680
      %v1168 = vunpack.c.h.b16 %v680
      %v1169 = vunpack.c.l.b16 %v681
      %v1170 = vunpack.c.h.b16 %v681
      %v1171 = vunpack.c.l.b16 %v682
      %v1172 = vunpack.c.h.b16 %v682
      %v1173 = vunpack.c.l.b16 %v683
      %v1174 = vunpack.c.h.b16 %v683
      %v1175 = vunpack.c.l.b16 %v684
      %v1176 = vunpack.c.h.b16 %v684
      %v1177 = vunpack.c.l.b16 %v685
      %v1178 = vunpack.c.h.b16 %v685
      %v1179 = vunpack.c.l.b16 %v686
      %v1180 = vunpack.c.h.b16 %v686
      %v1181 = vunpack.c.l.b16 %v687
      %v1182 = vunpack.c.h.b16 %v687
      %v1183 = vunpack.c.l.b16 %v688
      %v1184 = vunpack.c.h.b16 %v688
      %v1185 = vunpack.c.l.b16 %v689
      %v1186 = vunpack.c.h.b16 %v689
      %v1187 = vunpack.c.l.b16 %v690
      %v1188 = vunpack.c.h.b16 %v690
      %v1189 = vunpack.c.l.b16 %v691
      %v1190 = vunpack.c.h.b16 %v691
      %v1191 = vunpack.c.l.b16 %v692
      %v1192 = vunpack.c.h.b16 %v692
      %v1193 = vunpack.c.l.b16 %v693
      %v1194 = vunpack.c.h.b16 %v693
      %v1195 = vunpack.c.l.b16 %v694
      %v1196 = vunpack.c.h.b16 %v694
      %v1197 = vunpack.c.l.b16 %v695
      %v1198 = vunpack.c.h.b16 %v695
      %v1199 = vunpack.c.l.b16 %v696
      %v1200 = vunpack.c.h.b16 %v696
      %v1201 = vunpack.c.l.b16 %v697
      %v1202 = vunpack.c.h.b16 %v697
      %v1203 = vunpack.c.l.b16 %v698
      %v1204 = vunpack.c.h.b16 %v698
      %v1205 = vunpack.c.l.b16 %v699
      %v1206 = vunpack.c.h.b16 %v699
      %v1207 = vunpack.c.l.b16 %v700
      %v1208 = vunpack.c.h.b16 %v700
      %v1209 = vunpack.c.l.b16 %v701
      %v1210 = vunpack.c.h.b16 %v701
      %v1211 = vunpack.c.l.b16 %v702
      %v1212 = vunpack.c.h.b16 %v702
      %v1213 = vunpack.c.l.b16 %v703
      %v1214 = vunpack.c.h.b16 %v703
      %v1215 = vunpack.c.l.b16 %v704
      %v1216 = vunpack.c.h.b16 %v704
      %v1217 = vunpack.c.l.b16 %v705
      %v1218 = vunpack.c.h.b16 %v705
      %v1219 = vunpack.c.l.b16 %v706
      %v1220 = vunpack.c.h.b16 %v706
      %v1221 = vunpack.c.l.b16 %v707
      %v1222 = vunpack.c.h.b16 %v707
      %v1223 = vunpack.c.l.b16 %v708
      %v1224 = vunpack.c.h.b16 %v708
      %v1225 = vunpack.c.l.b16 %v709
      %v1226 = vunpack.c.h.b16 %v709
      %v1227 = vunpack.c.l.b16 %v710
      %v1228 = vunpack.c.h.b16 %v710
      %v1229 = vunpack.c.l.b16 %v711
      %v1230 = vunpack.c.h.b16 %v711
      %v1231 = vunpack.c.l.b16 %v712
      %v1232 = vunpack.c.h.b16 %v712
      %v1233 = vunpack.c.l.b16 %v713
      %v1234 = vunpack.c.h.b16 %v713
      %v1235 = vunpack.c.l.b16 %v714
      %v1236 = vunpack.c.h.b16 %v714
      %v1237 = vunpack.c.l.b16 %v715
      %v1238 = vunpack.c.h.b16 %v715
      %v1239 = vunpack.c.l.b16 %v716
      %v1240 = vunpack.c.h.b16 %v716
      %v1241 = vunpack.c.l.b16 %v717
      %v1242 = vunpack.c.h.b16 %v717
      %v1243 = vunpack.c.l.b16 %v718
      %v1244 = vunpack.c.h.b16 %v718
      %v1245 = vunpack.c.l.b16 %v719
      %v1246 = vunpack.c.h.b16 %v719
      %v1247 = vunpack.c.l.b16 %v720
      %v1248 = vunpack.c.h.b16 %v720
      %v1249 = vunpack.c.l.b16 %v721
      %v1250 = vunpack.c.h.b16 %v721
      %v1251 = vunpack.c.l.b16 %v722
      %v1252 = vunpack.c.h.b16 %v722
      %v1253 = vunpack.c.l.b16 %v723
      %v1254 = vunpack.c.h.b16 %v723
      %v1255 = vunpack.c.l.b16 %v724
      %v1256 = vunpack.c.h.b16 %v724
      %v1257 = vunpack.c.l.b16 %v725
      %v1258 = vunpack.c.h.b16 %v725
      %v1259 = vunpack.c.l.b16 %v726
      %v1260 = vunpack.c.h.b16 %v726
      %v1261 = vunpack.c.l.b16 %v727
      %v1262 = vunpack.c.h.b16 %v727
      %v1263 = vunpack.c.l.b16 %v728
      %v1264 = vunpack.c.h.b16 %v728
      %v1265 = vunpack.c.l.b16 %v729
      %v1266 = vunpack.c.h.b16 %v729
      %v1267 = vunpack.c.l.b16 %v730
      %v1268 = vunpack.c.h.b16 %v730
      %v1269 = vunpack.c.l.b16 %v731
      %v1270 = vunpack.c.h.b16 %v731
      %v1271 = vunpack.c.l.b16 %v732
      %v1272 = vunpack.c.h.b16 %v732
      %v1273 = vunpack.c.l.b16 %v733
      %v1274 = vunpack.c.h.b16 %v733
      %v1275 = vunpack.c.l.b16 %v734
      %v1276 = vunpack.c.h.b16 %v734
      %v1277 = vunpack.c.l.b16 %v735
      %v1278 = vunpack.c.h.b16 %v735
      %v1279 = vunpack.c.l.b16 %v736
      %v1280 = vunpack.c.h.b16 %v736
      %v1281 = vunpack.c.l.b16 %v737
      %v1282 = vunpack.c.h.b16 %v737
      %v1283 = vunpack.c.l.b16 %v738
      %v1284 = vunpack.c.h.b16 %v738
      %v1285 = vunpack.c.l.b16 %v739
      %v1286 = vunpack.c.h.b16 %v739
      %v1287 = vunpack.c.l.b16 %v740
      %v1288 = vunpack.c.h.b16 %v740
      %v1289 = vunpack.c.l.b16 %v741
      %v1290 = vunpack.c.h.b16 %v741
      %v1291 = vunpack.c.l.b16 %v742
      %v1292 = vunpack.c.h.b16 %v742
      %v1293 = vunpack.c.l.b16 %v743
      %v1294 = vunpack.c.h.b16 %v743
      %v1295 = vunpack.c.l.b16 %v744
      %v1296 = vunpack.c.h.b16 %v744
      %v1297 = vunpack.c.l.b16 %v745
      %v1298 = vunpack.c.h.b16 %v745
      %v1299 = vunpack.c.l.b16 %v746
      %v1300 = vunpack.c.h.b16 %v746
      %v1301 = vunpack.c.l.b16 %v747
      %v1302 = vunpack.c.h.b16 %v747
      %v1303 = vunpack.c.l.b16 %v748
      %v1304 = vunpack.c.h.b16 %v748
      %v1305 = vunpack.c.l.b16 %v749
      %v1306 = vunpack.c.h.b16 %v749
      %v1307 = vunpack.c.l.b16 %v750
      %v1308 = vunpack.c.h.b16 %v750
      %v1309 = vunpack.c.l.b16 %v751
      %v1310 = vunpack.c.h.b16 %v751
      %v1311 = vunpack.c.l.b16 %v752
      %v1312 = vunpack.c.h.b16 %v752
      %v1313 = vunpack.c.l.b16 %v753
      %v1314 = vunpack.c.h.b16 %v753
      %v1315 = vunpack.c.l.b16 %v754
      %v1316 = vunpack.c.h.b16 %v754
      %v1317 = vunpack.c.l.b16 %v755
      %v1318 = vunpack.c.h.b16 %v755
      %v1319 = vunpack.c.l.b16 %v756
      %v1320 = vunpack.c.h.b16 %v756
      %v1321 = vunpack.c.l.b16 %v757
      %v1322 = vunpack.c.h.b16 %v757
      %v1323 = vunpack.c.l.b16 %v758
      %v1324 = vunpack.c.h.b16 %v758
      %v1325 = vunpack.c.l.b16 %v759
      %v1326 = vunpack.c.h.b16 %v759
      %v1327 = vunpack.c.l.b16 %v760
      %v1328 = vunpack.c.h.b16 %v760
      %v1329 = vunpack.c.l.b16 %v761
      %v1330 = vunpack.c.h.b16 %v761
      %v1331 = vunpack.c.l.b16 %v762
      %v1332 = vunpack.c.h.b16 %v762
      %v1333 = vunpack.c.l.b16 %v763
      %v1334 = vunpack.c.h.b16 %v763
      %v1335 = vunpack.c.l.b16 %v764
      %v1336 = vunpack.c.h.b16 %v764
      %v1337 = vunpack.c.l.b16 %v765
      %v1338 = vunpack.c.h.b16 %v765
      %v1339 = vunpack.c.l.b16 %v766
      %v1340 = vunpack.c.h.b16 %v766
      %v1341 = vunpack.c.l.b16 %v767
      %v1342 = vunpack.c.h.b16 %v767
      %v1343 = vunpack.c.l.b16 %v768
      %v1344 = vunpack.c.h.b16 %v768
      %v1345 = vunpack.c.l.b16 %v769
      %v1346 = vunpack.c.h.b16 %v769
      %v1347 = vunpack.c.l.b16 %v770
      %v1348 = vunpack.c.h.b16 %v770
      %v1349 = vunpack.c.l.b16 %v771
      %v1350 = vunpack.c.h.b16 %v771
      %v1351 = vunpack.c.l.b16 %v772
      %v1352 = vunpack.c.h.b16 %v772
      %v1353 = vunpack.c.l.b16 %v773
      %v1354 = vunpack.c.h.b16 %v773
      %v1355 = vunpack.c.l.b16 %v774
      %v1356 = vunpack.c.h.b16 %v774
      %v1357 = vunpack.c.l.b16 %v775
      %v1358 = vunpack.c.h.b16 %v775
      %v1359 = vunpack.c.l.b16 %v776
      %v1360 = vunpack.c.h.b16 %v776
      %v1361 = vunpack.c.l.b16 %v777
      %v1362 = vunpack.c.h.b16 %v777
      %v1363 = vunpack.c.l.b16 %v778
      %v1364 = vunpack.c.h.b16 %v778
      %v1365 = vunpack.c.l.b16 %v779
      %v1366 = vunpack.c.h.b16 %v779
      %v1367 = vunpack.c.l.b16 %v780
      %v1368 = vunpack.c.h.b16 %v780
      %v1369 = vunpack.c.l.b16 %v781
      %v1370 = vunpack.c.h.b16 %v781
      %v1371 = vunpack.c.l.b16 %v782
      %v1372 = vunpack.c.h.b16 %v782
      %v1373 = vunpack.c.l.b16 %v783
      %v1374 = vunpack.c.h.b16 %v783
      %v1375 = vunpack.c.l.b16 %v784
      %v1376 = vunpack.c.h.b16 %v784
      %v1377 = vunpack.c.l.b16 %v785
      %v1378 = vunpack.c.h.b16 %v785
      %v1379 = vunpack.c.l.b16 %v786
      %v1380 = vunpack.c.h.b16 %v786
      %v1381 = vunpack.c.l.b16 %v787
      %v1382 = vunpack.c.h.b16 %v787
      %v1383 = vunpack.c.l.b16 %v788
      %v1384 = vunpack.c.h.b16 %v788
      %v1385 = vunpack.c.l.b16 %v789
      %v1386 = vunpack.c.h.b16 %v789
      %v1387 = vunpack.c.l.b16 %v790
      %v1388 = vunpack.c.h.b16 %v790
      %v1389 = vunpack.c.l.b16 %v791
      %v1390 = vunpack.c.h.b16 %v791
      %v1391 = vunpack.c.l.b16 %v792
      %v1392 = vunpack.c.h.b16 %v792
      %v1393 = vunpack.c.l.b16 %v793
      %v1394 = vunpack.c.h.b16 %v793
      %v1395 = vunpack.c.l.b16 %v794
      %v1396 = vunpack.c.h.b16 %v794
      %v1397 = vunpack.c.l.b16 %v795
      %v1398 = vunpack.c.h.b16 %v795
      %v1399 = vunpack.c.l.b16 %v796
      %v1400 = vunpack.c.h.b16 %v796
      %v1401 = vunpack.c.l.b16 %v797
      %v1402 = vunpack.c.h.b16 %v797
      %v1403 = vunpack.c.l.b16 %v798
      %v1404 = vunpack.c.h.b16 %v798
      %v1405 = vunpack.c.l.b16 %v799
      %v1406 = vunpack.c.h.b16 %v799
      %v1407 = vunpack.c.l.b16 %v800
      %v1408 = vunpack.c.h.b16 %v800
      %v1409 = vunpack.c.l.b16 %v801
      %v1410 = vunpack.c.h.b16 %v801
      %v1411 = vunpack.c.l.b16 %v802
      %v1412 = vunpack.c.h.b16 %v802
      %v1413 = vpack.c.b16 %v1025, %v1021
      %v1414 = vpack.c.b16 %v1026, %v1022
      %v1415 = vpack.c.b16 %v1027, %v1023
      %v1416 = vpack.c.b16 %v1028, %v1024
      %v1417 = vpack.c.b16 %v1033, %v1029
      %v1418 = vpack.c.b16 %v1034, %v1030
      %v1419 = vpack.c.b16 %v1035, %v1031
      %v1420 = vpack.c.b16 %v1036, %v1032
      %v1421 = vpack.c.b16 %v1041, %v1037
      %v1422 = vpack.c.b16 %v1042, %v1038
      %v1423 = vpack.c.b16 %v1043, %v1039
      %v1424 = vpack.c.b16 %v1044, %v1040
      %v1425 = vpack.c.b16 %v1049, %v1045
      %v1426 = vpack.c.b16 %v1050, %v1046
      %v1427 = vpack.c.b16 %v1051, %v1047
      %v1428 = vpack.c.b16 %v1052, %v1048
      %v1429 = vpack.c.b16 %v1057, %v1053
      %v1430 = vpack.c.b16 %v1058, %v1054
      %v1431 = vpack.c.b16 %v1059, %v1055
      %v1432 = vpack.c.b16 %v1060, %v1056
      %v1433 = vpack.c.b16 %v1065, %v1061
      %v1434 = vpack.c.b16 %v1066, %v1062
      %v1435 = vpack.c.b16 %v1067, %v1063
      %v1436 = vpack.c.b16 %v1068, %v1064
      %v1437 = vpack.c.b16 %v1073, %v1069
      %v1438 = vpack.c.b16 %v1074, %v1070
      %v1439 = vpack.c.b16 %v1075, %v1071
      %v1440 = vpack.c.b16 %v1076, %v1072
      %v1441 = vpack.c.b16 %v1081, %v1077
      %v1442 = vpack.c.b16 %v1082, %v1078
      %v1443 = vpack.c.b16 %v1083, %v1079
      %v1444 = vpack.c.b16 %v1084, %v1080
      %v1445 = vpack.c.b16 %v1089, %v1085
      %v1446 = vpack.c.b16 %v1090, %v1086
      %v1447 = vpack.c.b16 %v1091, %v1087
      %v1448 = vpack.c.b16 %v1092, %v1088
      %v1449 = vpack.c.b16 %v1097, %v1093
      %v1450 = vpack.c.b16 %v1098, %v1094
      %v1451 = vpack.c.b16 %v1099, %v1095
      %v1452 = vpack.c.b16 %v1100, %v1096
      %v1453 = vpack.c.b16 %v1105, %v1101
      %v1454 = vpack.c.b16 %v1106, %v1102
      %v1455 = vpack.c.b16 %v1107, %v1103
      %v1456 = vpack.c.b16 %v1108, %v1104
      %v1457 = vpack.c.b16 %v1113, %v1109
      %v1458 = vpack.c.b16 %v1114, %v1110
      %v1459 = vpack.c.b16 %v1115, %v1111
      %v1460 = vpack.c.b16 %v1116, %v1112
      %v1461 = vpack.c.b16 %v1121, %v1117
      %v1462 = vpack.c.b16 %v1122, %v1118
      %v1463 = vpack.c.b16 %v1123, %v1119
      %v1464 = vpack.c.b16 %v1124, %v1120
      %v1465 = vpack.c.b16 %v1129, %v1125
      %v1466 = vpack.c.b16 %v1130, %v1126
      %v1467 = vpack.c.b16 %v1131, %v1127
      %v1468 = vpack.c.b16 %v1132, %v1128
      %v1469 = vpack.c.b16 %v1137, %v1133
      %v1470 = vpack.c.b16 %v1138, %v1134
      %v1471 = vpack.c.b16 %v1139, %v1135
      %v1472 = vpack.c.b16 %v1140, %v1136
      %v1473 = vpack.c.b16 %v1145, %v1141
      %v1474 = vpack.c.b16 %v1146, %v1142
      %v1475 = vpack.c.b16 %v1147, %v1143
      %v1476 = vpack.c.b16 %v1148, %v1144
      %v1477 = vpack.c.b16 %v1153, %v1149
      %v1478 = vpack.c.b16 %v1154, %v1150
      %v1479 = vpack.c.b16 %v1155, %v1151
      %v1480 = vpack.c.b16 %v1156, %v1152
      %v1481 = vpack.c.b16 %v1161, %v1157
      %v1482 = vpack.c.b16 %v1162, %v1158
      %v1483 = vpack.c.b16 %v1163, %v1159
      %v1484 = vpack.c.b16 %v1164, %v1160
      %v1485 = vpack.c.b16 %v1169, %v1165
      %v1486 = vpack.c.b16 %v1170, %v1166
      %v1487 = vpack.c.b16 %v1171, %v1167
      %v1488 = vpack.c.b16 %v1172, %v1168
      %v1489 = vpack.c.b16 %v1177, %v1173
      %v1490 = vpack.c.b16 %v1178, %v1174
      %v1491 = vpack.c.b16 %v1179, %v1175
      %v1492 = vpack.c.b16 %v1180, %v1176
      %v1493 = vpack.c.b16 %v1185, %v1181
      %v1494 = vpack.c.b16 %v1186, %v1182
      %v1495 = vpack.c.b16 %v1187, %v1183
      %v1496 = vpack.c.b16 %v1188, %v1184
      %v1497 = vpack.c.b16 %v1193, %v1189
      %v1498 = vpack.c.b16 %v1194, %v1190
      %v1499 = vpack.c.b16 %v1195, %v1191
      %v1500 = vpack.c.b16 %v1196, %v1192
      %v1501 = vpack.c.b16 %v1201, %v1197
      %v1502 = vpack.c.b16 %v1202, %v1198
      %v1503 = vpack.c.b16 %v1203, %v1199
      %v1504 = vpack.c.b16 %v1204, %v1200
      %v1505 = vpack.c.b16 %v1209, %v1205
      %v1506 = vpack.c.b16 %v1210, %v1206
      %v1507 = vpack.c.b16 %v1211, %v1207
      %v1508 = vpack.c.b16 %v1212, %v1208
      %v1509 = vpack.c.b16 %v1217, %v1213
      %v1510 = vpack.c.b16 %v1218, %v1214
      %v1511 = vpack.c.b16 %v1219, %v1215
      %v1512 = vpack.c.b16 %v1220, %v1216
      %v1513 = vpack.c.b16 %v1225, %v1221
      %v1514 = vpack.c.b16 %v1226, %v1222
      %v1515 = vpack.c.b16 %v1227, %v1223
      %v1516 = vpack.c.b16 %v1228, %v1224
      %v1517 = vpack.c.b16 %v1233, %v1229
      %v1518 = vpack.c.b16 %v1234, %v1230
      %v1519 = vpack.c.b16 %v1235, %v1231
      %v1520 = vpack.c.b16 %v1236, %v1232
      %v1521 = vpack.c.b16 %v1241, %v1237
      %v1522 = vpack.c.b16 %v1242, %v1238
      %v1523 = vpack.c.b16 %v1243, %v1239
      %v1524 = vpack.c.b16 %v1244, %v1240
      %v1525 = vpack.c.b16 %v1249, %v1245
      %v1526 = vpack.c.b16 %v1250, %v1246
      %v1527 = vpack.c.b16 %v1251, %v1247
      %v1528 = vpack.c.b16 %v1252, %v1248
      %v1529 = vpack.c.b16 %v1257, %v1253
      %v1530 = vpack.c.b16 %v1258, %v1254
      %v1531 = vpack.c.b16 %v1259, %v1255
      %v1532 = vpack.c.b16 %v1260, %v1256
      %v1533 = vpack.c.b16 %v1265, %v1261
      %v1534 = vpack.c.b16 %v1266, %v1262
      %v1535 = vpack.c.b16 %v1267, %v1263
      %v1536 = vpack.c.b16 %v1268, %v1264
      %v1537 = vpack.c.b16 %v1273, %v1269
      %v1538 = vpack.c.b16 %v1274, %v1270
      %v1539 = vpack.c.b16 %v1275, %v1271
      %v1540 = vpack.c.b16 %v1276, %v1272
      %v1541 = vpack.c.b16 %v1281, %v1277
      %v1542 = vpack.c.b16 %v1282, %v1278
      %v1543 = vpack.c.b16 %v1283, %v1279
      %v1544 = vpack.c.b16 %v1284, %v1280
      %v1545 = vpack.c.b16 %v1289, %v1285
      %v1546 = vpack.c.b16 %v1290, %v1286
      %v1547 = vpack.c.b16 %v1291, %v1287
      %v1548 = vpack.c.b16 %v1292, %v1288
      %v1549 = vpack.c.b16 %v1297, %v1293
      %v1550 = vpack.c.b16 %v1298, %v1294
      %v1551 = vpack.c.b16 %v1299, %v1295
      %v1552 = vpack.c.b16 %v1300, %v1296
      %v1553 = vpack.c.b16 %v1305, %v1301
      %v1554 = vpack.c.b16 %v1306, %v1302
      %v1555 = vpack.c.b16 %v1307, %v1303
      %v1556 = vpack.c.b16 %v1308, %v1304
      %v1557 = vpack.c.b16 %v1313, %v1309
      %v1558 = vpack.c.b16 %v1314, %v1310
      %v1559 = vpack.c.b16 %v1315, %v1311
      %v1560 = vpack.c.b16 %v1316, %v1312
      %v1561 = vpack.c.b16 %v1321, %v1317
      %v1562 = vpack.c.b16 %v1322, %v1318
      %v1563 = vpack.c.b16 %v1323, %v1319
      %v1564 = vpack.c.b16 %v1324, %v1320
      %v1565 = vpack.c.b16 %v1329, %v1325
      %v1566 = vpack.c.b16 %v1330, %v1326
      %v1567 = vpack.c.b16 %v1331, %v1327
      %v1568 = vpack.c.b16 %v1332, %v1328
      %v1569 = vpack.c.b16 %v1337, %v1333
      %v1570 = vpack.c.b16 %v1338, %v1334
      %v1571 = vpack.c.b16 %v1339, %v1335
      %v1572 = vpack.c.b16 %v1340, %v1336
      %v1573 = vpack.c.b16 %v1345, %v1341
      %v1574 = vpack.c.b16 %v1346, %v1342
      %v1575 = vpack.c.b16 %v1347, %v1343
      %v1576 = vpack.c.b16 %v1348, %v1344
      %v1577 = vpack.c.b16 %v1353, %v1349
      %v1578 = vpack.c.b16 %v1354, %v1350
      %v1579 = vpack.c.b16 %v1355, %v1351
      %v1580 = vpack.c.b16 %v1356, %v1352
      %v1581 = vpack.c.b16 %v1361, %v1357
      %v1582 = vpack.c.b16 %v1362, %v1358
      %v1583 = vpack.c.b16 %v1363, %v1359
      %v1584 = vpack.c.b16 %v1364, %v1360
      %v1585 = vpack.c.b16 %v1369, %v1365
      %v1586 = vpack.c.b16 %v1370, %v1366
      %v1587 = vpack.c.b16 %v1371, %v1367
      %v1588 = vpack.c.b16 %v1372, %v1368
      %v1589 = vpack.c.b16 %v1377, %v1373
      %v1590 = vpack.c.b16 %v1378, %v1374
      %v1591 = vpack.c.b16 %v1379, %v1375
      %v1592 = vpack.c.b16 %v1380, %v1376
      %v1593 = vpack.c.b16 %v1385, %v1381
      %v1594 = vpack.c.b16 %v1386, %v1382
      %v1595 = vpack.c.b16 %v1387, %v1383
      %v1596 = vpack.c.b16 %v1388, %v1384
      %v1597 = vpack.c.b16 %v1393, %v1389
      %v1598 = vpack.c.b16 %v1394, %v1390
      %v1599 = vpack.c.b16 %v1395, %v1391
      %v1600 = vpack.c.b16 %v1396, %v1392
      %v1601 = vpack.c.b16 %v1401, %v1397
      %v1602 = vpack.c.b16 %v1402, %v1398
      %v1603 = vpack.c.b16 %v1403, %v1399
      %v1604 = vpack.c.b16 %v1404, %v1400
      %v1605 = vpack.c.b16 %v1409, %v1405
      %v1606 = vpack.c.b16 %v1410, %v1406
      %v1607 = vpack.c.b16 %v1411, %v1407
      %v1608 = vpack.c.b16 %v1412, %v1408
      %vm1805 = vcmask 130048
      %v1807 = vsel %vm1805, %v557, 0
      %v1810 = vsel %vm1805, %v564, 0
      %v1813 = vsel %vm1805, %v571, 0
      %v1816 = vsel %vm1805, %v578, 0
      %v1819 = vsel %vm1805, %v585, 0
      %v1822 = vsel %vm1805, %v592, 0
      %v1825 = vsel %vm1805, %v599, 0
      %v1828 = vsel %vm1805, %v606, 0
      %1830 = vmatprep.subr.bf16.mxu0 %v1414
      %1831 = vmatpush1.bf16.msra.mxu0 %v1413
      %1832 = vmatprep.subr.bf16.mxu0 %v1418
      %1833 = vmatpush1.bf16.msra.mxu0 %v1417
      %1834 = vmatprep.subr.bf16.mxu0 %v1422
      %1835 = vmatpush1.bf16.msra.mxu0 %v1421
      %1836 = vmatprep.subr.bf16.mxu0 %v1426
      %1837 = vmatpush1.bf16.msra.mxu0 %v1425
      %1838 = vmatprep.subr.bf16.mxu0 %v1430
      %1839 = vmatpush1.bf16.msra.mxu0 %v1429
      %1840 = vmatprep.subr.bf16.mxu0 %v1434
      %1841 = vmatpush1.bf16.msra.mxu0 %v1433
      %1842 = vmatprep.subr.bf16.mxu0 %v1438
      %1843 = vmatpush1.bf16.msra.mxu0 %v1437
      %1844 = vmatprep.subr.bf16.mxu0 %v1442
      %1845 = vmatpush1.bf16.msra.mxu0 %v1441
      %1846 = vmatprep.subr.bf16.mxu0 %v1446
      %1847 = vmatpush1.bf16.msra.mxu0 %v1445
      %1848 = vmatprep.subr.bf16.mxu0 %v1450
      %1849 = vmatpush1.bf16.msra.mxu0 %v1449
      %1850 = vmatprep.subr.bf16.mxu0 %v1454
      %1851 = vmatpush1.bf16.msra.mxu0 %v1453
      %1852 = vmatprep.subr.bf16.mxu0 %v1458
      %1853 = vmatpush1.bf16.msra.mxu0 %v1457
      %1854 = vmatprep.subr.bf16.mxu0 %v1462
      %1855 = vmatpush1.bf16.msra.mxu0 %v1461
      %1856 = vmatprep.subr.bf16.mxu0 %v1466
      %1857 = vmatpush1.bf16.msra.mxu0 %v1465
      %1858 = vmatprep.subr.bf16.mxu0 %v1470
      %1859 = vmatpush1.bf16.msra.mxu0 %v1469
      %1860 = vmatprep.subr.bf16.mxu0 %v1474
      %1861 = vmatpush1.bf16.msra.mxu0 %v1473
      %1862 = vmatprep.mubr.bf16.mxu0 %v552
      %1863 = vmatmul.mubr.bf16.gmra.mrb[0].mxu0 %v551
      %v1864 = vpop.f32.mrb[0].mxu0
      %v1865 = vadd.f32 %v808, %v1864
      %v1866 = vpop.f32.mrb[0].mxu0
      %v1867 = vadd.f32 %v812, %v1866
      %v1868 = vpop.f32.mrb[0].mxu0
      %v1869 = vadd.f32 %v808, %v1868
      %v1870 = vpop.f32.mrb[0].mxu0
      %v1871 = vadd.f32 %v812, %v1870
      %1872 = vmatprep.mubr.bf16.mxu0 %v559
      %1873 = vmatmul.mubr.bf16.gmra.mrb[0].mxu0 %v558
      %v1874 = vpop.f32.mrb[0].mxu0
      %v1875 = vadd.f32 %v808, %v1874
      %v1876 = vpop.f32.mrb[0].mxu0
      %v1877 = vadd.f32 %v812, %v1876
      %v1878 = vpop.f32.mrb[0].mxu0
      %v1879 = vadd.f32 %v808, %v1878
      %v1880 = vpop.f32.mrb[0].mxu0
      %v1881 = vadd.f32 %v812, %v1880
      %1882 = vmatprep.mubr.bf16.mxu0 %v566
      %1883 = vmatmul.mubr.bf16.gmra.mrb[0].mxu0 %v565
      %v1884 = vpop.f32.mrb[0].mxu0
      %v1885 = vadd.f32 %v808, %v1884
      %v1886 = vpop.f32.mrb[0].mxu0
      %v1887 = vadd.f32 %v812, %v1886
      %v1888 = vpop.f32.mrb[0].mxu0
      %v1889 = vadd.f32 %v808, %v1888
      %v1890 = vpop.f32.mrb[0].mxu0
      %v1891 = vadd.f32 %v812, %v1890
      %1892 = vmatprep.mubr.bf16.mxu0 %v573
      %1893 = vmatmul.mubr.bf16.gmra.mrb[0].mxu0 %v572
      %v1894 = vpop.f32.mrb[0].mxu0
      %v1895 = vadd.f32 %v808, %v1894
      %v1896 = vpop.f32.mrb[0].mxu0
      %v1897 = vadd.f32 %v812, %v1896
      %v1898 = vpop.f32.mrb[0].mxu0
      %v1899 = vadd.f32 %v808, %v1898
      %v1900 = vpop.f32.mrb[0].mxu0
      %v1901 = vadd.f32 %v812, %v1900
      %1902 = vmatprep.mubr.bf16.mxu0 %v580
      %1903 = vmatmul.mubr.bf16.gmra.mrb[0].mxu0 %v579
      %v1904 = vpop.f32.mrb[0].mxu0
      %v1905 = vadd.f32 %v808, %v1904
      %v1906 = vpop.f32.mrb[0].mxu0
      %v1907 = vadd.f32 %v812, %v1906
      %v1908 = vpop.f32.mrb[0].mxu0
      %v1909 = vadd.f32 %v808, %v1908
      %v1910 = vpop.f32.mrb[0].mxu0
      %v1911 = vadd.f32 %v812, %v1910
      %1912 = vmatprep.mubr.bf16.mxu0 %v587
      %1913 = vmatmul.mubr.bf16.gmra.mrb[0].mxu0 %v586
      %v1914 = vpop.f32.mrb[0].mxu0
      %v1915 = vadd.f32 %v808, %v1914
      %v1916 = vpop.f32.mrb[0].mxu0
      %v1917 = vadd.f32 %v812, %v1916
      %v1918 = vpop.f32.mrb[0].mxu0
      %v1919 = vadd.f32 %v808, %v1918
      %v1920 = vpop.f32.mrb[0].mxu0
      %v1921 = vadd.f32 %v812, %v1920
      %1922 = vmatprep.mubr.bf16.mxu0 %v594
      %1923 = vmatmul.mubr.bf16.gmra.mrb[0].mxu0 %v593
      %v1924 = vpop.f32.mrb[0].mxu0
      %v1925 = vadd.f32 %v808, %v1924
      %v1926 = vpop.f32.mrb[0].mxu0
      %v1927 = vadd.f32 %v812, %v1926
      %v1928 = vpop.f32.mrb[0].mxu0
      %v1929 = vadd.f32 %v808, %v1928
      %v1930 = vpop.f32.mrb[0].mxu0
      %v1931 = vadd.f32 %v812, %v1930
      %1932 = vmatprep.mubr.bf16.mxu0 %v601
      %1933 = vmatmul.mubr.bf16.gmra.mrb[0].mxu0 %v600
      %v1934 = vpop.f32.mrb[0].mxu0
      %v1935 = vadd.f32 %v808, %v1934
      %v1936 = vpop.f32.mrb[0].mxu0
      %v1937 = vadd.f32 %v812, %v1936
      %v1938 = vpop.f32.mrb[0].mxu0
      %v1939 = vadd.f32 %v808, %v1938
      %v1940 = vpop.f32.mrb[0].mxu0
      %v1941 = vadd.f32 %v812, %v1940
      %1942 = vdwg.mxu0
      %1943 = vmatprep.subr.bf16.mxu0 %v1478
      %1944 = vmatpush1.bf16.msra.mxu0 %v1477
      %1945 = vmatprep.subr.bf16.mxu0 %v1482
      %1946 = vmatpush1.bf16.msra.mxu0 %v1481
      %1947 = vmatprep.subr.bf16.mxu0 %v1486
      %1948 = vmatpush1.bf16.msra.mxu0 %v1485
      %1949 = vmatprep.subr.bf16.mxu0 %v1490
      %1950 = vmatpush1.bf16.msra.mxu0 %v1489
      %1951 = vmatprep.subr.bf16.mxu0 %v1494
      %1952 = vmatpush1.bf16.msra.mxu0 %v1493
      %1953 = vmatprep.subr.bf16.mxu0 %v1498
      %1954 = vmatpush1.bf16.msra.mxu0 %v1497
      %1955 = vmatprep.subr.bf16.mxu0 %v1502
      %1956 = vmatpush1.bf16.msra.mxu0 %v1501
      %1957 = vmatprep.subr.bf16.mxu0 %v1506
      %1958 = vmatpush1.bf16.msra.mxu0 %v1505
      %1959 = vmatprep.subr.bf16.mxu0 %v1510
      %1960 = vmatpush1.bf16.msra.mxu0 %v1509
      %1961 = vmatprep.subr.bf16.mxu0 %v1514
      %1962 = vmatpush1.bf16.msra.mxu0 %v1513
      %1963 = vmatprep.subr.bf16.mxu0 %v1518
      %1964 = vmatpush1.bf16.msra.mxu0 %v1517
      %1965 = vmatprep.subr.bf16.mxu0 %v1522
      %1966 = vmatpush1.bf16.msra.mxu0 %v1521
      %1967 = vmatprep.subr.bf16.mxu0 %v1526
      %1968 = vmatpush1.bf16.msra.mxu0 %v1525
      %1969 = vmatprep.subr.bf16.mxu0 %v1530
      %1970 = vmatpush1.bf16.msra.mxu0 %v1529
      %1971 = vmatprep.subr.bf16.mxu0 %v1534
      %1972 = vmatpush1.bf16.msra.mxu0 %v1533
      %1973 = vmatprep.subr.bf16.mxu0 %v1538
      %1974 = vmatpush1.bf16.msra.mxu0 %v1537
      %1975 = vmatprep.mubr.bf16.mxu0 %v554
      %1976 = vmatmul.mubr.bf16.gmra.mrb[0].mxu0 %v553
      %v1977 = vpop.f32.mrb[0].mxu0
      %v1978 = vadd.f32 %v1865, %v1977
      %v1979 = vpop.f32.mrb[0].mxu0
      %v1980 = vadd.f32 %v1867, %v1979
      %v1981 = vpop.f32.mrb[0].mxu0
      %v1982 = vadd.f32 %v1869, %v1981
      %v1983 = vpop.f32.mrb[0].mxu0
      %v1984 = vadd.f32 %v1871, %v1983
      %1985 = vmatprep.mubr.bf16.mxu0 %v561
      %1986 = vmatmul.mubr.bf16.gmra.mrb[0].mxu0 %v560
      %v1987 = vpop.f32.mrb[0].mxu0
      %v1988 = vadd.f32 %v1875, %v1987
      %v1989 = vpop.f32.mrb[0].mxu0
      %v1990 = vadd.f32 %v1877, %v1989
      %v1991 = vpop.f32.mrb[0].mxu0
      %v1992 = vadd.f32 %v1879, %v1991
      %v1993 = vpop.f32.mrb[0].mxu0
      %v1994 = vadd.f32 %v1881, %v1993
      %1995 = vmatprep.mubr.bf16.mxu0 %v568
      %1996 = vmatmul.mubr.bf16.gmra.mrb[0].mxu0 %v567
      %v1997 = vpop.f32.mrb[0].mxu0
      %v1998 = vadd.f32 %v1885, %v1997
      %v1999 = vpop.f32.mrb[0].mxu0
      %v2000 = vadd.f32 %v1887, %v1999
      %v2001 = vpop.f32.mrb[0].mxu0
      %v2002 = vadd.f32 %v1889, %v2001
      %v2003 = vpop.f32.mrb[0].mxu0
      %v2004 = vadd.f32 %v1891, %v2003
      %2005 = vmatprep.mubr.bf16.mxu0 %v575
      %2006 = vmatmul.mubr.bf16.gmra.mrb[0].mxu0 %v574
      %v2007 = vpop.f32.mrb[0].mxu0
      %v2008 = vadd.f32 %v1895, %v2007
      %v2009 = vpop.f32.mrb[0].mxu0
      %v2010 = vadd.f32 %v1897, %v2009
      %v2011 = vpop.f32.mrb[0].mxu0
      %v2012 = vadd.f32 %v1899, %v2011
      %v2013 = vpop.f32.mrb[0].mxu0
      %v2014 = vadd.f32 %v1901, %v2013
      %2015 = vmatprep.mubr.bf16.mxu0 %v582
      %2016 = vmatmul.mubr.bf16.gmra.mrb[0].mxu0 %v581
      %v2017 = vpop.f32.mrb[0].mxu0
      %v2018 = vadd.f32 %v1905, %v2017
      %v2019 = vpop.f32.mrb[0].mxu0
      %v2020 = vadd.f32 %v1907, %v2019
      %v2021 = vpop.f32.mrb[0].mxu0
      %v2022 = vadd.f32 %v1909, %v2021
      %v2023 = vpop.f32.mrb[0].mxu0
      %v2024 = vadd.f32 %v1911, %v2023
      %2025 = vmatprep.mubr.bf16.mxu0 %v589
      %2026 = vmatmul.mubr.bf16.gmra.mrb[0].mxu0 %v588
      %v2027 = vpop.f32.mrb[0].mxu0
      %v2028 = vadd.f32 %v1915, %v2027
      %v2029 = vpop.f32.mrb[0].mxu0
      %v2030 = vadd.f32 %v1917, %v2029
      %v2031 = vpop.f32.mrb[0].mxu0
      %v2032 = vadd.f32 %v1919, %v2031
      %v2033 = vpop.f32.mrb[0].mxu0
      %v2034 = vadd.f32 %v1921, %v2033
      %2035 = vmatprep.mubr.bf16.mxu0 %v596
      %2036 = vmatmul.mubr.bf16.gmra.mrb[0].mxu0 %v595
      %v2037 = vpop.f32.mrb[0].mxu0
      %v2038 = vadd.f32 %v1925, %v2037
      %v2039 = vpop.f32.mrb[0].mxu0
      %v2040 = vadd.f32 %v1927, %v2039
      %v2041 = vpop.f32.mrb[0].mxu0
      %v2042 = vadd.f32 %v1929, %v2041
      %v2043 = vpop.f32.mrb[0].mxu0
      %v2044 = vadd.f32 %v1931, %v2043
      %2045 = vmatprep.mubr.bf16.mxu0 %v603
      %2046 = vmatmul.mubr.bf16.gmra.mrb[0].mxu0 %v602
      %v2047 = vpop.f32.mrb[0].mxu0
      %v2048 = vadd.f32 %v1935, %v2047
      %v2049 = vpop.f32.mrb[0].mxu0
      %v2050 = vadd.f32 %v1937, %v2049
      %v2051 = vpop.f32.mrb[0].mxu0
      %v2052 = vadd.f32 %v1939, %v2051
      %v2053 = vpop.f32.mrb[0].mxu0
      %v2054 = vadd.f32 %v1941, %v2053
      %2055 = vdwg.mxu0
      %2056 = vmatprep.subr.bf16.mxu0 %v1542
      %2057 = vmatpush1.bf16.msra.mxu0 %v1541
      %2058 = vmatprep.subr.bf16.mxu0 %v1546
      %2059 = vmatpush1.bf16.msra.mxu0 %v1545
      %2060 = vmatprep.subr.bf16.mxu0 %v1550
      %2061 = vmatpush1.bf16.msra.mxu0 %v1549
      %2062 = vmatprep.subr.bf16.mxu0 %v1554
      %2063 = vmatpush1.bf16.msra.mxu0 %v1553
      %2064 = vmatprep.subr.bf16.mxu0 %v1558
      %2065 = vmatpush1.bf16.msra.mxu0 %v1557
      %2066 = vmatprep.subr.bf16.mxu0 %v1562
      %2067 = vmatpush1.bf16.msra.mxu0 %v1561
      %2068 = vmatprep.subr.bf16.mxu0 %v1566
      %2069 = vmatpush1.bf16.msra.mxu0 %v1565
      %2070 = vmatprep.subr.bf16.mxu0 %v1570
      %2071 = vmatpush1.bf16.msra.mxu0 %v1569
      %2072 = vmatprep.subr.bf16.mxu0 %v1574
      %2073 = vmatpush1.bf16.msra.mxu0 %v1573
      %2074 = vmatprep.subr.bf16.mxu0 %v1578
      %2075 = vmatpush1.bf16.msra.mxu0 %v1577
      %2076 = vmatprep.subr.bf16.mxu0 %v1582
      %2077 = vmatpush1.bf16.msra.mxu0 %v1581
      %2078 = vmatprep.subr.bf16.mxu0 %v1586
      %2079 = vmatpush1.bf16.msra.mxu0 %v1585
      %2080 = vmatprep.subr.bf16.mxu0 %v1590
      %2081 = vmatpush1.bf16.msra.mxu0 %v1589
      %2082 = vmatprep.subr.bf16.mxu0 %v1594
      %2083 = vmatpush1.bf16.msra.mxu0 %v1593
      %2084 = vmatprep.subr.bf16.mxu0 %v1598
      %2085 = vmatpush1.bf16.msra.mxu0 %v1597
      %2086 = vmatprep.subr.bf16.mxu0 %v1602
      %2087 = vmatpush1.bf16.msra.mxu0 %v1601
      %2088 = vmatprep.mubr.bf16.mxu0 %v556
      %2089 = vmatmul.mubr.bf16.gmra.mrb[0].mxu0 %v555
      %v2090 = vpop.f32.mrb[0].mxu0
      %v2091 = vadd.f32 %v1978, %v2090
      %v2092 = vpop.f32.mrb[0].mxu0
      %v2093 = vadd.f32 %v1980, %v2092
      %v2094 = vpop.f32.mrb[0].mxu0
      %v2095 = vadd.f32 %v1982, %v2094
      %v2096 = vpop.f32.mrb[0].mxu0
      %v2097 = vadd.f32 %v1984, %v2096
      %2098 = vmatprep.mubr.bf16.mxu0 %v563
      %2099 = vmatmul.mubr.bf16.gmra.mrb[0].mxu0 %v562
      %v2100 = vpop.f32.mrb[0].mxu0
      %v2101 = vadd.f32 %v1988, %v2100
      %v2102 = vpop.f32.mrb[0].mxu0
      %v2103 = vadd.f32 %v1990, %v2102
      %v2104 = vpop.f32.mrb[0].mxu0
      %v2105 = vadd.f32 %v1992, %v2104
      %v2106 = vpop.f32.mrb[0].mxu0
      %v2107 = vadd.f32 %v1994, %v2106
      %2108 = vmatprep.mubr.bf16.mxu0 %v570
      %2109 = vmatmul.mubr.bf16.gmra.mrb[0].mxu0 %v569
      %v2110 = vpop.f32.mrb[0].mxu0
      %v2111 = vadd.f32 %v1998, %v2110
      %v2112 = vpop.f32.mrb[0].mxu0
      %v2113 = vadd.f32 %v2000, %v2112
      %v2114 = vpop.f32.mrb[0].mxu0
      %v2115 = vadd.f32 %v2002, %v2114
      %v2116 = vpop.f32.mrb[0].mxu0
      %v2117 = vadd.f32 %v2004, %v2116
      %2118 = vmatprep.mubr.bf16.mxu0 %v577
      %2119 = vmatmul.mubr.bf16.gmra.mrb[0].mxu0 %v576
      %v2120 = vpop.f32.mrb[0].mxu0
      %v2121 = vadd.f32 %v2008, %v2120
      %v2122 = vpop.f32.mrb[0].mxu0
      %v2123 = vadd.f32 %v2010, %v2122
      %v2124 = vpop.f32.mrb[0].mxu0
      %v2125 = vadd.f32 %v2012, %v2124
      %v2126 = vpop.f32.mrb[0].mxu0
      %v2127 = vadd.f32 %v2014, %v2126
      %2128 = vmatprep.mubr.bf16.mxu0 %v584
      %2129 = vmatmul.mubr.bf16.gmra.mrb[0].mxu0 %v583
      %v2130 = vpop.f32.mrb[0].mxu0
      %v2131 = vadd.f32 %v2018, %v2130
      %v2132 = vpop.f32.mrb[0].mxu0
      %v2133 = vadd.f32 %v2020, %v2132
      %v2134 = vpop.f32.mrb[0].mxu0
      %v2135 = vadd.f32 %v2022, %v2134
      %v2136 = vpop.f32.mrb[0].mxu0
      %v2137 = vadd.f32 %v2024, %v2136
      %2138 = vmatprep.mubr.bf16.mxu0 %v591
      %2139 = vmatmul.mubr.bf16.gmra.mrb[0].mxu0 %v590
      %v2140 = vpop.f32.mrb[0].mxu0
      %v2141 = vadd.f32 %v2028, %v2140
      %v2142 = vpop.f32.mrb[0].mxu0
      %v2143 = vadd.f32 %v2030, %v2142
      %v2144 = vpop.f32.mrb[0].mxu0
      %v2145 = vadd.f32 %v2032, %v2144
      %v2146 = vpop.f32.mrb[0].mxu0
      %v2147 = vadd.f32 %v2034, %v2146
      %2148 = vmatprep.mubr.bf16.mxu0 %v598
      %2149 = vmatmul.mubr.bf16.gmra.mrb[0].mxu0 %v597
      %v2150 = vpop.f32.mrb[0].mxu0
      %v2151 = vadd.f32 %v2038, %v2150
      %v2152 = vpop.f32.mrb[0].mxu0
      %v2153 = vadd.f32 %v2040, %v2152
      %v2154 = vpop.f32.mrb[0].mxu0
      %v2155 = vadd.f32 %v2042, %v2154
      %v2156 = vpop.f32.mrb[0].mxu0
      %v2157 = vadd.f32 %v2044, %v2156
      %2158 = vmatprep.mubr.bf16.mxu0 %v605
      %2159 = vmatmul.mubr.bf16.gmra.mrb[0].mxu0 %v604
      %v2160 = vpop.f32.mrb[0].mxu0
      %v2161 = vadd.f32 %v2048, %v2160
      %v2162 = vpop.f32.mrb[0].mxu0
      %v2163 = vadd.f32 %v2050, %v2162
      %v2164 = vpop.f32.mrb[0].mxu0
      %v2165 = vadd.f32 %v2052, %v2164
      %v2166 = vpop.f32.mrb[0].mxu0
      %v2167 = vadd.f32 %v2054, %v2166
      %2168 = vdwg.mxu0
      %2169 = vmatprep.subr.bf16.mxu0 %v1606
      %2170 = vmatpush1.bf16.msra.mxu0 %v1605
      %2171 = vmatprep.subr.bf16.mxu0 0
      %2172 = vmatpush1.bf16.msra.mxu0 0
      %2173 = vmatprep.subr.bf16.mxu0 0
      %2174 = vmatpush1.bf16.msra.mxu0 0
      %2175 = vmatprep.subr.bf16.mxu0 0
      %2176 = vmatpush1.bf16.msra.mxu0 0
      %2177 = vmatprep.subr.bf16.mxu0 0
      %2178 = vmatpush1.bf16.msra.mxu0 0
      %2179 = vmatprep.subr.bf16.mxu0 0
      %2180 = vmatpush1.bf16.msra.mxu0 0
      %2181 = vmatprep.subr.bf16.mxu0 0
      %2182 = vmatpush1.bf16.msra.mxu0 0
      %2183 = vmatprep.subr.bf16.mxu0 0
      %2184 = vmatpush1.bf16.msra.mxu0 0
      %2185 = vmatprep.subr.bf16.mxu0 0
      %2186 = vmatpush1.bf16.msra.mxu0 0
      %2187 = vmatprep.subr.bf16.mxu0 0
      %2188 = vmatpush1.bf16.msra.mxu0 0
      %2189 = vmatprep.subr.bf16.mxu0 0
      %2190 = vmatpush1.bf16.msra.mxu0 0
      %2191 = vmatprep.subr.bf16.mxu0 0
      %2192 = vmatpush1.bf16.msra.mxu0 0
      %2193 = vmatprep.subr.bf16.mxu0 0
      %2194 = vmatpush1.bf16.msra.mxu0 0
      %2195 = vmatprep.subr.bf16.mxu0 0
      %2196 = vmatpush1.bf16.msra.mxu0 0
      %2197 = vmatprep.subr.bf16.mxu0 0
      %2198 = vmatpush1.bf16.msra.mxu0 0
      %2199 = vmatprep.subr.bf16.mxu0 0
      %2200 = vmatpush1.bf16.msra.mxu0 0
      %2201 = vmatprep.mubr.bf16.mxu0 0
      %2202 = vmatmul.mubr.bf16.gmra.mrb[0].mxu0 %v1807
      %v2203 = vpop.f32.mrb[0].mxu0
      %v2204 = vadd.f32 %v2091, %v2203
      %v2205 = vpop.f32.mrb[0].mxu0
      %v2206 = vadd.f32 %v2093, %v2205
      %v2207 = vpop.f32.mrb[0].mxu0
      %v2208 = vadd.f32 %v2095, %v2207
      %v2209 = vpop.f32.mrb[0].mxu0
      %v2210 = vadd.f32 %v2097, %v2209
      %2211 = vmatprep.mubr.bf16.mxu0 0
      %2212 = vmatmul.mubr.bf16.gmra.mrb[0].mxu0 %v1810
      %v2213 = vpop.f32.mrb[0].mxu0
      %v2214 = vadd.f32 %v2101, %v2213
      %v2215 = vpop.f32.mrb[0].mxu0
      %v2216 = vadd.f32 %v2103, %v2215
      %v2217 = vpop.f32.mrb[0].mxu0
      %v2218 = vadd.f32 %v2105, %v2217
      %v2219 = vpop.f32.mrb[0].mxu0
      %v2220 = vadd.f32 %v2107, %v2219
      %2221 = vmatprep.mubr.bf16.mxu0 0
      %2222 = vmatmul.mubr.bf16.gmra.mrb[0].mxu0 %v1813
      %v2223 = vpop.f32.mrb[0].mxu0
      %v2224 = vadd.f32 %v2111, %v2223
      %v2225 = vpop.f32.mrb[0].mxu0
      %v2226 = vadd.f32 %v2113, %v2225
      %v2227 = vpop.f32.mrb[0].mxu0
      %v2228 = vadd.f32 %v2115, %v2227
      %v2229 = vpop.f32.mrb[0].mxu0
      %v2230 = vadd.f32 %v2117, %v2229
      %2231 = vmatprep.mubr.bf16.mxu0 0
      %2232 = vmatmul.mubr.bf16.gmra.mrb[0].mxu0 %v1816
      %v2233 = vpop.f32.mrb[0].mxu0
      %v2234 = vadd.f32 %v2121, %v2233
      %v2235 = vpop.f32.mrb[0].mxu0
      %v2236 = vadd.f32 %v2123, %v2235
      %v2237 = vpop.f32.mrb[0].mxu0
      %v2238 = vadd.f32 %v2125, %v2237
      %v2239 = vpop.f32.mrb[0].mxu0
      %v2240 = vadd.f32 %v2127, %v2239
      %2241 = vmatprep.mubr.bf16.mxu0 0
      %2242 = vmatmul.mubr.bf16.gmra.mrb[0].mxu0 %v1819
      %v2243 = vpop.f32.mrb[0].mxu0
      %v2244 = vadd.f32 %v2131, %v2243
      %v2245 = vpop.f32.mrb[0].mxu0
      %v2246 = vadd.f32 %v2133, %v2245
      %v2247 = vpop.f32.mrb[0].mxu0
      %v2248 = vadd.f32 %v2135, %v2247
      %v2249 = vpop.f32.mrb[0].mxu0
      %v2250 = vadd.f32 %v2137, %v2249
      %2251 = vmatprep.mubr.bf16.mxu0 0
      %2252 = vmatmul.mubr.bf16.gmra.mrb[0].mxu0 %v1822
      %v2253 = vpop.f32.mrb[0].mxu0
      %v2254 = vadd.f32 %v2141, %v2253
      %v2255 = vpop.f32.mrb[0].mxu0
      %v2256 = vadd.f32 %v2143, %v2255
      %v2257 = vpop.f32.mrb[0].mxu0
      %v2258 = vadd.f32 %v2145, %v2257
      %v2259 = vpop.f32.mrb[0].mxu0
      %v2260 = vadd.f32 %v2147, %v2259
      %2261 = vmatprep.mubr.bf16.mxu0 0
      %2262 = vmatmul.mubr.bf16.gmra.mrb[0].mxu0 %v1825
      %v2263 = vpop.f32.mrb[0].mxu0
      %v2264 = vadd.f32 %v2151, %v2263
      %v2265 = vpop.f32.mrb[0].mxu0
      %v2266 = vadd.f32 %v2153, %v2265
      %v2267 = vpop.f32.mrb[0].mxu0
      %v2268 = vadd.f32 %v2155, %v2267
      %v2269 = vpop.f32.mrb[0].mxu0
      %v2270 = vadd.f32 %v2157, %v2269
      %2271 = vmatprep.mubr.bf16.mxu0 0
      %2272 = vmatmul.mubr.bf16.gmra.mrb[0].mxu0 %v1828
      %v2273 = vpop.f32.mrb[0].mxu0
      %v2274 = vadd.f32 %v2161, %v2273
      %v2275 = vpop.f32.mrb[0].mxu0
      %v2276 = vadd.f32 %v2163, %v2275
      %v2277 = vpop.f32.mrb[0].mxu0
      %v2278 = vadd.f32 %v2165, %v2277
      %v2279 = vpop.f32.mrb[0].mxu0
      %v2280 = vadd.f32 %v2167, %v2279
      %2281 = vdwg.mxu0
      %2282 = vmatprep.subr.bf16.mxu0 %v1416
      %2283 = vmatpush1.bf16.msra.mxu0 %v1415
      %2284 = vmatprep.subr.bf16.mxu0 %v1420
      %2285 = vmatpush1.bf16.msra.mxu0 %v1419
      %2286 = vmatprep.subr.bf16.mxu0 %v1424
      %2287 = vmatpush1.bf16.msra.mxu0 %v1423
      %2288 = vmatprep.subr.bf16.mxu0 %v1428
      %2289 = vmatpush1.bf16.msra.mxu0 %v1427
      %2290 = vmatprep.subr.bf16.mxu0 %v1432
      %2291 = vmatpush1.bf16.msra.mxu0 %v1431
      %2292 = vmatprep.subr.bf16.mxu0 %v1436
      %2293 = vmatpush1.bf16.msra.mxu0 %v1435
      %2294 = vmatprep.subr.bf16.mxu0 %v1440
      %2295 = vmatpush1.bf16.msra.mxu0 %v1439
      %2296 = vmatprep.subr.bf16.mxu0 %v1444
      %2297 = vmatpush1.bf16.msra.mxu0 %v1443
      %2298 = vmatprep.subr.bf16.mxu0 %v1448
      %2299 = vmatpush1.bf16.msra.mxu0 %v1447
      %2300 = vmatprep.subr.bf16.mxu0 %v1452
      %2301 = vmatpush1.bf16.msra.mxu0 %v1451
      %2302 = vmatprep.subr.bf16.mxu0 %v1456
      %2303 = vmatpush1.bf16.msra.mxu0 %v1455
      %2304 = vmatprep.subr.bf16.mxu0 %v1460
      %2305 = vmatpush1.bf16.msra.mxu0 %v1459
      %2306 = vmatprep.subr.bf16.mxu0 %v1464
      %2307 = vmatpush1.bf16.msra.mxu0 %v1463
      %2308 = vmatprep.subr.bf16.mxu0 %v1468
      %2309 = vmatpush1.bf16.msra.mxu0 %v1467
      %2310 = vmatprep.subr.bf16.mxu0 %v1472
      %2311 = vmatpush1.bf16.msra.mxu0 %v1471
      %2312 = vmatprep.subr.bf16.mxu0 %v1476
      %2313 = vmatpush1.bf16.msra.mxu0 %v1475
      %2314 = vmatprep.mubr.bf16.mxu0 %v552
      %2315 = vmatmul.mubr.bf16.gmra.mrb[0].mxu0 %v551
      %v2316 = vpop.f32.mrb[0].mxu0
      %v2317 = vadd.f32 %v816, %v2316
      %v2318 = vpop.f32.mrb[0].mxu0
      %v2319 = vadd.f32 %v820, %v2318
      %v2320 = vpop.f32.mrb[0].mxu0
      %v2321 = vadd.f32 %v816, %v2320
      %v2322 = vpop.f32.mrb[0].mxu0
      %v2323 = vadd.f32 %v820, %v2322
      %2324 = vmatprep.mubr.bf16.mxu0 %v559
      %2325 = vmatmul.mubr.bf16.gmra.mrb[0].mxu0 %v558
      %v2326 = vpop.f32.mrb[0].mxu0
      %v2327 = vadd.f32 %v816, %v2326
      %v2328 = vpop.f32.mrb[0].mxu0
      %v2329 = vadd.f32 %v820, %v2328
      %v2330 = vpop.f32.mrb[0].mxu0
      %v2331 = vadd.f32 %v816, %v2330
      %v2332 = vpop.f32.mrb[0].mxu0
      %v2333 = vadd.f32 %v820, %v2332
      %2334 = vmatprep.mubr.bf16.mxu0 %v566
      %2335 = vmatmul.mubr.bf16.gmra.mrb[0].mxu0 %v565
      %v2336 = vpop.f32.mrb[0].mxu0
      %v2337 = vadd.f32 %v816, %v2336
      %v2338 = vpop.f32.mrb[0].mxu0
      %v2339 = vadd.f32 %v820, %v2338
      %v2340 = vpop.f32.mrb[0].mxu0
      %v2341 = vadd.f32 %v816, %v2340
      %v2342 = vpop.f32.mrb[0].mxu0
      %v2343 = vadd.f32 %v820, %v2342
      %2344 = vmatprep.mubr.bf16.mxu0 %v573
      %2345 = vmatmul.mubr.bf16.gmra.mrb[0].mxu0 %v572
      %v2346 = vpop.f32.mrb[0].mxu0
      %v2347 = vadd.f32 %v816, %v2346
      %v2348 = vpop.f32.mrb[0].mxu0
      %v2349 = vadd.f32 %v820, %v2348
      %v2350 = vpop.f32.mrb[0].mxu0
      %v2351 = vadd.f32 %v816, %v2350
      %v2352 = vpop.f32.mrb[0].mxu0
      %v2353 = vadd.f32 %v820, %v2352
      %2354 = vmatprep.mubr.bf16.mxu0 %v580
      %2355 = vmatmul.mubr.bf16.gmra.mrb[0].mxu0 %v579
      %v2356 = vpop.f32.mrb[0].mxu0
      %v2357 = vadd.f32 %v816, %v2356
      %v2358 = vpop.f32.mrb[0].mxu0
      %v2359 = vadd.f32 %v820, %v2358
      %v2360 = vpop.f32.mrb[0].mxu0
      %v2361 = vadd.f32 %v816, %v2360
      %v2362 = vpop.f32.mrb[0].mxu0
      %v2363 = vadd.f32 %v820, %v2362
      %2364 = vmatprep.mubr.bf16.mxu0 %v587
      %2365 = vmatmul.mubr.bf16.gmra.mrb[0].mxu0 %v586
      %v2366 = vpop.f32.mrb[0].mxu0
      %v2367 = vadd.f32 %v816, %v2366
      %v2368 = vpop.f32.mrb[0].mxu0
      %v2369 = vadd.f32 %v820, %v2368
      %v2370 = vpop.f32.mrb[0].mxu0
      %v2371 = vadd.f32 %v816, %v2370
      %v2372 = vpop.f32.mrb[0].mxu0
      %v2373 = vadd.f32 %v820, %v2372
      %2374 = vmatprep.mubr.bf16.mxu0 %v594
      %2375 = vmatmul.mubr.bf16.gmra.mrb[0].mxu0 %v593
      %v2376 = vpop.f32.mrb[0].mxu0
      %v2377 = vadd.f32 %v816, %v2376
      %v2378 = vpop.f32.mrb[0].mxu0
      %v2379 = vadd.f32 %v820, %v2378
      %v2380 = vpop.f32.mrb[0].mxu0
      %v2381 = vadd.f32 %v816, %v2380
      %v2382 = vpop.f32.mrb[0].mxu0
      %v2383 = vadd.f32 %v820, %v2382
      %2384 = vmatprep.mubr.bf16.mxu0 %v601
      %2385 = vmatmul.mubr.bf16.gmra.mrb[0].mxu0 %v600
      %v2386 = vpop.f32.mrb[0].mxu0
      %v2387 = vadd.f32 %v816, %v2386
      %v2388 = vpop.f32.mrb[0].mxu0
      %v2389 = vadd.f32 %v820, %v2388
      %v2390 = vpop.f32.mrb[0].mxu0
      %v2391 = vadd.f32 %v816, %v2390
      %v2392 = vpop.f32.mrb[0].mxu0
      %v2393 = vadd.f32 %v820, %v2392
      %2394 = vdwg.mxu0
      %2395 = vmatprep.subr.bf16.mxu0 %v1480
      %2396 = vmatpush1.bf16.msra.mxu0 %v1479
      %2397 = vmatprep.subr.bf16.mxu0 %v1484
      %2398 = vmatpush1.bf16.msra.mxu0 %v1483
      %2399 = vmatprep.subr.bf16.mxu0 %v1488
      %2400 = vmatpush1.bf16.msra.mxu0 %v1487
      %2401 = vmatprep.subr.bf16.mxu0 %v1492
      %2402 = vmatpush1.bf16.msra.mxu0 %v1491
      %2403 = vmatprep.subr.bf16.mxu0 %v1496
      %2404 = vmatpush1.bf16.msra.mxu0 %v1495
      %2405 = vmatprep.subr.bf16.mxu0 %v1500
      %2406 = vmatpush1.bf16.msra.mxu0 %v1499
      %2407 = vmatprep.subr.bf16.mxu0 %v1504
      %2408 = vmatpush1.bf16.msra.mxu0 %v1503
      %2409 = vmatprep.subr.bf16.mxu0 %v1508
      %2410 = vmatpush1.bf16.msra.mxu0 %v1507
      %2411 = vmatprep.subr.bf16.mxu0 %v1512
      %2412 = vmatpush1.bf16.msra.mxu0 %v1511
      %2413 = vmatprep.subr.bf16.mxu0 %v1516
      %2414 = vmatpush1.bf16.msra.mxu0 %v1515
      %2415 = vmatprep.subr.bf16.mxu0 %v1520
      %2416 = vmatpush1.bf16.msra.mxu0 %v1519
      %2417 = vmatprep.subr.bf16.mxu0 %v1524
      %2418 = vmatpush1.bf16.msra.mxu0 %v1523
      %2419 = vmatprep.subr.bf16.mxu0 %v1528
      %2420 = vmatpush1.bf16.msra.mxu0 %v1527
      %2421 = vmatprep.subr.bf16.mxu0 %v1532
      %2422 = vmatpush1.bf16.msra.mxu0 %v1531
      %2423 = vmatprep.subr.bf16.mxu0 %v1536
      %2424 = vmatpush1.bf16.msra.mxu0 %v1535
      %2425 = vmatprep.subr.bf16.mxu0 %v1540
      %2426 = vmatpush1.bf16.msra.mxu0 %v1539
      %2427 = vmatprep.mubr.bf16.mxu0 %v554
      %2428 = vmatmul.mubr.bf16.gmra.mrb[0].mxu0 %v553
      %v2429 = vpop.f32.mrb[0].mxu0
      %v2430 = vadd.f32 %v2317, %v2429
      %v2431 = vpop.f32.mrb[0].mxu0
      %v2432 = vadd.f32 %v2319, %v2431
      %v2433 = vpop.f32.mrb[0].mxu0
      %v2434 = vadd.f32 %v2321, %v2433
      %v2435 = vpop.f32.mrb[0].mxu0
      %v2436 = vadd.f32 %v2323, %v2435
      %2437 = vmatprep.mubr.bf16.mxu0 %v561
      %2438 = vmatmul.mubr.bf16.gmra.mrb[0].mxu0 %v560
      %v2439 = vpop.f32.mrb[0].mxu0
      %v2440 = vadd.f32 %v2327, %v2439
      %v2441 = vpop.f32.mrb[0].mxu0
      %v2442 = vadd.f32 %v2329, %v2441
      %v2443 = vpop.f32.mrb[0].mxu0
      %v2444 = vadd.f32 %v2331, %v2443
      %v2445 = vpop.f32.mrb[0].mxu0
      %v2446 = vadd.f32 %v2333, %v2445
      %2447 = vmatprep.mubr.bf16.mxu0 %v568
      %2448 = vmatmul.mubr.bf16.gmra.mrb[0].mxu0 %v567
      %v2449 = vpop.f32.mrb[0].mxu0
      %v2450 = vadd.f32 %v2337, %v2449
      %v2451 = vpop.f32.mrb[0].mxu0
      %v2452 = vadd.f32 %v2339, %v2451
      %v2453 = vpop.f32.mrb[0].mxu0
      %v2454 = vadd.f32 %v2341, %v2453
      %v2455 = vpop.f32.mrb[0].mxu0
      %v2456 = vadd.f32 %v2343, %v2455
      %2457 = vmatprep.mubr.bf16.mxu0 %v575
      %2458 = vmatmul.mubr.bf16.gmra.mrb[0].mxu0 %v574
      %v2459 = vpop.f32.mrb[0].mxu0
      %v2460 = vadd.f32 %v2347, %v2459
      %v2461 = vpop.f32.mrb[0].mxu0
      %v2462 = vadd.f32 %v2349, %v2461
      %v2463 = vpop.f32.mrb[0].mxu0
      %v2464 = vadd.f32 %v2351, %v2463
      %v2465 = vpop.f32.mrb[0].mxu0
      %v2466 = vadd.f32 %v2353, %v2465
      %2467 = vmatprep.mubr.bf16.mxu0 %v582
      %2468 = vmatmul.mubr.bf16.gmra.mrb[0].mxu0 %v581
      %v2469 = vpop.f32.mrb[0].mxu0
      %v2470 = vadd.f32 %v2357, %v2469
      %v2471 = vpop.f32.mrb[0].mxu0
      %v2472 = vadd.f32 %v2359, %v2471
      %v2473 = vpop.f32.mrb[0].mxu0
      %v2474 = vadd.f32 %v2361, %v2473
      %v2475 = vpop.f32.mrb[0].mxu0
      %v2476 = vadd.f32 %v2363, %v2475
      %2477 = vmatprep.mubr.bf16.mxu0 %v589
      %2478 = vmatmul.mubr.bf16.gmra.mrb[0].mxu0 %v588
      %v2479 = vpop.f32.mrb[0].mxu0
      %v2480 = vadd.f32 %v2367, %v2479
      %v2481 = vpop.f32.mrb[0].mxu0
      %v2482 = vadd.f32 %v2369, %v2481
      %v2483 = vpop.f32.mrb[0].mxu0
      %v2484 = vadd.f32 %v2371, %v2483
      %v2485 = vpop.f32.mrb[0].mxu0
      %v2486 = vadd.f32 %v2373, %v2485
      %2487 = vmatprep.mubr.bf16.mxu0 %v596
      %2488 = vmatmul.mubr.bf16.gmra.mrb[0].mxu0 %v595
      %v2489 = vpop.f32.mrb[0].mxu0
      %v2490 = vadd.f32 %v2377, %v2489
      %v2491 = vpop.f32.mrb[0].mxu0
      %v2492 = vadd.f32 %v2379, %v2491
      %v2493 = vpop.f32.mrb[0].mxu0
      %v2494 = vadd.f32 %v2381, %v2493
      %v2495 = vpop.f32.mrb[0].mxu0
      %v2496 = vadd.f32 %v2383, %v2495
      %2497 = vmatprep.mubr.bf16.mxu0 %v603
      %2498 = vmatmul.mubr.bf16.gmra.mrb[0].mxu0 %v602
      %v2499 = vpop.f32.mrb[0].mxu0
      %v2500 = vadd.f32 %v2387, %v2499
      %v2501 = vpop.f32.mrb[0].mxu0
      %v2502 = vadd.f32 %v2389, %v2501
      %v2503 = vpop.f32.mrb[0].mxu0
      %v2504 = vadd.f32 %v2391, %v2503
      %v2505 = vpop.f32.mrb[0].mxu0
      %v2506 = vadd.f32 %v2393, %v2505
      %2507 = vdwg.mxu0
      %2508 = vmatprep.subr.bf16.mxu0 %v1544
      %2509 = vmatpush1.bf16.msra.mxu0 %v1543
      %2510 = vmatprep.subr.bf16.mxu0 %v1548
      %2511 = vmatpush1.bf16.msra.mxu0 %v1547
      %2512 = vmatprep.subr.bf16.mxu0 %v1552
      %2513 = vmatpush1.bf16.msra.mxu0 %v1551
      %2514 = vmatprep.subr.bf16.mxu0 %v1556
      %2515 = vmatpush1.bf16.msra.mxu0 %v1555
      %2516 = vmatprep.subr.bf16.mxu0 %v1560
      %2517 = vmatpush1.bf16.msra.mxu0 %v1559
      %2518 = vmatprep.subr.bf16.mxu0 %v1564
      %2519 = vmatpush1.bf16.msra.mxu0 %v1563
      %2520 = vmatprep.subr.bf16.mxu0 %v1568
      %2521 = vmatpush1.bf16.msra.mxu0 %v1567
      %2522 = vmatprep.subr.bf16.mxu0 %v1572
      %2523 = vmatpush1.bf16.msra.mxu0 %v1571
      %2524 = vmatprep.subr.bf16.mxu0 %v1576
      %2525 = vmatpush1.bf16.msra.mxu0 %v1575
      %2526 = vmatprep.subr.bf16.mxu0 %v1580
      %2527 = vmatpush1.bf16.msra.mxu0 %v1579
      %2528 = vmatprep.subr.bf16.mxu0 %v1584
      %2529 = vmatpush1.bf16.msra.mxu0 %v1583
      %2530 = vmatprep.subr.bf16.mxu0 %v1588
      %2531 = vmatpush1.bf16.msra.mxu0 %v1587
      %2532 = vmatprep.subr.bf16.mxu0 %v1592
      %2533 = vmatpush1.bf16.msra.mxu0 %v1591
      %2534 = vmatprep.subr.bf16.mxu0 %v1596
      %2535 = vmatpush1.bf16.msra.mxu0 %v1595
      %2536 = vmatprep.subr.bf16.mxu0 %v1600
      %2537 = vmatpush1.bf16.msra.mxu0 %v1599
      %2538 = vmatprep.subr.bf16.mxu0 %v1604
      %2539 = vmatpush1.bf16.msra.mxu0 %v1603
      %2540 = vmatprep.mubr.bf16.mxu0 %v556
      %2541 = vmatmul.mubr.bf16.gmra.mrb[0].mxu0 %v555
      %v2542 = vpop.f32.mrb[0].mxu0
      %v2543 = vadd.f32 %v2430, %v2542
      %v2544 = vpop.f32.mrb[0].mxu0
      %v2545 = vadd.f32 %v2432, %v2544
      %v2546 = vpop.f32.mrb[0].mxu0
      %v2547 = vadd.f32 %v2434, %v2546
      %v2548 = vpop.f32.mrb[0].mxu0
      %v2549 = vadd.f32 %v2436, %v2548
      %2550 = vmatprep.mubr.bf16.mxu0 %v563
      %2551 = vmatmul.mubr.bf16.gmra.mrb[0].mxu0 %v562
      %v2552 = vpop.f32.mrb[0].mxu0
      %v2553 = vadd.f32 %v2440, %v2552
      %v2554 = vpop.f32.mrb[0].mxu0
      %v2555 = vadd.f32 %v2442, %v2554
      %v2556 = vpop.f32.mrb[0].mxu0
      %v2557 = vadd.f32 %v2444, %v2556
      %v2558 = vpop.f32.mrb[0].mxu0
      %v2559 = vadd.f32 %v2446, %v2558
      %2560 = vmatprep.mubr.bf16.mxu0 %v570
      %2561 = vmatmul.mubr.bf16.gmra.mrb[0].mxu0 %v569
      %v2562 = vpop.f32.mrb[0].mxu0
      %v2563 = vadd.f32 %v2450, %v2562
      %v2564 = vpop.f32.mrb[0].mxu0
      %v2565 = vadd.f32 %v2452, %v2564
      %v2566 = vpop.f32.mrb[0].mxu0
      %v2567 = vadd.f32 %v2454, %v2566
      %v2568 = vpop.f32.mrb[0].mxu0
      %v2569 = vadd.f32 %v2456, %v2568
      %2570 = vmatprep.mubr.bf16.mxu0 %v577
      %2571 = vmatmul.mubr.bf16.gmra.mrb[0].mxu0 %v576
      %v2572 = vpop.f32.mrb[0].mxu0
      %v2573 = vadd.f32 %v2460, %v2572
      %v2574 = vpop.f32.mrb[0].mxu0
      %v2575 = vadd.f32 %v2462, %v2574
      %v2576 = vpop.f32.mrb[0].mxu0
      %v2577 = vadd.f32 %v2464, %v2576
      %v2578 = vpop.f32.mrb[0].mxu0
      %v2579 = vadd.f32 %v2466, %v2578
      %2580 = vmatprep.mubr.bf16.mxu0 %v584
      %2581 = vmatmul.mubr.bf16.gmra.mrb[0].mxu0 %v583
      %v2582 = vpop.f32.mrb[0].mxu0
      %v2583 = vadd.f32 %v2470, %v2582
      %v2584 = vpop.f32.mrb[0].mxu0
      %v2585 = vadd.f32 %v2472, %v2584
      %v2586 = vpop.f32.mrb[0].mxu0
      %v2587 = vadd.f32 %v2474, %v2586
      %v2588 = vpop.f32.mrb[0].mxu0
      %v2589 = vadd.f32 %v2476, %v2588
      %2590 = vmatprep.mubr.bf16.mxu0 %v591
      %2591 = vmatmul.mubr.bf16.gmra.mrb[0].mxu0 %v590
      %v2592 = vpop.f32.mrb[0].mxu0
      %v2593 = vadd.f32 %v2480, %v2592
      %v2594 = vpop.f32.mrb[0].mxu0
      %v2595 = vadd.f32 %v2482, %v2594
      %v2596 = vpop.f32.mrb[0].mxu0
      %v2597 = vadd.f32 %v2484, %v2596
      %v2598 = vpop.f32.mrb[0].mxu0
      %v2599 = vadd.f32 %v2486, %v2598
      %2600 = vmatprep.mubr.bf16.mxu0 %v598
      %2601 = vmatmul.mubr.bf16.gmra.mrb[0].mxu0 %v597
      %v2602 = vpop.f32.mrb[0].mxu0
      %v2603 = vadd.f32 %v2490, %v2602
      %v2604 = vpop.f32.mrb[0].mxu0
      %v2605 = vadd.f32 %v2492, %v2604
      %v2606 = vpop.f32.mrb[0].mxu0
      %v2607 = vadd.f32 %v2494, %v2606
      %v2608 = vpop.f32.mrb[0].mxu0
      %v2609 = vadd.f32 %v2496, %v2608
      %2610 = vmatprep.mubr.bf16.mxu0 %v605
      %2611 = vmatmul.mubr.bf16.gmra.mrb[0].mxu0 %v604
      %v2612 = vpop.f32.mrb[0].mxu0
      %v2613 = vadd.f32 %v2500, %v2612
      %v2614 = vpop.f32.mrb[0].mxu0
      %v2615 = vadd.f32 %v2502, %v2614
      %v2616 = vpop.f32.mrb[0].mxu0
      %v2617 = vadd.f32 %v2504, %v2616
      %v2618 = vpop.f32.mrb[0].mxu0
      %v2619 = vadd.f32 %v2506, %v2618
      %2620 = vdwg.mxu0
      %2621 = vmatprep.subr.bf16.mxu0 %v1608
      %2622 = vmatpush1.bf16.msra.mxu0 %v1607
      %2623 = vmatprep.subr.bf16.mxu0 0
      %2624 = vmatpush1.bf16.msra.mxu0 0
      %2625 = vmatprep.subr.bf16.mxu0 0
      %2626 = vmatpush1.bf16.msra.mxu0 0
      %2627 = vmatprep.subr.bf16.mxu0 0
      %2628 = vmatpush1.bf16.msra.mxu0 0
      %2629 = vmatprep.subr.bf16.mxu0 0
      %2630 = vmatpush1.bf16.msra.mxu0 0
      %2631 = vmatprep.subr.bf16.mxu0 0
      %2632 = vmatpush1.bf16.msra.mxu0 0
      %2633 = vmatprep.subr.bf16.mxu0 0
      %2634 = vmatpush1.bf16.msra.mxu0 0
      %2635 = vmatprep.subr.bf16.mxu0 0
      %2636 = vmatpush1.bf16.msra.mxu0 0
      %2637 = vmatprep.subr.bf16.mxu0 0
      %2638 = vmatpush1.bf16.msra.mxu0 0
      %2639 = vmatprep.subr.bf16.mxu0 0
      %2640 = vmatpush1.bf16.msra.mxu0 0
      %2641 = vmatprep.subr.bf16.mxu0 0
      %2642 = vmatpush1.bf16.msra.mxu0 0
      %2643 = vmatprep.subr.bf16.mxu0 0
      %2644 = vmatpush1.bf16.msra.mxu0 0
      %2645 = vmatprep.subr.bf16.mxu0 0
      %2646 = vmatpush1.bf16.msra.mxu0 0
      %2647 = vmatprep.subr.bf16.mxu0 0
      %2648 = vmatpush1.bf16.msra.mxu0 0
      %2649 = vmatprep.subr.bf16.mxu0 0
      %2650 = vmatpush1.bf16.msra.mxu0 0
      %2651 = vmatprep.subr.bf16.mxu0 0
      %2652 = vmatpush1.bf16.msra.mxu0 0
      %2653 = vmatprep.mubr.bf16.mxu0 0
      %2654 = vmatmul.mubr.bf16.gmra.mrb[0].mxu0 %v1807
      %v2655 = vpop.f32.mrb[0].mxu0
      %v2656 = vadd.f32 %v2543, %v2655
      %v2657 = vpop.f32.mrb[0].mxu0
      %v2658 = vadd.f32 %v2545, %v2657
      %v2659 = vpop.f32.mrb[0].mxu0
      %v2660 = vadd.f32 %v2547, %v2659
      %v2661 = vpop.f32.mrb[0].mxu0
      %v2662 = vadd.f32 %v2549, %v2661
      %2663 = vmatprep.mubr.bf16.mxu0 0
      %2664 = vmatmul.mubr.bf16.gmra.mrb[0].mxu0 %v1810
      %v2665 = vpop.f32.mrb[0].mxu0
      %v2666 = vadd.f32 %v2553, %v2665
      %v2667 = vpop.f32.mrb[0].mxu0
      %v2668 = vadd.f32 %v2555, %v2667
      %v2669 = vpop.f32.mrb[0].mxu0
      %v2670 = vadd.f32 %v2557, %v2669
      %v2671 = vpop.f32.mrb[0].mxu0
      %v2672 = vadd.f32 %v2559, %v2671
      %2673 = vmatprep.mubr.bf16.mxu0 0
      %2674 = vmatmul.mubr.bf16.gmra.mrb[0].mxu0 %v1813
      %v2675 = vpop.f32.mrb[0].mxu0
      %v2676 = vadd.f32 %v2563, %v2675
      %v2677 = vpop.f32.mrb[0].mxu0
      %v2678 = vadd.f32 %v2565, %v2677
      %v2679 = vpop.f32.mrb[0].mxu0
      %v2680 = vadd.f32 %v2567, %v2679
      %v2681 = vpop.f32.mrb[0].mxu0
      %v2682 = vadd.f32 %v2569, %v2681
      %2683 = vmatprep.mubr.bf16.mxu0 0
      %2684 = vmatmul.mubr.bf16.gmra.mrb[0].mxu0 %v1816
      %v2685 = vpop.f32.mrb[0].mxu0
      %v2686 = vadd.f32 %v2573, %v2685
      %v2687 = vpop.f32.mrb[0].mxu0
      %v2688 = vadd.f32 %v2575, %v2687
      %v2689 = vpop.f32.mrb[0].mxu0
      %v2690 = vadd.f32 %v2577, %v2689
      %v2691 = vpop.f32.mrb[0].mxu0
      %v2692 = vadd.f32 %v2579, %v2691
      %2693 = vmatprep.mubr.bf16.mxu0 0
      %2694 = vmatmul.mubr.bf16.gmra.mrb[0].mxu0 %v1819
      %v2695 = vpop.f32.mrb[0].mxu0
      %v2696 = vadd.f32 %v2583, %v2695
      %v2697 = vpop.f32.mrb[0].mxu0
      %v2698 = vadd.f32 %v2585, %v2697
      %v2699 = vpop.f32.mrb[0].mxu0
      %v2700 = vadd.f32 %v2587, %v2699
      %v2701 = vpop.f32.mrb[0].mxu0
      %v2702 = vadd.f32 %v2589, %v2701
      %2703 = vmatprep.mubr.bf16.mxu0 0
      %2704 = vmatmul.mubr.bf16.gmra.mrb[0].mxu0 %v1822
      %v2705 = vpop.f32.mrb[0].mxu0
      %v2706 = vadd.f32 %v2593, %v2705
      %v2707 = vpop.f32.mrb[0].mxu0
      %v2708 = vadd.f32 %v2595, %v2707
      %v2709 = vpop.f32.mrb[0].mxu0
      %v2710 = vadd.f32 %v2597, %v2709
      %v2711 = vpop.f32.mrb[0].mxu0
      %v2712 = vadd.f32 %v2599, %v2711
      %2713 = vmatprep.mubr.bf16.mxu0 0
      %2714 = vmatmul.mubr.bf16.gmra.mrb[0].mxu0 %v1825
      %v2715 = vpop.f32.mrb[0].mxu0
      %v2716 = vadd.f32 %v2603, %v2715
      %v2717 = vpop.f32.mrb[0].mxu0
      %v2718 = vadd.f32 %v2605, %v2717
      %v2719 = vpop.f32.mrb[0].mxu0
      %v2720 = vadd.f32 %v2607, %v2719
      %v2721 = vpop.f32.mrb[0].mxu0
      %v2722 = vadd.f32 %v2609, %v2721
      %2723 = vmatprep.mubr.bf16.mxu0 0
      %2724 = vmatmul.mubr.bf16.gmra.mrb[0].mxu0 %v1828
      %v2725 = vpop.f32.mrb[0].mxu0
      %v2726 = vadd.f32 %v2613, %v2725
      %v2727 = vpop.f32.mrb[0].mxu0
      %v2728 = vadd.f32 %v2615, %v2727
      %v2729 = vpop.f32.mrb[0].mxu0
      %v2730 = vadd.f32 %v2617, %v2729
      %v2731 = vpop.f32.mrb[0].mxu0
      %v2732 = vadd.f32 %v2619, %v2731
      %2733 = vdwg.mxu0
      %v2734 = vpack.c.bf16 %v2208, %v2204
      %v2735 = vpack.c.bf16 %v2210, %v2206
      %v2736 = vpack.c.bf16 %v2660, %v2656
      %v2737 = vpack.c.bf16 %v2662, %v2658
      %v2738 = vpack.c.bf16 %v2218, %v2214
      %v2739 = vpack.c.bf16 %v2220, %v2216
      %v2740 = vpack.c.bf16 %v2670, %v2666
      %v2741 = vpack.c.bf16 %v2672, %v2668
      %v2742 = vpack.c.bf16 %v2228, %v2224
      %v2743 = vpack.c.bf16 %v2230, %v2226
      %v2744 = vpack.c.bf16 %v2680, %v2676
      %v2745 = vpack.c.bf16 %v2682, %v2678
      %v2746 = vpack.c.bf16 %v2238, %v2234
      %v2747 = vpack.c.bf16 %v2240, %v2236
      %v2748 = vpack.c.bf16 %v2690, %v2686
      %v2749 = vpack.c.bf16 %v2692, %v2688
      %v2750 = vpack.c.bf16 %v2248, %v2244
      %v2751 = vpack.c.bf16 %v2250, %v2246
      %v2752 = vpack.c.bf16 %v2700, %v2696
      %v2753 = vpack.c.bf16 %v2702, %v2698
      %v2754 = vpack.c.bf16 %v2258, %v2254
      %v2755 = vpack.c.bf16 %v2260, %v2256
      %v2756 = vpack.c.bf16 %v2710, %v2706
      %v2757 = vpack.c.bf16 %v2712, %v2708
      %v2758 = vpack.c.bf16 %v2268, %v2264
      %v2759 = vpack.c.bf16 %v2270, %v2266
      %v2760 = vpack.c.bf16 %v2720, %v2716
      %v2761 = vpack.c.bf16 %v2722, %v2718
      %v2762 = vpack.c.bf16 %v2278, %v2274
      %v2763 = vpack.c.bf16 %v2280, %v2276
      %v2764 = vpack.c.bf16 %v2730, %v2726
      %v2765 = vpack.c.bf16 %v2732, %v2728
      %v2766 = vld [vmem:[%s3] sm:$0xf]
      %v2767 = vld [vmem:[%s3 + $0x4] sm:$0xf]
      %v2768 = vld [vmem:[%s3 + $0x8] sm:$0xf]
      %v2769 = vld [vmem:[%s3 + $0xc] sm:$0xf]
      %v2770 = vld [vmem:[%s3 + $0x10] sm:$0xf]
      %v2771 = vld [vmem:[%s3 + $0x14] sm:$0xf]
      %v2772 = vld [vmem:[%s3 + $0x18] sm:$0xf]
      %v2773 = vld [vmem:[%s3 + $0x1c] sm:$0xf]
      %v2774 = vld [vmem:[%s3 + $0x20] sm:$0xf]
      %v2775 = vld [vmem:[%s3 + $0x24] sm:$0xf]
      %v2776 = vld [vmem:[%s3 + $0x28] sm:$0xf]
      %v2777 = vld [vmem:[%s3 + $0x2c] sm:$0xf]
      %v2778 = vld [vmem:[%s3 + $0x30] sm:$0xf]
      %v2779 = vld [vmem:[%s3 + $0x34] sm:$0xf]
      %v2780 = vld [vmem:[%s3 + $0x38] sm:$0xf]
      %v2781 = vld [vmem:[%s3 + $0x3c] sm:$0xf]
      %v2782 = vld [vmem:[%s3 + $0x40] sm:$0xf]
      %v2783 = vld [vmem:[%s3 + $0x44] sm:$0xf]
      %v2784 = vld [vmem:[%s3 + $0x48] sm:$0xf]
      %v2785 = vld [vmem:[%s3 + $0x4c] sm:$0xf]
      %v2786 = vld [vmem:[%s3 + $0x50] sm:$0xf]
      %v2787 = vld [vmem:[%s3 + $0x54] sm:$0xf]
      %v2788 = vld [vmem:[%s3 + $0x58] sm:$0xf]
      %v2789 = vld [vmem:[%s3 + $0x5c] sm:$0xf]
      %v2790 = vld [vmem:[%s3 + $0x60] sm:$0xf]
      %v2791 = vld [vmem:[%s3 + $0x64] sm:$0xf]
      %v2792 = vld [vmem:[%s3 + $0x68] sm:$0xf]
      %v2793 = vld [vmem:[%s3 + $0x6c] sm:$0xf]
      %v2794 = vld [vmem:[%s3 + $0x70] sm:$0xf]
      %v2795 = vld [vmem:[%s3 + $0x74] sm:$0xf]
      %v2796 = vld [vmem:[%s3 + $0x78] sm:$0xf]
      %v2797 = vld [vmem:[%s3 + $0x7c] sm:$0xf]
      %v2798 = vld [vmem:[%s3 + $0x80] sm:$0xf]
      %v2799 = vld [vmem:[%s3 + $0x84] sm:$0xf]
      %v2800 = vld [vmem:[%s3 + $0x88] sm:$0xf]
      %v2801 = vld [vmem:[%s3 + $0x8c] sm:$0xf]
      %v2802 = vld [vmem:[%s3 + $0x90] sm:$0xf]
      %v2803 = vld [vmem:[%s3 + $0x94] sm:$0xf]
      %v2804 = vld [vmem:[%s3 + $0x98] sm:$0xf]
      %v2805 = vld [vmem:[%s3 + $0x9c] sm:$0xf]
      %v2806 = vld [vmem:[%s3 + $0xa0] sm:$0xf]
      %v2807 = vld [vmem:[%s3 + $0xa4] sm:$0xf]
      %v2808 = vld [vmem:[%s3 + $0xa8] sm:$0xf]
      %v2809 = vld [vmem:[%s3 + $0xac] sm:$0xf]
      %v2810 = vld [vmem:[%s3 + $0xb0] sm:$0xf]
      %v2811 = vld [vmem:[%s3 + $0xb4] sm:$0xf]
      %v2812 = vld [vmem:[%s3 + $0xb8] sm:$0xf]
      %v2813 = vld [vmem:[%s3 + $0xbc] sm:$0xf]
      %v2814 = vld [vmem:[%s3 + $0xc0] sm:$0xf]
      %v2815 = vld [vmem:[%s3 + $0xc4] sm:$0xf]
      %v2816 = vld [vmem:[%s3 + $0xc8] sm:$0xf]
      %v2817 = vld [vmem:[%s3 + $0xcc] sm:$0xf]
      %v2818 = vld [vmem:[%s3 + $0xd0] sm:$0xf]
      %v2819 = vld [vmem:[%s3 + $0xd4] sm:$0xf]
      %v2820 = vld [vmem:[%s3 + $0xd8] sm:$0xf]
      %v2821 = vld [vmem:[%s3 + $0xdc] sm:$0xf]
      %v2822 = vld [vmem:[%s3 + $0xe0] sm:$0xf]
      %v2823 = vld [vmem:[%s3 + $0xe4] sm:$0xf]
      %v2824 = vld [vmem:[%s3 + $0xe8] sm:$0xf]
      %v2825 = vld [vmem:[%s3 + $0xec] sm:$0xf]
      %v2826 = vld [vmem:[%s3 + $0xf0] sm:$0xf]
      %v2827 = vld [vmem:[%s3 + $0xf4] sm:$0xf]
      %v2828 = vld [vmem:[%s3 + $0xf8] sm:$0xf]
      %v2829 = vld [vmem:[%s3 + $0xfc] sm:$0xf]
      %v2830 = vld [vmem:[%s4] sm:$0x1]
      %v2832 = vlaneseq
      %v2833 = vshrl.u32 %v2832, 7
      %v2834 = vsub.s32 0, %v2833
      %v2835 = vrot.slane %v2830, %v2834
      %v2901 = vunpack.c.l.b16 %v2766
      %v2902 = vunpack.c.l.b16 %v2767
      %v2903 = vunpack.c.l.b16 %v2768
      %v2904 = vunpack.c.l.b16 %v2769
      %v2905 = vunpack.c.l.b16 %v2770
      %v2906 = vunpack.c.l.b16 %v2771
      %v2907 = vunpack.c.l.b16 %v2772
      %v2908 = vunpack.c.l.b16 %v2773
      %v2909 = vunpack.c.l.b16 %v2774
      %v2910 = vunpack.c.l.b16 %v2775
      %v2911 = vunpack.c.l.b16 %v2776
      %v2912 = vunpack.c.l.b16 %v2777
      %v2913 = vunpack.c.l.b16 %v2778
      %v2914 = vunpack.c.l.b16 %v2779
      %v2915 = vunpack.c.l.b16 %v2780
      %v2916 = vunpack.c.l.b16 %v2781
      %v2917 = vunpack.c.l.b16 %v2782
      %v2918 = vunpack.c.l.b16 %v2783
      %v2919 = vunpack.c.l.b16 %v2784
      %v2920 = vunpack.c.l.b16 %v2785
      %v2921 = vunpack.c.l.b16 %v2786
      %v2922 = vunpack.c.l.b16 %v2787
      %v2923 = vunpack.c.l.b16 %v2788
      %v2924 = vunpack.c.l.b16 %v2789
      %v2925 = vunpack.c.l.b16 %v2790
      %v2926 = vunpack.c.l.b16 %v2791
      %v2927 = vunpack.c.l.b16 %v2792
      %v2928 = vunpack.c.l.b16 %v2793
      %v2929 = vunpack.c.l.b16 %v2794
      %v2930 = vunpack.c.l.b16 %v2795
      %v2931 = vunpack.c.l.b16 %v2796
      %v2932 = vunpack.c.l.b16 %v2797
      %v2933 = vunpack.c.l.b16 %v2798
      %v2934 = vunpack.c.l.b16 %v2799
      %v2935 = vunpack.c.l.b16 %v2800
      %v2936 = vunpack.c.l.b16 %v2801
      %v2937 = vunpack.c.l.b16 %v2802
      %v2938 = vunpack.c.l.b16 %v2803
      %v2939 = vunpack.c.l.b16 %v2804
      %v2940 = vunpack.c.l.b16 %v2805
      %v2941 = vunpack.c.l.b16 %v2806
      %v2942 = vunpack.c.l.b16 %v2807
      %v2943 = vunpack.c.l.b16 %v2808
      %v2944 = vunpack.c.l.b16 %v2809
      %v2945 = vunpack.c.l.b16 %v2810
      %v2946 = vunpack.c.l.b16 %v2811
      %v2947 = vunpack.c.l.b16 %v2812
      %v2948 = vunpack.c.l.b16 %v2813
      %v2949 = vunpack.c.l.b16 %v2814
      %v2950 = vunpack.c.l.b16 %v2815
      %v2951 = vunpack.c.l.b16 %v2816
      %v2952 = vunpack.c.l.b16 %v2817
      %v2953 = vunpack.c.l.b16 %v2818
      %v2954 = vunpack.c.l.b16 %v2819
      %v2955 = vunpack.c.l.b16 %v2820
      %v2956 = vunpack.c.l.b16 %v2821
      %v2957 = vunpack.c.l.b16 %v2822
      %v2958 = vunpack.c.l.b16 %v2823
      %v2959 = vunpack.c.l.b16 %v2824
      %v2960 = vunpack.c.l.b16 %v2825
      %v2961 = vunpack.c.l.b16 %v2826
      %v2962 = vunpack.c.l.b16 %v2827
      %v2963 = vunpack.c.l.b16 %v2828
      %v2964 = vunpack.c.l.b16 %v2829
      %v2965 = vpack.c.b16 %v2902, %v2901
      %v2966 = vpack.c.b16 %v2904, %v2903
      %v2967 = vpack.c.b16 %v2906, %v2905
      %v2968 = vpack.c.b16 %v2908, %v2907
      %v2969 = vpack.c.b16 %v2910, %v2909
      %v2970 = vpack.c.b16 %v2912, %v2911
      %v2971 = vpack.c.b16 %v2914, %v2913
      %v2972 = vpack.c.b16 %v2916, %v2915
      %v2973 = vpack.c.b16 %v2918, %v2917
      %v2974 = vpack.c.b16 %v2920, %v2919
      %v2975 = vpack.c.b16 %v2922, %v2921
      %v2976 = vpack.c.b16 %v2924, %v2923
      %v2977 = vpack.c.b16 %v2926, %v2925
      %v2978 = vpack.c.b16 %v2928, %v2927
      %v2979 = vpack.c.b16 %v2930, %v2929
      %v2980 = vpack.c.b16 %v2932, %v2931
      %v2981 = vpack.c.b16 %v2934, %v2933
      %v2982 = vpack.c.b16 %v2936, %v2935
      %v2983 = vpack.c.b16 %v2938, %v2937
      %v2984 = vpack.c.b16 %v2940, %v2939
      %v2985 = vpack.c.b16 %v2942, %v2941
      %v2986 = vpack.c.b16 %v2944, %v2943
      %v2987 = vpack.c.b16 %v2946, %v2945
      %v2988 = vpack.c.b16 %v2948, %v2947
      %v2989 = vpack.c.b16 %v2950, %v2949
      %v2990 = vpack.c.b16 %v2952, %v2951
      %v2991 = vpack.c.b16 %v2954, %v2953
      %v2992 = vpack.c.b16 %v2956, %v2955
      %v2993 = vpack.c.b16 %v2958, %v2957
      %v2994 = vpack.c.b16 %v2960, %v2959
      %v2995 = vpack.c.b16 %v2962, %v2961
      %v2996 = vpack.c.b16 %v2964, %v2963
      %3029 = vmatprep.subr.bf16.mxu0 0
      %3030 = vmatpush1.bf16.msra.mxu0 %v2965
      %3031 = vmatprep.subr.bf16.mxu0 0
      %3032 = vmatpush1.bf16.msra.mxu0 %v2966
      %3033 = vmatprep.subr.bf16.mxu0 0
      %3034 = vmatpush1.bf16.msra.mxu0 %v2967
      %3035 = vmatprep.subr.bf16.mxu0 0
      %3036 = vmatpush1.bf16.msra.mxu0 %v2968
      %3037 = vmatprep.subr.bf16.mxu0 0
      %3038 = vmatpush1.bf16.msra.mxu0 %v2969
      %3039 = vmatprep.subr.bf16.mxu0 0
      %3040 = vmatpush1.bf16.msra.mxu0 %v2970
      %3041 = vmatprep.subr.bf16.mxu0 0
      %3042 = vmatpush1.bf16.msra.mxu0 %v2971
      %3043 = vmatprep.subr.bf16.mxu0 0
      %3044 = vmatpush1.bf16.msra.mxu0 %v2972
      %3045 = vmatprep.subr.bf16.mxu0 0
      %3046 = vmatpush1.bf16.msra.mxu0 %v2973
      %3047 = vmatprep.subr.bf16.mxu0 0
      %3048 = vmatpush1.bf16.msra.mxu0 %v2974
      %3049 = vmatprep.subr.bf16.mxu0 0
      %3050 = vmatpush1.bf16.msra.mxu0 %v2975
      %3051 = vmatprep.subr.bf16.mxu0 0
      %3052 = vmatpush1.bf16.msra.mxu0 %v2976
      %3053 = vmatprep.subr.bf16.mxu0 0
      %3054 = vmatpush1.bf16.msra.mxu0 %v2977
      %3055 = vmatprep.subr.bf16.mxu0 0
      %3056 = vmatpush1.bf16.msra.mxu0 %v2978
      %3057 = vmatprep.subr.bf16.mxu0 0
      %3058 = vmatpush1.bf16.msra.mxu0 %v2979
      %3059 = vmatprep.subr.bf16.mxu0 0
      %3060 = vmatpush1.bf16.msra.mxu0 %v2980
      %3061 = vmatprep.mubr.bf16.mxu0 %v2735
      %3062 = vmatmul.mubr.bf16.gmra.mrb[0].mxu0 %v2734
      %v3063 = vpop.f32.mrb[0].mxu0
      %v3064 = vadd.f32 %v2835, %v3063
      %v3065 = vpop.f32.mrb[0].mxu0
      %v3066 = vpop.f32.mrb[0].mxu0
      %v3067 = vadd.f32 %v2835, %v3066
      %v3068 = vpop.f32.mrb[0].mxu0
      %3069 = vmatprep.mubr.bf16.mxu0 %v2739
      %3070 = vmatmul.mubr.bf16.gmra.mrb[0].mxu0 %v2738
      %v3071 = vpop.f32.mrb[0].mxu0
      %v3072 = vadd.f32 %v2835, %v3071
      %v3073 = vpop.f32.mrb[0].mxu0
      %v3074 = vpop.f32.mrb[0].mxu0
      %v3075 = vadd.f32 %v2835, %v3074
      %v3076 = vpop.f32.mrb[0].mxu0
      %3077 = vmatprep.mubr.bf16.mxu0 %v2743
      %3078 = vmatmul.mubr.bf16.gmra.mrb[0].mxu0 %v2742
      %v3079 = vpop.f32.mrb[0].mxu0
      %v3080 = vadd.f32 %v2835, %v3079
      %v3081 = vpop.f32.mrb[0].mxu0
      %v3082 = vpop.f32.mrb[0].mxu0
      %v3083 = vadd.f32 %v2835, %v3082
      %v3084 = vpop.f32.mrb[0].mxu0
      %3085 = vmatprep.mubr.bf16.mxu0 %v2747
      %3086 = vmatmul.mubr.bf16.gmra.mrb[0].mxu0 %v2746
      %v3087 = vpop.f32.mrb[0].mxu0
      %v3088 = vadd.f32 %v2835, %v3087
      %v3089 = vpop.f32.mrb[0].mxu0
      %v3090 = vpop.f32.mrb[0].mxu0
      %v3091 = vadd.f32 %v2835, %v3090
      %v3092 = vpop.f32.mrb[0].mxu0
      %3093 = vmatprep.mubr.bf16.mxu0 %v2751
      %3094 = vmatmul.mubr.bf16.gmra.mrb[0].mxu0 %v2750
      %v3095 = vpop.f32.mrb[0].mxu0
      %v3096 = vadd.f32 %v2835, %v3095
      %v3097 = vpop.f32.mrb[0].mxu0
      %v3098 = vpop.f32.mrb[0].mxu0
      %v3099 = vadd.f32 %v2835, %v3098
      %v3100 = vpop.f32.mrb[0].mxu0
      %3101 = vmatprep.mubr.bf16.mxu0 %v2755
      %3102 = vmatmul.mubr.bf16.gmra.mrb[0].mxu0 %v2754
      %v3103 = vpop.f32.mrb[0].mxu0
      %v3104 = vadd.f32 %v2835, %v3103
      %v3105 = vpop.f32.mrb[0].mxu0
      %v3106 = vpop.f32.mrb[0].mxu0
      %v3107 = vadd.f32 %v2835, %v3106
      %v3108 = vpop.f32.mrb[0].mxu0
      %3109 = vmatprep.mubr.bf16.mxu0 %v2759
      %3110 = vmatmul.mubr.bf16.gmra.mrb[0].mxu0 %v2758
      %v3111 = vpop.f32.mrb[0].mxu0
      %v3112 = vadd.f32 %v2835, %v3111
      %v3113 = vpop.f32.mrb[0].mxu0
      %v3114 = vpop.f32.mrb[0].mxu0
      %v3115 = vadd.f32 %v2835, %v3114
      %v3116 = vpop.f32.mrb[0].mxu0
      %3117 = vmatprep.mubr.bf16.mxu0 %v2763
      %3118 = vmatmul.mubr.bf16.gmra.mrb[0].mxu0 %v2762
      %v3119 = vpop.f32.mrb[0].mxu0
      %v3120 = vadd.f32 %v2835, %v3119
      %v3121 = vpop.f32.mrb[0].mxu0
      %v3122 = vpop.f32.mrb[0].mxu0
      %v3123 = vadd.f32 %v2835, %v3122
      %v3124 = vpop.f32.mrb[0].mxu0
      %3125 = vdwg.mxu0
      %3126 = vmatprep.subr.bf16.mxu0 0
      %3127 = vmatpush1.bf16.msra.mxu0 %v2981
      %3128 = vmatprep.subr.bf16.mxu0 0
      %3129 = vmatpush1.bf16.msra.mxu0 %v2982
      %3130 = vmatprep.subr.bf16.mxu0 0
      %3131 = vmatpush1.bf16.msra.mxu0 %v2983
      %3132 = vmatprep.subr.bf16.mxu0 0
      %3133 = vmatpush1.bf16.msra.mxu0 %v2984
      %3134 = vmatprep.subr.bf16.mxu0 0
      %3135 = vmatpush1.bf16.msra.mxu0 %v2985
      %3136 = vmatprep.subr.bf16.mxu0 0
      %3137 = vmatpush1.bf16.msra.mxu0 %v2986
      %3138 = vmatprep.subr.bf16.mxu0 0
      %3139 = vmatpush1.bf16.msra.mxu0 %v2987
      %3140 = vmatprep.subr.bf16.mxu0 0
      %3141 = vmatpush1.bf16.msra.mxu0 %v2988
      %3142 = vmatprep.subr.bf16.mxu0 0
      %3143 = vmatpush1.bf16.msra.mxu0 %v2989
      %3144 = vmatprep.subr.bf16.mxu0 0
      %3145 = vmatpush1.bf16.msra.mxu0 %v2990
      %3146 = vmatprep.subr.bf16.mxu0 0
      %3147 = vmatpush1.bf16.msra.mxu0 %v2991
      %3148 = vmatprep.subr.bf16.mxu0 0
      %3149 = vmatpush1.bf16.msra.mxu0 %v2992
      %3150 = vmatprep.subr.bf16.mxu0 0
      %3151 = vmatpush1.bf16.msra.mxu0 %v2993
      %3152 = vmatprep.subr.bf16.mxu0 0
      %3153 = vmatpush1.bf16.msra.mxu0 %v2994
      %3154 = vmatprep.subr.bf16.mxu0 0
      %3155 = vmatpush1.bf16.msra.mxu0 %v2995
      %3156 = vmatprep.subr.bf16.mxu0 0
      %3157 = vmatpush1.bf16.msra.mxu0 %v2996
      %3158 = vmatprep.mubr.bf16.mxu0 %v2737
      %3159 = vmatmul.mubr.bf16.gmra.mrb[0].mxu0 %v2736
      %v3160 = vpop.f32.mrb[0].mxu0
      %v3161 = vadd.f32 %v3064, %v3160
      %v3162 = vpop.f32.mrb[0].mxu0
      %v3163 = vpop.f32.mrb[0].mxu0
      %v3164 = vadd.f32 %v3067, %v3163
      %v3165 = vpop.f32.mrb[0].mxu0
      %3166 = vmatprep.mubr.bf16.mxu0 %v2741
      %3167 = vmatmul.mubr.bf16.gmra.mrb[0].mxu0 %v2740
      %v3168 = vpop.f32.mrb[0].mxu0
      %v3169 = vadd.f32 %v3072, %v3168
      %v3170 = vpop.f32.mrb[0].mxu0
      %v3171 = vpop.f32.mrb[0].mxu0
      %v3172 = vadd.f32 %v3075, %v3171
      %v3173 = vpop.f32.mrb[0].mxu0
      %3174 = vmatprep.mubr.bf16.mxu0 %v2745
      %3175 = vmatmul.mubr.bf16.gmra.mrb[0].mxu0 %v2744
      %v3176 = vpop.f32.mrb[0].mxu0
      %v3177 = vadd.f32 %v3080, %v3176
      %v3178 = vpop.f32.mrb[0].mxu0
      %v3179 = vpop.f32.mrb[0].mxu0
      %v3180 = vadd.f32 %v3083, %v3179
      %v3181 = vpop.f32.mrb[0].mxu0
      %3182 = vmatprep.mubr.bf16.mxu0 %v2749
      %3183 = vmatmul.mubr.bf16.gmra.mrb[0].mxu0 %v2748
      %v3184 = vpop.f32.mrb[0].mxu0
      %v3185 = vadd.f32 %v3088, %v3184
      %v3186 = vpop.f32.mrb[0].mxu0
      %v3187 = vpop.f32.mrb[0].mxu0
      %v3188 = vadd.f32 %v3091, %v3187
      %v3189 = vpop.f32.mrb[0].mxu0
      %3190 = vmatprep.mubr.bf16.mxu0 %v2753
      %3191 = vmatmul.mubr.bf16.gmra.mrb[0].mxu0 %v2752
      %v3192 = vpop.f32.mrb[0].mxu0
      %v3193 = vadd.f32 %v3096, %v3192
      %v3194 = vpop.f32.mrb[0].mxu0
      %v3195 = vpop.f32.mrb[0].mxu0
      %v3196 = vadd.f32 %v3099, %v3195
      %v3197 = vpop.f32.mrb[0].mxu0
      %3198 = vmatprep.mubr.bf16.mxu0 %v2757
      %3199 = vmatmul.mubr.bf16.gmra.mrb[0].mxu0 %v2756
      %v3200 = vpop.f32.mrb[0].mxu0
      %v3201 = vadd.f32 %v3104, %v3200
      %v3202 = vpop.f32.mrb[0].mxu0
      %v3203 = vpop.f32.mrb[0].mxu0
      %v3204 = vadd.f32 %v3107, %v3203
      %v3205 = vpop.f32.mrb[0].mxu0
      %3206 = vmatprep.mubr.bf16.mxu0 %v2761
      %3207 = vmatmul.mubr.bf16.gmra.mrb[0].mxu0 %v2760
      %v3208 = vpop.f32.mrb[0].mxu0
      %v3209 = vadd.f32 %v3112, %v3208
      %v3210 = vpop.f32.mrb[0].mxu0
      %v3211 = vpop.f32.mrb[0].mxu0
      %v3212 = vadd.f32 %v3115, %v3211
      %v3213 = vpop.f32.mrb[0].mxu0
      %3214 = vmatprep.mubr.bf16.mxu0 %v2765
      %3215 = vmatmul.mubr.bf16.gmra.mrb[0].mxu0 %v2764
      %v3216 = vpop.f32.mrb[0].mxu0
      %v3217 = vadd.f32 %v3120, %v3216
      %v3218 = vpop.f32.mrb[0].mxu0
      %v3219 = vpop.f32.mrb[0].mxu0
      %v3220 = vadd.f32 %v3123, %v3219
      %v3221 = vpop.f32.mrb[0].mxu0
      %3222 = vdwg.mxu0
      %3223 = vst [vmem:[%s324] sm:$0xff] %v3161
      %3224 = vst [vmem:[%s324 + $0x8] sm:$0xff] %v3164
      %3225 = vst [vmem:[%s324 + $0x10] sm:$0xff] %v3169
      %3226 = vst [vmem:[%s324 + $0x18] sm:$0xff] %v3172
      %3227 = vst [vmem:[%s324 + $0x20] sm:$0xff] %v3177
      %3228 = vst [vmem:[%s324 + $0x28] sm:$0xff] %v3180
      %3229 = vst [vmem:[%s324 + $0x30] sm:$0xff] %v3185
      %3230 = vst [vmem:[%s324 + $0x38] sm:$0xff] %v3188
      %3231 = vst [vmem:[%s324 + $0x40] sm:$0xff] %v3193
      %3232 = vst [vmem:[%s324 + $0x48] sm:$0xff] %v3196
      %3233 = vst [vmem:[%s324 + $0x50] sm:$0xff] %v3201
      %3234 = vst [vmem:[%s324 + $0x58] sm:$0xff] %v3204
      %3235 = vst [vmem:[%s324 + $0x60] sm:$0xff] %v3209
      %3236 = vst [vmem:[%s324 + $0x68] sm:$0xff] %v3212
      %3237 = vst [vmem:[%s324 + $0x70] sm:$0xff] %v3217
      %3238 = vst [vmem:[%s324 + $0x78] sm:$0xff] %v3220
      %v3239 = vmax.f32 %v3161, 0.0
      %v3240 = vmax.f32 %v3164, 0.0
      %v3241 = vmax.f32 %v3169, 0.0
      %v3242 = vmax.f32 %v3172, 0.0
      %v3243 = vmax.f32 %v3177, 0.0
      %v3244 = vmax.f32 %v3180, 0.0
      %v3245 = vmax.f32 %v3185, 0.0
      %v3246 = vmax.f32 %v3188, 0.0
      %v3247 = vmax.f32 %v3193, 0.0
      %v3248 = vmax.f32 %v3196, 0.0
      %v3249 = vmax.f32 %v3201, 0.0
      %v3250 = vmax.f32 %v3204, 0.0
      %v3251 = vmax.f32 %v3209, 0.0
      %v3252 = vmax.f32 %v3212, 0.0
      %v3253 = vmax.f32 %v3217, 0.0
      %v3254 = vmax.f32 %v3220, 0.0
      %v3255 = vpack.c.bf16 %v3240, %v3239
      %v3256 = vpack.c.bf16 %v3242, %v3241
      %v3257 = vpack.c.bf16 %v3244, %v3243
      %v3258 = vpack.c.bf16 %v3246, %v3245
      %v3259 = vpack.c.bf16 %v3248, %v3247
      %v3260 = vpack.c.bf16 %v3250, %v3249
      %v3261 = vpack.c.bf16 %v3252, %v3251
      %v3262 = vpack.c.bf16 %v3254, %v3253
      %v3263 = vld [vmem:[%s5] sm:$0xf]
      %v3264 = vld [vmem:[%s5 + $0x4] sm:$0xf]
      %v3265 = vld [vmem:[%s5 + $0x8] sm:$0xf]
      %v3266 = vld [vmem:[%s5 + $0xc] sm:$0xf]
      %v3267 = vld [vmem:[%s5 + $0x10] sm:$0xf]
      %v3268 = vld [vmem:[%s5 + $0x14] sm:$0xf]
      %v3269 = vld [vmem:[%s5 + $0x18] sm:$0xf]
      %v3270 = vld [vmem:[%s5 + $0x1c] sm:$0xf]
      %v3271 = vld [vmem:[%s5 + $0x20] sm:$0xf]
      %v3272 = vld [vmem:[%s5 + $0x24] sm:$0xf]
      %v3273 = vld [vmem:[%s5 + $0x28] sm:$0xf]
      %v3274 = vld [vmem:[%s5 + $0x2c] sm:$0xf]
      %v3275 = vld [vmem:[%s5 + $0x30] sm:$0xf]
      %v3276 = vld [vmem:[%s5 + $0x34] sm:$0xf]
      %v3277 = vld [vmem:[%s5 + $0x38] sm:$0xf]
      %v3278 = vld [vmem:[%s5 + $0x3c] sm:$0xf]
      %v3279 = vld [vmem:[%s6] sm:$0x1]
      %v3281 = vlaneseq
      %v3282 = vshrl.u32 %v3281, 7
      %v3283 = vsub.s32 0, %v3282
      %v3284 = vrot.slane %v3279, %v3283
      %v3302 = vunpack.c.l.b16 %v3263
      %v3303 = vunpack.c.l.b16 %v3264
      %v3304 = vunpack.c.l.b16 %v3265
      %v3305 = vunpack.c.l.b16 %v3266
      %v3306 = vunpack.c.l.b16 %v3267
      %v3307 = vunpack.c.l.b16 %v3268
      %v3308 = vunpack.c.l.b16 %v3269
      %v3309 = vunpack.c.l.b16 %v3270
      %v3310 = vunpack.c.l.b16 %v3271
      %v3311 = vunpack.c.l.b16 %v3272
      %v3312 = vunpack.c.l.b16 %v3273
      %v3313 = vunpack.c.l.b16 %v3274
      %v3314 = vunpack.c.l.b16 %v3275
      %v3315 = vunpack.c.l.b16 %v3276
      %v3316 = vunpack.c.l.b16 %v3277
      %v3317 = vunpack.c.l.b16 %v3278
      %v3318 = vpack.c.b16 %v3303, %v3302
      %v3319 = vpack.c.b16 %v3305, %v3304
      %v3320 = vpack.c.b16 %v3307, %v3306
      %v3321 = vpack.c.b16 %v3309, %v3308
      %v3322 = vpack.c.b16 %v3311, %v3310
      %v3323 = vpack.c.b16 %v3313, %v3312
      %v3324 = vpack.c.b16 %v3315, %v3314
      %v3325 = vpack.c.b16 %v3317, %v3316
      %3334 = vmatprep.subr.bf16.mxu0 0
      %3335 = vmatpush1.bf16.msra.mxu0 %v3318
      %3336 = vmatprep.subr.bf16.mxu0 0
      %3337 = vmatpush1.bf16.msra.mxu0 %v3319
      %3338 = vmatprep.subr.bf16.mxu0 0
      %3339 = vmatpush1.bf16.msra.mxu0 %v3320
      %3340 = vmatprep.subr.bf16.mxu0 0
      %3341 = vmatpush1.bf16.msra.mxu0 %v3321
      %3342 = vmatprep.subr.bf16.mxu0 0
      %3343 = vmatpush1.bf16.msra.mxu0 %v3322
      %3344 = vmatprep.subr.bf16.mxu0 0
      %3345 = vmatpush1.bf16.msra.mxu0 %v3323
      %3346 = vmatprep.subr.bf16.mxu0 0
      %3347 = vmatpush1.bf16.msra.mxu0 %v3324
      %3348 = vmatprep.subr.bf16.mxu0 0
      %3349 = vmatpush1.bf16.msra.mxu0 %v3325
      %3350 = vmatprep.subr.bf16.mxu0 0
      %3351 = vmatpush1.bf16.msra.mxu0 0
      %3352 = vmatprep.subr.bf16.mxu0 0
      %3353 = vmatpush1.bf16.msra.mxu0 0
      %3354 = vmatprep.subr.bf16.mxu0 0
      %3355 = vmatpush1.bf16.msra.mxu0 0
      %3356 = vmatprep.subr.bf16.mxu0 0
      %3357 = vmatpush1.bf16.msra.mxu0 0
      %3358 = vmatprep.subr.bf16.mxu0 0
      %3359 = vmatpush1.bf16.msra.mxu0 0
      %3360 = vmatprep.subr.bf16.mxu0 0
      %3361 = vmatpush1.bf16.msra.mxu0 0
      %3362 = vmatprep.subr.bf16.mxu0 0
      %3363 = vmatpush1.bf16.msra.mxu0 0
      %3364 = vmatprep.subr.bf16.mxu0 0
      %3365 = vmatpush1.bf16.msra.mxu0 0
      %3366 = vmatprep.mubr.bf16.mxu0 0
      %3367 = vmatmul.mubr.bf16.gmra.mrb[0].mxu0 %v3255
      %v3368 = vpop.f32.mrb[0].mxu0
      %v3369 = vadd.f32 %v3284, %v3368
      %v3370 = vpop.f32.mrb[0].mxu0
      %v3371 = vpop.f32.mrb[0].mxu0
      %v3372 = vadd.f32 %v3284, %v3371
      %v3373 = vpop.f32.mrb[0].mxu0
      %3374 = vmatprep.mubr.bf16.mxu0 0
      %3375 = vmatmul.mubr.bf16.gmra.mrb[0].mxu0 %v3256
      %v3376 = vpop.f32.mrb[0].mxu0
      %v3377 = vadd.f32 %v3284, %v3376
      %v3378 = vpop.f32.mrb[0].mxu0
      %v3379 = vpop.f32.mrb[0].mxu0
      %v3380 = vadd.f32 %v3284, %v3379
      %v3381 = vpop.f32.mrb[0].mxu0
      %3382 = vmatprep.mubr.bf16.mxu0 0
      %3383 = vmatmul.mubr.bf16.gmra.mrb[0].mxu0 %v3257
      %v3384 = vpop.f32.mrb[0].mxu0
      %v3385 = vadd.f32 %v3284, %v3384
      %v3386 = vpop.f32.mrb[0].mxu0
      %v3387 = vpop.f32.mrb[0].mxu0
      %v3388 = vadd.f32 %v3284, %v3387
      %v3389 = vpop.f32.mrb[0].mxu0
      %3390 = vmatprep.mubr.bf16.mxu0 0
      %3391 = vmatmul.mubr.bf16.gmra.mrb[0].mxu0 %v3258
      %v3392 = vpop.f32.mrb[0].mxu0
      %v3393 = vadd.f32 %v3284, %v3392
      %v3394 = vpop.f32.mrb[0].mxu0
      %v3395 = vpop.f32.mrb[0].mxu0
      %v3396 = vadd.f32 %v3284, %v3395
      %v3397 = vpop.f32.mrb[0].mxu0
      %3398 = vmatprep.mubr.bf16.mxu0 0
      %3399 = vmatmul.mubr.bf16.gmra.mrb[0].mxu0 %v3259
      %v3400 = vpop.f32.mrb[0].mxu0
      %v3401 = vadd.f32 %v3284, %v3400
      %v3402 = vpop.f32.mrb[0].mxu0
      %v3403 = vpop.f32.mrb[0].mxu0
      %v3404 = vadd.f32 %v3284, %v3403
      %v3405 = vpop.f32.mrb[0].mxu0
      %3406 = vmatprep.mubr.bf16.mxu0 0
      %3407 = vmatmul.mubr.bf16.gmra.mrb[0].mxu0 %v3260
      %v3408 = vpop.f32.mrb[0].mxu0
      %v3409 = vadd.f32 %v3284, %v3408
      %v3410 = vpop.f32.mrb[0].mxu0
      %v3411 = vpop.f32.mrb[0].mxu0
      %v3412 = vadd.f32 %v3284, %v3411
      %v3413 = vpop.f32.mrb[0].mxu0
      %3414 = vmatprep.mubr.bf16.mxu0 0
      %3415 = vmatmul.mubr.bf16.gmra.mrb[0].mxu0 %v3261
      %v3416 = vpop.f32.mrb[0].mxu0
      %v3417 = vadd.f32 %v3284, %v3416
      %v3418 = vpop.f32.mrb[0].mxu0
      %v3419 = vpop.f32.mrb[0].mxu0
      %v3420 = vadd.f32 %v3284, %v3419
      %v3421 = vpop.f32.mrb[0].mxu0
      %3422 = vmatprep.mubr.bf16.mxu0 0
      %3423 = vmatmul.mubr.bf16.gmra.mrb[0].mxu0 %v3262
      %v3424 = vpop.f32.mrb[0].mxu0
      %v3425 = vadd.f32 %v3284, %v3424
      %v3426 = vpop.f32.mrb[0].mxu0
      %v3427 = vpop.f32.mrb[0].mxu0
      %v3428 = vadd.f32 %v3284, %v3427
      %v3429 = vpop.f32.mrb[0].mxu0
      %3430 = vdwg.mxu0
      %3431 = vst [vmem:[%s318] sm:$0xff] %v3369
      %3432 = vst [vmem:[%s318 + $0x8] sm:$0xff] %v3372
      %3433 = vst [vmem:[%s318 + $0x10] sm:$0xff] %v3377
      %3434 = vst [vmem:[%s318 + $0x18] sm:$0xff] %v3380
      %3435 = vst [vmem:[%s318 + $0x20] sm:$0xff] %v3385
      %3436 = vst [vmem:[%s318 + $0x28] sm:$0xff] %v3388
      %3437 = vst [vmem:[%s318 + $0x30] sm:$0xff] %v3393
      %3438 = vst [vmem:[%s318 + $0x38] sm:$0xff] %v3396
      %3439 = vst [vmem:[%s318 + $0x40] sm:$0xff] %v3401
      %3440 = vst [vmem:[%s318 + $0x48] sm:$0xff] %v3404
      %3441 = vst [vmem:[%s318 + $0x50] sm:$0xff] %v3409
      %3442 = vst [vmem:[%s318 + $0x58] sm:$0xff] %v3412
      %3443 = vst [vmem:[%s318 + $0x60] sm:$0xff] %v3417
      %3444 = vst [vmem:[%s318 + $0x68] sm:$0xff] %v3420
      %3445 = vst [vmem:[%s318 + $0x70] sm:$0xff] %v3425
      %3446 = vst [vmem:[%s318 + $0x78] sm:$0xff] %v3428
      %s3447 = smul.u32 16, %s20
      %p3448 = scmp.lt.s32.totalorder %s3447, 31
      %s3449 = scalar_select %p3448, %s3447, 31
      %s3450 = smul.addr %s3449, 8
      %s3451 = scalar_lea.vmem %s7, %s3450
      %s3452 = smul.u32 16, %s20
      %p3453 = scmp.lt.s32.totalorder %s3452, 31
      %s3454 = scalar_select %p3453, %s3452, 31
      %s3455 = smul.addr %s3454, 8
      %s3456 = scalar_lea.vmem %s8, %s3455
      // Predicated region
      $region49: #{mlp_forward.1} parent=47 // pred_check
        %p3457 = pneg %p190
      $region50: #{mlp_forward.1} parent=47 // pred_check_branch
        %3459 = sbr.rel (%p3457) target = $region52
      $region51: #{mlp_forward.1} parent=47 // pred_region
        %s3460 = smul.u32 16, %s20
      $region52: #{mlp_forward.1} parent=47 // pred_fallthru
        _
      // Predicated region
      $region53: #{mlp_forward.1} parent=47 // pred_check
        %p3461 = pneg %p216
      $region54: #{mlp_forward.1} parent=47 // pred_check_branch
        %3463 = sbr.rel (%p3461) target = $region56
      $region55: #{mlp_forward.1} parent=47 // pred_region
        %s3464 = smul.u32 16, %s20
      $region56: #{mlp_forward.1} parent=47 // pred_fallthru
        _
    $region48: #{mlp_forward.1} parent=5 // pred_fallthru
      _
    %p3465 = scmp.le.s32.totalorder 2, %s15
    // Predicated region
    $region57: #{mlp_forward.1} parent=5 // pred_check
      %p3466 = pneg %p3465
    $region58: #{mlp_forward.1} parent=5 // pred_check_branch
      %3468 = sbr.rel (%p3466) target = $region60
    $region59: #{mlp_forward.1} parent=5 // pred_region
      %s3469 = ssub.s32 %s15, 2
      // Predicated region
      $region61: #{mlp_forward.1} parent=59 // pred_check
        %p3470 = pneg %p196
      $region62: #{mlp_forward.1} parent=59 // pred_check_branch
        %3472 = sbr.rel (%p3470) target = $region64
      $region63: #{mlp_forward.1} parent=59 // pred_region
        %s3473 = smul.u32 16, %s21
        %p3474 = scmp.lt.s32.totalorder %s3473, 31
        %s3475 = scalar_select %p3474, %s3473, 31
        %s3476 = smul.addr %s3475, 8
        %s3477 = scalar_lea.vmem %s7, %s3476
      $region64: #{mlp_forward.1} parent=59 // pred_fallthru
        _
      // Predicated region
      $region65: #{mlp_forward.1} parent=59 // pred_check
        %p3478 = pneg %p222
      $region66: #{mlp_forward.1} parent=59 // pred_check_branch
        %3480 = sbr.rel (%p3478) target = $region68
      $region67: #{mlp_forward.1} parent=59 // pred_region
        %s3481 = smul.u32 16, %s21
        %p3482 = scmp.lt.s32.totalorder %s3481, 31
        %s3483 = scalar_select %p3482, %s3481, 31
        %s3484 = smul.addr %s3483, 8
        %s3485 = scalar_lea.vmem %s8, %s3484
      $region68: #{mlp_forward.1} parent=59 // pred_fallthru
        _
    $region60: #{mlp_forward.1} parent=5 // pred_fallthru
      _
  $region6: #{mlp_forward.1} parent=0 // loop_footer
    %s19 = sadd.s32 1, %s15
  $region7: #{mlp_forward.1} parent=0 // loop_footer_branch
    %14 = sbr.rel target = $region3
  $region8: #{mlp_forward.1} parent=0 // loop_exit
    _

</llo_original>
